<compile_context>
chip_gen: v7x
topology: tpu7x:2x2x1
jax: 0.10.0
libtpu: 0.0.40
codegen_flags: <defaults>
</compile_context>

<pallas_src>
import functools

import jax
import jax.numpy as jnp
from jax.experimental import pallas as pl
from jax.experimental.pallas import tpu as pltpu


# ---------------------------------------------------------------------------
# Stage 1: hoisted layer-1 matmul   ST1[t] = x[t] @ W1   (no carry dependence)
# ---------------------------------------------------------------------------
def _matmul_kernel(x_ref, w_ref, o_ref, acc_ref):
    @pl.when(pl.program_id(2) == 0)
    def _():
        acc_ref[...] = jnp.zeros_like(acc_ref)

    acc_ref[...] += jnp.dot(x_ref[...], w_ref[...],
                            preferred_element_type=jnp.float32)

    @pl.when(pl.program_id(2) == pl.num_programs(2) - 1)
    def _():
        o_ref[...] = acc_ref[...].astype(o_ref.dtype)


def _tiled_matmul(x2, w, *, tm, tn, tk, vmem_limit):
    M, K = x2.shape
    _, N = w.shape
    return pl.pallas_call(
        _matmul_kernel,
        out_shape=jax.ShapeDtypeStruct((M, N), jnp.float32),
        grid_spec=pltpu.PrefetchScalarGridSpec(
            num_scalar_prefetch=0,
            grid=(M // tm, N // tn, K // tk),
            in_specs=[
                pl.BlockSpec((tm, tk), lambda i, j, k: (i, k)),
                pl.BlockSpec((tk, tn), lambda i, j, k: (k, j)),
            ],
            out_specs=pl.BlockSpec((tm, tn), lambda i, j, k: (i, j)),
            scratch_shapes=[pltpu.VMEM((tm, tn), jnp.float32)],
        ),
        compiler_params=pltpu.CompilerParams(
            dimension_semantics=("parallel", "parallel", "arbitrary"),
            vmem_limit_bytes=vmem_limit,
        ),
    )(x2, w)


# ---------------------------------------------------------------------------
# Stage 2: recurrent time loop (layers 2/3 + membrane/spike state)
# ---------------------------------------------------------------------------
def _recurrent_kernel(st1_ref, w2_ref, w3_ref, g0_ref, g1_ref,
                      out1_ref, out2_ref, out3_ref,
                      m1_ref, s1_ref, m2_ref, s2_ref, m3_ref, s3_ref,
                      *, v_th, inv_wins):
    t = pl.program_id(1)
    f32 = jnp.float32
    cdt = w2_ref.dtype          # matmul compute dtype (bf16 or f32)

    @pl.when(t == 0)
    def _():
        m1_ref[...] = jnp.zeros_like(m1_ref)
        s1_ref[...] = jnp.zeros_like(s1_ref)
        m2_ref[...] = jnp.zeros_like(m2_ref)
        s2_ref[...] = jnp.zeros_like(s2_ref)
        m3_ref[...] = jnp.zeros_like(m3_ref)
        s3_ref[...] = jnp.zeros_like(s3_ref)
        out1_ref[...] = jnp.zeros_like(out1_ref)
        out2_ref[...] = jnp.zeros_like(out2_ref)
        out3_ref[...] = jnp.zeros_like(out3_ref)

    g0 = g0_ref[...]            # (1, C) broadcast over batch (binary gates)
    g1 = g1_ref[...]

    # ---- layer 1 (its linear part was hoisted to stage 1) ----
    st1 = st1_ref[...]                                     # (Bt, C) f32
    # Spikes (and gates here) are binary, so m*(1-s)+st == where(s>0, st, m+st).
    m1 = jnp.where(s1_ref[...] > 0, st1, m1_ref[...] + st1)
    s1 = jnp.where(m1 - v_th > 0.0, 1.0, 0.0) * g0         # ActFun(mem-vth)*gate0
    m1_ref[...] = m1
    s1_ref[...] = s1.astype(cdt)
    out1_ref[...] += s1

    # ---- layer 2 ----
    st2 = jnp.dot(s1_ref[...], w2_ref[...], preferred_element_type=f32)
    m2 = jnp.where(s2_ref[...] > 0, st2, m2_ref[...] + st2)
    s2 = jnp.where(m2 - v_th > 0.0, 1.0, 0.0) * g1
    m2_ref[...] = m2
    s2_ref[...] = s2.astype(cdt)
    out2_ref[...] += s2

    # ---- layer 3 (gate = 1, output padded to lane-dense 128 columns) ----
    st3 = jnp.dot(s2_ref[...], w3_ref[...], preferred_element_type=f32)
    m3 = jnp.where(s3_ref[...] > 0, st3, m3_ref[...] + st3)
    s3 = jnp.where(m3 - v_th > 0.0, 1.0, 0.0)
    m3_ref[...] = m3
    s3_ref[...] = s3
    out3_ref[...] += s3

    @pl.when(t == pl.num_programs(1) - 1)
    def _():
        out1_ref[...] *= inv_wins
        out2_ref[...] *= inv_wins
        out3_ref[...] *= inv_wins


# ---------------------------------------------------------------------------
# Wrapper
# ---------------------------------------------------------------------------
def _round_up(x, m):
    return (x + m - 1) // m * m


def _pick_tile(padded_dim, candidates=(512, 256, 128)):
    for c in candidates:
        if padded_dim % c == 0:
            return c
    return padded_dim


@functools.partial(jax.jit, static_argnames=("v_th", "compute_dtype", "b_tile"))
def main_net_forward(x, w1_t, w2_t, w3_t, gate0, gate1, *,
                     v_th=0.2, compute_dtype=jnp.bfloat16, b_tile=128):
    """x: (WINS, B, IN); w*_t: (in, out); gate0/gate1: (1, C).
    Returns (outs, (outs_1, outs_2)) as in the PyTorch module."""
    wins, B, in_dim = x.shape
    C = w1_t.shape[1]
    O = w3_t.shape[1]

    vmem_limit = 48 * 1024 * 1024        # explicit scoped-VMEM budget (fits v7x)

    # ---- pad to MXU/lane-friendly shapes ----
    B_pad = _round_up(B, b_tile)
    IN_pad = _round_up(in_dim, 128)
    C_pad = _round_up(C, 128)
    O_pad = _round_up(O, 128)            # lane-dense layer-3 output

    x_p = jnp.pad(x, ((0, 0), (0, B_pad - B), (0, IN_pad - in_dim)))
    w1_p = jnp.pad(w1_t, ((0, IN_pad - in_dim), (0, C_pad - C)))
    w2_p = jnp.pad(w2_t, ((0, C_pad - C), (0, C_pad - C)))
    w3_p = jnp.pad(w3_t, ((0, C_pad - C), (0, O_pad - O)))
    g0_p = jnp.pad(gate0.astype(jnp.float32), ((0, 0), (0, C_pad - C)))
    g1_p = jnp.pad(gate1.astype(jnp.float32), ((0, 0), (0, C_pad - C)))

    # ---- stage 1: one big MXU matmul for all time steps ----
    M = wins * B_pad
    x2 = x_p.reshape(M, IN_pad).astype(compute_dtype)
    st1 = _tiled_matmul(
        x2, w1_p.astype(compute_dtype),
        tm=_pick_tile(M), tn=_pick_tile(C_pad), tk=_pick_tile(IN_pad),
        vmem_limit=vmem_limit)
    st1 = st1.reshape(wins, B_pad, C_pad)

    # ---- stage 2: recurrent loop on the grid, state in VMEM scratch ----
    nb = B_pad // b_tile
    kernel = functools.partial(_recurrent_kernel,
                               v_th=float(v_th), inv_wins=1.0 / float(wins))

    grid_spec = pltpu.PrefetchScalarGridSpec(
        num_scalar_prefetch=0,
        grid=(nb, wins),                           # (batch-parallel, time)
        in_specs=[
            pl.BlockSpec((None, b_tile, C_pad), lambda b, t: (t, b, 0)),
            pl.BlockSpec((C_pad, C_pad), lambda b, t: (0, 0)),
            pl.BlockSpec((C_pad, O_pad), lambda b, t: (0, 0)),
            pl.BlockSpec((1, C_pad), lambda b, t: (0, 0)),
            pl.BlockSpec((1, C_pad), lambda b, t: (0, 0)),
        ],
        out_specs=[
            pl.BlockSpec((b_tile, C_pad), lambda b, t: (b, 0)),
            pl.BlockSpec((b_tile, C_pad), lambda b, t: (b, 0)),
            pl.BlockSpec((b_tile, O_pad), lambda b, t: (b, 0)),
        ],
        scratch_shapes=[
            pltpu.VMEM((b_tile, C_pad), jnp.float32),     # m1
            pltpu.VMEM((b_tile, C_pad), compute_dtype),   # s1 ({0,1}: exact)
            pltpu.VMEM((b_tile, C_pad), jnp.float32),     # m2
            pltpu.VMEM((b_tile, C_pad), compute_dtype),   # s2
            pltpu.VMEM((b_tile, O_pad), jnp.float32),     # m3
            pltpu.VMEM((b_tile, O_pad), jnp.float32),     # s3
        ],
    )

    out1_p, out2_p, out3_p = pl.pallas_call(
        kernel,
        grid_spec=grid_spec,
        out_shape=(
            jax.ShapeDtypeStruct((B_pad, C_pad), jnp.float32),
            jax.ShapeDtypeStruct((B_pad, C_pad), jnp.float32),
            jax.ShapeDtypeStruct((B_pad, O_pad), jnp.float32),
        ),
        compiler_params=pltpu.CompilerParams(
            dimension_semantics=("parallel", "arbitrary"),
            vmem_limit_bytes=vmem_limit,
        ),
    )(st1, w2_p.astype(compute_dtype), w3_p.astype(compute_dtype), g0_p, g1_p)

    outs = out3_p[:B, :O]
    outs_1 = out1_p[:B, :C]
    outs_2 = out2_p[:B, :C]
    return outs, (outs_1, outs_2)


def main_net_forward_ref(x, w1_t, w2_t, w3_t, gate0, gate1, *, v_th=0.2):
    """Pure-JAX reference mirroring the PyTorch forward exactly."""
    wins, B, _ = x.shape
    C = w1_t.shape[1]
    O = w3_t.shape[1]
    f32 = jnp.float32
    m1 = s1 = sum1 = jnp.zeros((B, C), f32)
    m2 = s2 = sum2 = jnp.zeros((B, C), f32)
    m3 = s3 = sum3 = jnp.zeros((B, O), f32)
    for t in range(wins):
        y = x[t]
        m1 = m1 * (1.0 - s1) + y @ w1_t
        s1 = (m1 - v_th > 0.0).astype(f32) * gate0
        m2 = m2 * (1.0 - s2) + s1 @ w2_t
        s2 = (m2 - v_th > 0.0).astype(f32) * gate1
        m3 = m3 * (1.0 - s3) + s2 @ w3_t
        s3 = (m3 - v_th > 0.0).astype(f32)
        sum1, sum2, sum3 = sum1 + s1, sum2 + s2, sum3 + s3
    return sum3 / wins, (sum1 / wins, sum2 / wins)


if __name__ == "__main__":
    # Small, module-consistent shapes (the real net uses IN=34*34*2, C=16384,
    # B=200, wins=10; shrunk here for a synthetic kernel demo).
    WINS = 10
    B = 8
    IN_DIM = 128
    C = 256
    OUT = 10
    V_TH = 0.2

    key = jax.random.PRNGKey(0)
    kx, k1, k2, k3, kg0, kg1 = jax.random.split(key, 6)

    # time-major input (WINS, B, IN_DIM)
    x = jax.random.normal(kx, (WINS, B, IN_DIM), dtype=jnp.float32)

    # nn.Linear(in, out, bias=False) default init: U(-1/sqrt(in), 1/sqrt(in));
    # stored here already transposed to (in, out).
    def linear_w(k, fan_in, fan_out):
        b = 1.0 / jnp.sqrt(jnp.float32(fan_in))
        return jax.random.uniform(k, (fan_in, fan_out), jnp.float32, -b, b)

    w1_t = linear_w(k1, IN_DIM, C)
    w2_t = linear_w(k2, C, C)
    w3_t = linear_w(k3, C, OUT)

    # binary gates per channel, shaped (1, C) for in-kernel broadcasting
    gate0 = (jax.random.uniform(kg0, (1, C)) > 0.5).astype(jnp.float32)
    gate1 = (jax.random.uniform(kg1, (1, C)) > 0.5).astype(jnp.float32)

    # --- correctness check in f32 compute mode against the pure-JAX reference ---
    outs, (outs1, outs2) = main_net_forward(
        x, w1_t, w2_t, w3_t, gate0, gate1,
        v_th=V_TH, compute_dtype=jnp.float32)
    jax.block_until_ready((outs, outs1, outs2))

    r_outs, (r_outs1, r_outs2) = main_net_forward_ref(
        x, w1_t, w2_t, w3_t, gate0, gate1, v_th=V_TH)

    assert outs.shape == (B, OUT)
    assert outs1.shape == (B, C) and outs2.shape == (B, C)
    assert jnp.allclose(outs, r_outs, atol=1e-4)
    assert jnp.allclose(outs1, r_outs1, atol=1e-4)
    assert jnp.allclose(outs2, r_outs2, atol=1e-4)

    # --- fast path: bf16 weights/spikes on the MXU.  Spikes {0,1} are exact in
    #     bf16, but weight rounding can flip near-threshold spikes, so only
    #     range/shape sanity checks here rather than exact agreement. ---
    outs_bf, (outs1_bf, outs2_bf) = main_net_forward(
        x, w1_t, w2_t, w3_t, gate0, gate1,
        v_th=V_TH, compute_dtype=jnp.bfloat16)
    jax.block_until_ready((outs_bf, outs1_bf, outs2_bf))
    assert outs_bf.shape == (B, OUT)
    assert outs1_bf.shape == (B, C) and outs2_bf.shape == (B, C)
    assert bool(jnp.all(jnp.isfinite(outs_bf)))
    assert bool(jnp.all((outs_bf >= -1e-6) & (outs_bf <= 1.0 + 1e-6)))
    assert bool(jnp.all((outs1_bf >= -1e-6) & (outs1_bf <= 1.0 + 1e-6)))
    assert bool(jnp.all((outs2_bf >= -1e-6) & (outs2_bf <= 1.0 + 1e-6)))

    print("KERNEL_OK")
</pallas_src>

<mosaic_0001>
module attributes {stable_mosaic.version = 11 : i64} {
  func.func @_matmul_kernel(%arg0: i32, %arg1: i32, %arg2: i32, %arg3: memref<256x128xf32, #tpu.memory_space<vmem>>, %arg4: memref<128x256xf32, #tpu.memory_space<vmem>>, %arg5: memref<256x256xf32, #tpu.memory_space<vmem>>, %arg6: memref<256x256xf32, #tpu.memory_space<vmem>>) attributes {dimension_semantics = [#tpu.dimension_semantics<parallel>, #tpu.dimension_semantics<parallel>, #tpu.dimension_semantics<arbitrary>], iteration_bounds = array<i64: 5, 1, 1>, scalar_prefetch = 0 : i64, scratch_operands = 1 : i64, tpu.core_type = #tpu.core_type<tc>, window_params = [{transform_indices = @transform_0, window_bounds = array<i64: 256, 128>}, {transform_indices = @transform_1, window_bounds = array<i64: 128, 256>}, {transform_indices = @transform_2, window_bounds = array<i64: 256, 256>}]} {
    %c0_i32 = arith.constant 0 : i32
    %0 = arith.cmpi eq, %arg2, %c0_i32 : i32
    %1 = arith.extui %0 : i1 to i32
    %c0_i32_0 = arith.constant 0 : i32
    %2 = arith.cmpi ne, %1, %c0_i32_0 : i32
    scf.if %2 {
      %cst_10 = arith.constant 0.000000e+00 : f32
      %12 = vector.broadcast %cst_10 : f32 to vector<256x256xf32>
      %c0_11 = arith.constant 0 : index
      %c0_12 = arith.constant 0 : index
      %13 = vector.load %arg6[%c0_11, %c0_12] : memref<256x256xf32, #tpu.memory_space<vmem>>, vector<256x256xf32>
      tpu.vector_store %arg6[%c0_11, %c0_12], %12 {strides = array<i32>} : memref<256x256xf32, #tpu.memory_space<vmem>>, vector<256x256xf32>,
    } else {
    }
    %c0 = arith.constant 0 : index
    %c0_1 = arith.constant 0 : index
    %3 = vector.load %arg6[%c0, %c0_1] : memref<256x256xf32, #tpu.memory_space<vmem>>, vector<256x256xf32>
    %c0_2 = arith.constant 0 : index
    %c0_3 = arith.constant 0 : index
    %4 = vector.load %arg3[%c0_2, %c0_3] : memref<256x128xf32, #tpu.memory_space<vmem>>, vector<256x128xf32>
    %c0_4 = arith.constant 0 : index
    %c0_5 = arith.constant 0 : index
    %5 = vector.load %arg4[%c0_4, %c0_5] : memref<128x256xf32, #tpu.memory_space<vmem>>, vector<128x256xf32>
    %cst = arith.constant dense<0.000000e+00> : vector<256x256xf32>
    %6 = tpu.matmul %4, %5, %cst {dimension_numbers = #tpu.dot_dimension_numbers<[1], [0], [0], [1], [0, 0, 1, 1], [], []>} : vector<256x128xf32>, vector<128x256xf32>, vector<256x256xf32> -> vector<256x256xf32>
    %7 = arith.addf %3, %6 : vector<256x256xf32>
    %c0_6 = arith.constant 0 : index
    %c0_7 = arith.constant 0 : index
    %8 = vector.load %arg6[%c0_6, %c0_7] : memref<256x256xf32, #tpu.memory_space<vmem>>, vector<256x256xf32>
    tpu.vector_store %arg6[%c0_6, %c0_7], %7 {strides = array<i32>} : memref<256x256xf32, #tpu.memory_space<vmem>>, vector<256x256xf32>,
    %c0_i32_8 = arith.constant 0 : i32
    %9 = arith.cmpi eq, %arg2, %c0_i32_8 : i32
    %10 = arith.extui %9 : i1 to i32
    %c0_i32_9 = arith.constant 0 : i32
    %11 = arith.cmpi ne, %10, %c0_i32_9 : i32
    scf.if %11 {
      %c0_10 = arith.constant 0 : index
      %c0_11 = arith.constant 0 : index
      %12 = vector.load %arg6[%c0_10, %c0_11] : memref<256x256xf32, #tpu.memory_space<vmem>>, vector<256x256xf32>
      %c0_12 = arith.constant 0 : index
      %c0_13 = arith.constant 0 : index
      %13 = vector.load %arg5[%c0_12, %c0_13] : memref<256x256xf32, #tpu.memory_space<vmem>>, vector<256x256xf32>
      tpu.vector_store %arg5[%c0_12, %c0_13], %12 {strides = array<i32>} : memref<256x256xf32, #tpu.memory_space<vmem>>, vector<256x256xf32>,
    } else {
    }
    return
  }
  func.func @transform_0(%arg0: i32, %arg1: i32, %arg2: i32) -> (i32, i32) {
    %c0_i32 = arith.constant 0 : i32
    return %arg0, %arg2 : i32, i32
  }
  func.func @transform_1(%arg0: i32, %arg1: i32, %arg2: i32) -> (i32, i32) {
    %c0_i32 = arith.constant 0 : i32
    return %arg2, %arg1 : i32, i32
  }
  func.func @transform_2(%arg0: i32, %arg1: i32, %arg2: i32) -> (i32, i32) {
    %c0_i32 = arith.constant 0 : i32
    return %arg0, %arg1 : i32, i32
  }
}

module attributes {stable_mosaic.version = 11 : i64} {
  func.func @_recurrent_kernel(%arg0: i32, %arg1: i32, %arg2: memref<1x128x256xf32, #tpu.memory_space<vmem>>, %arg3: memref<256x256xf32, #tpu.memory_space<vmem>>, %arg4: memref<256x128xf32, #tpu.memory_space<vmem>>, %arg5: memref<1x256xf32, #tpu.memory_space<vmem>>, %arg6: memref<1x256xf32, #tpu.memory_space<vmem>>, %arg7: memref<128x256xf32, #tpu.memory_space<vmem>>, %arg8: memref<128x256xf32, #tpu.memory_space<vmem>>, %arg9: memref<128x128xf32, #tpu.memory_space<vmem>>, %arg10: memref<128x256xf32, #tpu.memory_space<vmem>>, %arg11: memref<128x256xf32, #tpu.memory_space<vmem>>, %arg12: memref<128x256xf32, #tpu.memory_space<vmem>>, %arg13: memref<128x256xf32, #tpu.memory_space<vmem>>, %arg14: memref<128x128xf32, #tpu.memory_space<vmem>>, %arg15: memref<128x128xf32, #tpu.memory_space<vmem>>) attributes {dimension_semantics = [#tpu.dimension_semantics<parallel>, #tpu.dimension_semantics<arbitrary>], iteration_bounds = array<i64: 1, 10>, scalar_prefetch = 0 : i64, scratch_operands = 6 : i64, tpu.core_type = #tpu.core_type<tc>, window_params = [{transform_indices = @transform_0, window_bounds = array<i64: 1, 128, 256>}, {pipeline_mode = #tpu.pipeline_mode<synchronous>, transform_indices = @transform_1, window_bounds = array<i64: 256, 256>}, {pipeline_mode = #tpu.pipeline_mode<synchronous>, transform_indices = @transform_2, window_bounds = array<i64: 256, 128>}, {pipeline_mode = #tpu.pipeline_mode<synchronous>, transform_indices = @transform_3, window_bounds = array<i64: 1, 256>}, {pipeline_mode = #tpu.pipeline_mode<synchronous>, transform_indices = @transform_4, window_bounds = array<i64: 1, 256>}, {transform_indices = @transform_5, window_bounds = array<i64: 128, 256>}, {transform_indices = @transform_6, window_bounds = array<i64: 128, 256>}, {transform_indices = @transform_7, window_bounds = array<i64: 128, 128>}]} {
    %c0_i32 = arith.constant 0 : i32
    %0 = arith.cmpi eq, %arg1, %c0_i32 : i32
    %1 = arith.extui %0 : i1 to i32
    %c0_i32_0 = arith.constant 0 : i32
    %2 = arith.cmpi ne, %1, %c0_i32_0 : i32
    scf.if %2 {
      %cst_68 = arith.constant 0.000000e+00 : f32
      %74 = vector.broadcast %cst_68 : f32 to vector<128x256xf32>
      %c0_69 = arith.constant 0 : index
      %c0_70 = arith.constant 0 : index
      %75 = vector.load %arg10[%c0_69, %c0_70] : memref<128x256xf32, #tpu.memory_space<vmem>>, vector<128x256xf32>
      tpu.vector_store %arg10[%c0_69, %c0_70], %74 {strides = array<i32>} : memref<128x256xf32, #tpu.memory_space<vmem>>, vector<128x256xf32>,
      %cst_71 = arith.constant 0.000000e+00 : f32
      %76 = vector.broadcast %cst_71 : f32 to vector<128x256xf32>
      %c0_72 = arith.constant 0 : index
      %c0_73 = arith.constant 0 : index
      %77 = vector.load %arg11[%c0_72, %c0_73] : memref<128x256xf32, #tpu.memory_space<vmem>>, vector<128x256xf32>
      tpu.vector_store %arg11[%c0_72, %c0_73], %76 {strides = array<i32>} : memref<128x256xf32, #tpu.memory_space<vmem>>, vector<128x256xf32>,
      %cst_74 = arith.constant 0.000000e+00 : f32
      %78 = vector.broadcast %cst_74 : f32 to vector<128x256xf32>
      %c0_75 = arith.constant 0 : index
      %c0_76 = arith.constant 0 : index
      %79 = vector.load %arg12[%c0_75, %c0_76] : memref<128x256xf32, #tpu.memory_space<vmem>>, vector<128x256xf32>
      tpu.vector_store %arg12[%c0_75, %c0_76], %78 {strides = array<i32>} : memref<128x256xf32, #tpu.memory_space<vmem>>, vector<128x256xf32>,
      %cst_77 = arith.constant 0.000000e+00 : f32
      %80 = vector.broadcast %cst_77 : f32 to vector<128x256xf32>
      %c0_78 = arith.constant 0 : index
      %c0_79 = arith.constant 0 : index
      %81 = vector.load %arg13[%c0_78, %c0_79] : memref<128x256xf32, #tpu.memory_space<vmem>>, vector<128x256xf32>
      tpu.vector_store %arg13[%c0_78, %c0_79], %80 {strides = array<i32>} : memref<128x256xf32, #tpu.memory_space<vmem>>, vector<128x256xf32>,
      %cst_80 = arith.constant 0.000000e+00 : f32
      %82 = vector.broadcast %cst_80 : f32 to vector<128x128xf32>
      %c0_81 = arith.constant 0 : index
      %c0_82 = arith.constant 0 : index
      %83 = vector.load %arg14[%c0_81, %c0_82] : memref<128x128xf32, #tpu.memory_space<vmem>>, vector<128x128xf32>
      tpu.vector_store %arg14[%c0_81, %c0_82], %82 {strides = array<i32>} : memref<128x128xf32, #tpu.memory_space<vmem>>, vector<128x128xf32>,
      %cst_83 = arith.constant 0.000000e+00 : f32
      %84 = vector.broadcast %cst_83 : f32 to vector<128x128xf32>
      %c0_84 = arith.constant 0 : index
      %c0_85 = arith.constant 0 : index
      %85 = vector.load %arg15[%c0_84, %c0_85] : memref<128x128xf32, #tpu.memory_space<vmem>>, vector<128x128xf32>
      tpu.vector_store %arg15[%c0_84, %c0_85], %84 {strides = array<i32>} : memref<128x128xf32, #tpu.memory_space<vmem>>, vector<128x128xf32>,
      %cst_86 = arith.constant 0.000000e+00 : f32
      %86 = vector.broadcast %cst_86 : f32 to vector<128x256xf32>
      %c0_87 = arith.constant 0 : index
      %c0_88 = arith.constant 0 : index
      %87 = vector.load %arg7[%c0_87, %c0_88] : memref<128x256xf32, #tpu.memory_space<vmem>>, vector<128x256xf32>
      tpu.vector_store %arg7[%c0_87, %c0_88], %86 {strides = array<i32>} : memref<128x256xf32, #tpu.memory_space<vmem>>, vector<128x256xf32>,
      %cst_89 = arith.constant 0.000000e+00 : f32
      %88 = vector.broadcast %cst_89 : f32 to vector<128x256xf32>
      %c0_90 = arith.constant 0 : index
      %c0_91 = arith.constant 0 : index
      %89 = vector.load %arg8[%c0_90, %c0_91] : memref<128x256xf32, #tpu.memory_space<vmem>>, vector<128x256xf32>
      tpu.vector_store %arg8[%c0_90, %c0_91], %88 {strides = array<i32>} : memref<128x256xf32, #tpu.memory_space<vmem>>, vector<128x256xf32>,
      %cst_92 = arith.constant 0.000000e+00 : f32
      %90 = vector.broadcast %cst_92 : f32 to vector<128x128xf32>
      %c0_93 = arith.constant 0 : index
      %c0_94 = arith.constant 0 : index
      %91 = vector.load %arg9[%c0_93, %c0_94] : memref<128x128xf32, #tpu.memory_space<vmem>>, vector<128x128xf32>
      tpu.vector_store %arg9[%c0_93, %c0_94], %90 {strides = array<i32>} : memref<128x128xf32, #tpu.memory_space<vmem>>, vector<128x128xf32>,
    } else {
    }
    %c0 = arith.constant 0 : index
    %c0_1 = arith.constant 0 : index
    %3 = vector.load %arg5[%c0, %c0_1] : memref<1x256xf32, #tpu.memory_space<vmem>>, vector<1x256xf32>
    %c0_2 = arith.constant 0 : index
    %c0_3 = arith.constant 0 : index
    %4 = vector.load %arg6[%c0_2, %c0_3] : memref<1x256xf32, #tpu.memory_space<vmem>>, vector<1x256xf32>
    %c0_4 = arith.constant 0 : index
    %c0_5 = arith.constant 0 : index
    %c0_6 = arith.constant 0 : index
    %5 = vector.load %arg2[%c0_4, %c0_5, %c0_6] : memref<1x128x256xf32, #tpu.memory_space<vmem>>, vector<1x128x256xf32>
    %6 = vector.shape_cast %5 : vector<1x128x256xf32> to vector<128x256xf32>
    %c0_7 = arith.constant 0 : index
    %c0_8 = arith.constant 0 : index
    %7 = vector.load %arg11[%c0_7, %c0_8] : memref<128x256xf32, #tpu.memory_space<vmem>>, vector<128x256xf32>
    %cst = arith.constant 0.000000e+00 : f32
    %8 = vector.broadcast %cst : f32 to vector<128x256xf32>
    %9 = arith.cmpf ogt, %7, %8 : vector<128x256xf32>
    %c0_9 = arith.constant 0 : index
    %c0_10 = arith.constant 0 : index
    %10 = vector.load %arg10[%c0_9, %c0_10] : memref<128x256xf32, #tpu.memory_space<vmem>>, vector<128x256xf32>
    %11 = arith.addf %10, %6 : vector<128x256xf32>
    %12 = arith.select %9, %6, %11 : vector<128x256xi1>, vector<128x256xf32>
    %cst_11 = arith.constant 2.000000e-01 : f32
    %13 = vector.broadcast %cst_11 : f32 to vector<128x256xf32>
    %14 = arith.subf %12, %13 : vector<128x256xf32>
    %cst_12 = arith.constant 0.000000e+00 : f32
    %15 = vector.broadcast %cst_12 : f32 to vector<128x256xf32>
    %16 = arith.cmpf ogt, %14, %15 : vector<128x256xf32>
    %cst_13 = arith.constant 1.000000e+00 : f32
    %cst_14 = arith.constant 0.000000e+00 : f32
    %17 = vector.broadcast %cst_13 : f32 to vector<128x256xf32>
    %18 = vector.broadcast %cst_14 : f32 to vector<128x256xf32>
    %19 = arith.select %16, %17, %18 : vector<128x256xi1>, vector<128x256xf32>
    %20 = vector.broadcast %3 : vector<1x256xf32> to vector<128x256xf32>
    %21 = arith.mulf %19, %20 : vector<128x256xf32>
    %c0_15 = arith.constant 0 : index
    %c0_16 = arith.constant 0 : index
    %22 = vector.load %arg10[%c0_15, %c0_16] : memref<128x256xf32, #tpu.memory_space<vmem>>, vector<128x256xf32>
    tpu.vector_store %arg10[%c0_15, %c0_16], %12 {strides = array<i32>} : memref<128x256xf32, #tpu.memory_space<vmem>>, vector<128x256xf32>,
    %c0_17 = arith.constant 0 : index
    %c0_18 = arith.constant 0 : index
    %23 = vector.load %arg11[%c0_17, %c0_18] : memref<128x256xf32, #tpu.memory_space<vmem>>, vector<128x256xf32>
    tpu.vector_store %arg11[%c0_17, %c0_18], %21 {strides = array<i32>} : memref<128x256xf32, #tpu.memory_space<vmem>>, vector<128x256xf32>,
    %c0_19 = arith.constant 0 : index
    %c0_20 = arith.constant 0 : index
    %24 = vector.load %arg7[%c0_19, %c0_20] : memref<128x256xf32, #tpu.memory_space<vmem>>, vector<128x256xf32>
    %25 = arith.addf %24, %21 : vector<128x256xf32>
    %c0_21 = arith.constant 0 : index
    %c0_22 = arith.constant 0 : index
    %26 = vector.load %arg7[%c0_21, %c0_22] : memref<128x256xf32, #tpu.memory_space<vmem>>, vector<128x256xf32>
    tpu.vector_store %arg7[%c0_21, %c0_22], %25 {strides = array<i32>} : memref<128x256xf32, #tpu.memory_space<vmem>>, vector<128x256xf32>,
    %c0_23 = arith.constant 0 : index
    %c0_24 = arith.constant 0 : index
    %27 = vector.load %arg11[%c0_23, %c0_24] : memref<128x256xf32, #tpu.memory_space<vmem>>, vector<128x256xf32>
    %c0_25 = arith.constant 0 : index
    %c0_26 = arith.constant 0 : index
    %28 = vector.load %arg3[%c0_25, %c0_26] : memref<256x256xf32, #tpu.memory_space<vmem>>, vector<256x256xf32>
    %cst_27 = arith.constant dense<0.000000e+00> : vector<128x256xf32>
    %29 = tpu.matmul %27, %28, %cst_27 {dimension_numbers = #tpu.dot_dimension_numbers<[1], [0], [0], [1], [0, 0, 1, 1], [], []>} : vector<128x256xf32>, vector<256x256xf32>, vector<128x256xf32> -> vector<128x256xf32>
    %c0_28 = arith.constant 0 : index
    %c0_29 = arith.constant 0 : index
    %30 = vector.load %arg13[%c0_28, %c0_29] : memref<128x256xf32, #tpu.memory_space<vmem>>, vector<128x256xf32>
    %cst_30 = arith.constant 0.000000e+00 : f32
    %31 = vector.broadcast %cst_30 : f32 to vector<128x256xf32>
    %32 = arith.cmpf ogt, %30, %31 : vector<128x256xf32>
    %c0_31 = arith.constant 0 : index
    %c0_32 = arith.constant 0 : index
    %33 = vector.load %arg12[%c0_31, %c0_32] : memref<128x256xf32, #tpu.memory_space<vmem>>, vector<128x256xf32>
    %34 = arith.addf %33, %29 : vector<128x256xf32>
    %35 = arith.select %32, %29, %34 : vector<128x256xi1>, vector<128x256xf32>
    %cst_33 = arith.constant 2.000000e-01 : f32
    %36 = vector.broadcast %cst_33 : f32 to vector<128x256xf32>
    %37 = arith.subf %35, %36 : vector<128x256xf32>
    %cst_34 = arith.constant 0.000000e+00 : f32
    %38 = vector.broadcast %cst_34 : f32 to vector<128x256xf32>
    %39 = arith.cmpf ogt, %37, %38 : vector<128x256xf32>
    %cst_35 = arith.constant 1.000000e+00 : f32
    %cst_36 = arith.constant 0.000000e+00 : f32
    %40 = vector.broadcast %cst_35 : f32 to vector<128x256xf32>
    %41 = vector.broadcast %cst_36 : f32 to vector<128x256xf32>
    %42 = arith.select %39, %40, %41 : vector<128x256xi1>, vector<128x256xf32>
    %43 = vector.broadcast %4 : vector<1x256xf32> to vector<128x256xf32>
    %44 = arith.mulf %42, %43 : vector<128x256xf32>
    %c0_37 = arith.constant 0 : index
    %c0_38 = arith.constant 0 : index
    %45 = vector.load %arg12[%c0_37, %c0_38] : memref<128x256xf32, #tpu.memory_space<vmem>>, vector<128x256xf32>
    tpu.vector_store %arg12[%c0_37, %c0_38], %35 {strides = array<i32>} : memref<128x256xf32, #tpu.memory_space<vmem>>, vector<128x256xf32>,
    %c0_39 = arith.constant 0 : index
    %c0_40 = arith.constant 0 : index
    %46 = vector.load %arg13[%c0_39, %c0_40] : memref<128x256xf32, #tpu.memory_space<vmem>>, vector<128x256xf32>
    tpu.vector_store %arg13[%c0_39, %c0_40], %44 {strides = array<i32>} : memref<128x256xf32, #tpu.memory_space<vmem>>, vector<128x256xf32>,
    %c0_41 = arith.constant 0 : index
    %c0_42 = arith.constant 0 : index
    %47 = vector.load %arg8[%c0_41, %c0_42] : memref<128x256xf32, #tpu.memory_space<vmem>>, vector<128x256xf32>
    %48 = arith.addf %47, %44 : vector<128x256xf32>
    %c0_43 = arith.constant 0 : index
    %c0_44 = arith.constant 0 : index
    %49 = vector.load %arg8[%c0_43, %c0_44] : memref<128x256xf32, #tpu.memory_space<vmem>>, vector<128x256xf32>
    tpu.vector_store %arg8[%c0_43, %c0_44], %48 {strides = array<i32>} : memref<128x256xf32, #tpu.memory_space<vmem>>, vector<128x256xf32>,
    %c0_45 = arith.constant 0 : index
    %c0_46 = arith.constant 0 : index
    %50 = vector.load %arg13[%c0_45, %c0_46] : memref<128x256xf32, #tpu.memory_space<vmem>>, vector<128x256xf32>
    %c0_47 = arith.constant 0 : index
    %c0_48 = arith.constant 0 : index
    %51 = vector.load %arg4[%c0_47, %c0_48] : memref<256x128xf32, #tpu.memory_space<vmem>>, vector<256x128xf32>
    %cst_49 = arith.constant dense<0.000000e+00> : vector<128x128xf32>
    %52 = tpu.matmul %50, %51, %cst_49 {dimension_numbers = #tpu.dot_dimension_numbers<[1], [0], [0], [1], [0, 0, 1, 1], [], []>} : vector<128x256xf32>, vector<256x128xf32>, vector<128x128xf32> -> vector<128x128xf32>
    %c0_50 = arith.constant 0 : index
    %c0_51 = arith.constant 0 : index
    %53 = vector.load %arg15[%c0_50, %c0_51] : memref<128x128xf32, #tpu.memory_space<vmem>>, vector<128x128xf32>
    %cst_52 = arith.constant 0.000000e+00 : f32
    %54 = vector.broadcast %cst_52 : f32 to vector<128x128xf32>
    %55 = arith.cmpf ogt, %53, %54 : vector<128x128xf32>
    %c0_53 = arith.constant 0 : index
    %c0_54 = arith.constant 0 : index
    %56 = vector.load %arg14[%c0_53, %c0_54] : memref<128x128xf32, #tpu.memory_space<vmem>>, vector<128x128xf32>
    %57 = arith.addf %56, %52 : vector<128x128xf32>
    %58 = arith.select %55, %52, %57 : vector<128x128xi1>, vector<128x128xf32>
    %cst_55 = arith.constant 2.000000e-01 : f32
    %59 = vector.broadcast %cst_55 : f32 to vector<128x128xf32>
    %60 = arith.subf %58, %59 : vector<128x128xf32>
    %cst_56 = arith.constant 0.000000e+00 : f32
    %61 = vector.broadcast %cst_56 : f32 to vector<128x128xf32>
    %62 = arith.cmpf ogt, %60, %61 : vector<128x128xf32>
    %cst_57 = arith.constant 1.000000e+00 : f32
    %cst_58 = arith.constant 0.000000e+00 : f32
    %63 = vector.broadcast %cst_57 : f32 to vector<128x128xf32>
    %64 = vector.broadcast %cst_58 : f32 to vector<128x128xf32>
    %65 = arith.select %62, %63, %64 : vector<128x128xi1>, vector<128x128xf32>
    %c0_59 = arith.constant 0 : index
    %c0_60 = arith.constant 0 : index
    %66 = vector.load %arg14[%c0_59, %c0_60] : memref<128x128xf32, #tpu.memory_space<vmem>>, vector<128x128xf32>
    tpu.vector_store %arg14[%c0_59, %c0_60], %58 {strides = array<i32>} : memref<128x128xf32, #tpu.memory_space<vmem>>, vector<128x128xf32>,
    %c0_61 = arith.constant 0 : index
    %c0_62 = arith.constant 0 : index
    %67 = vector.load %arg15[%c0_61, %c0_62] : memref<128x128xf32, #tpu.memory_space<vmem>>, vector<128x128xf32>
    tpu.vector_store %arg15[%c0_61, %c0_62], %65 {strides = array<i32>} : memref<128x128xf32, #tpu.memory_space<vmem>>, vector<128x128xf32>,
    %c0_63 = arith.constant 0 : index
    %c0_64 = arith.constant 0 : index
    %68 = vector.load %arg9[%c0_63, %c0_64] : memref<128x128xf32, #tpu.memory_space<vmem>>, vector<128x128xf32>
    %69 = arith.addf %68, %65 : vector<128x128xf32>
    %c0_65 = arith.constant 0 : index
    %c0_66 = arith.constant 0 : index
    %70 = vector.load %arg9[%c0_65, %c0_66] : memref<128x128xf32, #tpu.memory_space<vmem>>, vector<128x128xf32>
    tpu.vector_store %arg9[%c0_65, %c0_66], %69 {strides = array<i32>} : memref<128x128xf32, #tpu.memory_space<vmem>>, vector<128x128xf32>,
    %c9_i32 = arith.constant 9 : i32
    %71 = arith.cmpi eq, %arg1, %c9_i32 : i32
    %72 = arith.extui %71 : i1 to i32
    %c0_i32_67 = arith.constant 0 : i32
    %73 = arith.cmpi ne, %72, %c0_i32_67 : i32
    scf.if %73 {
      %c0_68 = arith.constant 0 : index
      %c0_69 = arith.constant 0 : index
      %74 = vector.load %arg7[%c0_68, %c0_69] : memref<128x256xf32, #tpu.memory_space<vmem>>, vector<128x256xf32>
      %cst_70 = arith.constant 1.000000e-01 : f32
      %75 = vector.broadcast %cst_70 : f32 to vector<128x256xf32>
      %76 = arith.mulf %74, %75 : vector<128x256xf32>
      %c0_71 = arith.constant 0 : index
      %c0_72 = arith.constant 0 : index
      %77 = vector.load %arg7[%c0_71, %c0_72] : memref<128x256xf32, #tpu.memory_space<vmem>>, vector<128x256xf32>
      tpu.vector_store %arg7[%c0_71, %c0_72], %76 {strides = array<i32>} : memref<128x256xf32, #tpu.memory_space<vmem>>, vector<128x256xf32>,
      %c0_73 = arith.constant 0 : index
      %c0_74 = arith.constant 0 : index
      %78 = vector.load %arg8[%c0_73, %c0_74] : memref<128x256xf32, #tpu.memory_space<vmem>>, vector<128x256xf32>
      %cst_75 = arith.constant 1.000000e-01 : f32
      %79 = vector.broadcast %cst_75 : f32 to vector<128x256xf32>
      %80 = arith.mulf %78, %79 : vector<128x256xf32>
      %c0_76 = arith.constant 0 : index
      %c0_77 = arith.constant 0 : index
      %81 = vector.load %arg8[%c0_76, %c0_77] : memref<128x256xf32, #tpu.memory_space<vmem>>, vector<128x256xf32>
      tpu.vector_store %arg8[%c0_76, %c0_77], %80 {strides = array<i32>} : memref<128x256xf32, #tpu.memory_space<vmem>>, vector<128x256xf32>,
      %c0_78 = arith.constant 0 : index
      %c0_79 = arith.constant 0 : index
      %82 = vector.load %arg9[%c0_78, %c0_79] : memref<128x128xf32, #tpu.memory_space<vmem>>, vector<128x128xf32>
      %cst_80 = arith.constant 1.000000e-01 : f32
      %83 = vector.broadcast %cst_80 : f32 to vector<128x128xf32>
      %84 = arith.mulf %82, %83 : vector<128x128xf32>
      %c0_81 = arith.constant 0 : index
      %c0_82 = arith.constant 0 : index
      %85 = vector.load %arg9[%c0_81, %c0_82] : memref<128x128xf32, #tpu.memory_space<vmem>>, vector<128x128xf32>
      tpu.vector_store %arg9[%c0_81, %c0_82], %84 {strides = array<i32>} : memref<128x128xf32, #tpu.memory_space<vmem>>, vector<128x128xf32>,
    } else {
    }
    return
  }
  func.func @transform_0(%arg0: i32, %arg1: i32) -> (i32, i32, i32) {
    %c0_i32 = arith.constant 0 : i32
    %c0_i32_0 = arith.constant 0 : i32
    return %arg1, %arg0, %c0_i32 : i32, i32, i32
  }
  func.func @transform_1(%arg0: i32, %arg1: i32) -> (i32, i32) {
    %c0_i32 = arith.constant 0 : i32
    %c0_i32_0 = arith.constant 0 : i32
    %c0_i32_1 = arith.constant 0 : i32
    return %c0_i32, %c0_i32_0 : i32, i32
  }
  func.func @transform_2(%arg0: i32, %arg1: i32) -> (i32, i32) {
    %c0_i32 = arith.constant 0 : i32
    %c0_i32_0 = arith.constant 0 : i32
    %c0_i32_1 = arith.constant 0 : i32
    return %c0_i32, %c0_i32_0 : i32, i32
  }
  func.func @transform_3(%arg0: i32, %arg1: i32) -> (i32, i32) {
    %c0_i32 = arith.constant 0 : i32
    %c0_i32_0 = arith.constant 0 : i32
    %c0_i32_1 = arith.constant 0 : i32
    return %c0_i32, %c0_i32_0 : i32, i32
  }
  func.func @transform_4(%arg0: i32, %arg1: i32) -> (i32, i32) {
    %c0_i32 = arith.constant 0 : i32
    %c0_i32_0 = arith.constant 0 : i32
    %c0_i32_1 = arith.constant 0 : i32
    return %c0_i32, %c0_i32_0 : i32, i32
  }
  func.func @transform_5(%arg0: i32, %arg1: i32) -> (i32, i32) {
    %c0_i32 = arith.constant 0 : i32
    %c0_i32_0 = arith.constant 0 : i32
    return %arg0, %c0_i32 : i32, i32
  }
  func.func @transform_6(%arg0: i32, %arg1: i32) -> (i32, i32) {
    %c0_i32 = arith.constant 0 : i32
    %c0_i32_0 = arith.constant 0 : i32
    return %arg0, %c0_i32 : i32, i32
  }
  func.func @transform_7(%arg0: i32, %arg1: i32) -> (i32, i32) {
    %c0_i32 = arith.constant 0 : i32
    %c0_i32_0 = arith.constant 0 : i32
    return %arg0, %c0_i32 : i32, i32
  }
}

</mosaic_0001>

<llo_original>
// kernel: main_net_forward.2
$region0: #{main_net_forward.2}
  #allocation0 [shape = 'u32[]', space=smem, size = 0x4, offset = 0x4, fixed_abs, tag = 'smem constant byte address 0x4 - core index']
  #allocation1 [shape = 'u32[144,128]{1,0:T(1,128)}', space=vmem, size = 0x12000, scoped, tag = 'internal scratch']
  #allocation2 [shape = 'f32[256,256]{1,0:T(8,128)}', space=vmem, size = 0x40000, scoped, tag = 'scratch operand']
  %s0 = inlined_call_operand.vmem [shape: f32[1280,128], index: 0, kind: input, shape index: {}]
  %s1 = inlined_call_operand.hbm [shape: f32[128,256], index: 1, kind: input, shape index: {}]
  %s2 = inlined_call_operand.vmem [shape: f32[1280,256], index: 2, kind: output, shape index: {}]
  %s3 = sld [smem:[#allocation0]]
  $region53: #{main_net_forward.2} parent=0
    _
  %s5 = ssub.s32 1, %s3
  %s6 = scalar_select 0, %s5, %s3
  $region1: #{main_net_forward.2} parent=0
    #allocation3 [shape = 'u8[131072]{0}', space=vmem, size = 0x20000, scoped, tag = 'input window, operand 1, single buffered']
    #allocation4 [shape = 's32[2]{0}', space=sflag, size = 0x8, scoped, tag = 'scoped memory for main_net_forward.2']
    %7 = vsyncpa [#allocation4], 0
    loop: start=0, step=1, limit=7
    $region2: #{main_net_forward.2} parent=1 // loop_pre_header
      _
    $region3: #{main_net_forward.2} parent=1 // loop_header
      %s9 = sphi 0, %s13
      %p10 = scmp.ge.s32.totalorder %s9, 7
      %s16 = sphi 0, %s35
      %s17 = sphi 0, %s31
      %s18 = sphi 0, %s27
      %s19 = sphi 0, %s16
      %s20 = sphi 0, %s17
      %s21 = sphi 0, %s18
      %s22 = sphi 0, %s19
      %s23 = sphi 0, %s20
      %s24 = sphi 0, %s21
      %s40 = sphi 0, %s42
      %s43 = sphi 0, %s40
      %s44 = sphi 0, %s43
      %s60 = sphi 0, %s44
      %s68 = sphi 0, %s70
      %s71 = sphi 0, %s68
      %s72 = sphi 0, %s71
      %s88 = sphi 0, %s72
      %s96 = sphi 0, %s98
      %s99 = sphi 0, %s96
      %s100 = sphi 0, %s99
      %s116 = sphi 0, %s100
    $region4: #{main_net_forward.2} parent=1 // loop_header_branch
      %12 = sbr.rel (%p10) target = $region8
    $region5: #{main_net_forward.2} parent=1 // loop_body
      %s14 = ssub.s32 %s9, 1
      %s15 = ssub.s32 %s9, 2
      %s25 = sadd.s32 1, %s18
      %p26 = scmp.ge.s32.totalorder %s25, 1
      %s27 = scalar_select %p26, 0, %s25
      %s28 = sadd.s32 1, %s17
      %s29 = scalar_select %p26, %s28, %s17
      %p30 = scmp.ge.s32.totalorder %s29, 1
      %s31 = scalar_select %p30, 0, %s29
      %s32 = sadd.s32 1, %s16
      %s33 = scalar_select %p30, %s32, %s16
      %p34 = scmp.ge.s32.totalorder %s33, 5
      %s35 = scalar_select %p34, 0, %s33
      %s36 = ssub.s32 %s16, %s35
      %s37 = ssub.s32 %s18, %s27
      %s38 = sor.u32 %s36, %s37
      %p39 = scmp.eq.s32.totalorder %s38, 0
      %s41 = sadd.s32 %s40, 1
      %s42 = scalar_select %p39, %s40, %s41
      %p45 = pneg %p39
      %p46 = scmp.eq.s32.totalorder %s9, 4
      %p47 = por %p45, %p46
      %p48 = scmp.ne.s32.totalorder %s40, %s43
      %p49 = scmp.eq.s32.totalorder %s9, 0
      %p50 = por %p48, %p49
      %p51 = scmp.ne.s32.totalorder %s40, %s43
      %p52 = scmp.eq.s32.totalorder %s14, 4
      %p53 = por %p51, %p52
      %p54 = scmp.ne.s32.totalorder %s43, %s44
      %p55 = scmp.eq.s32.totalorder %s14, 0
      %p56 = por %p54, %p55
      %p57 = scmp.ne.s32.totalorder %s43, %s44
      %p58 = scmp.eq.s32.totalorder %s15, 4
      %p59 = por %p57, %p58
      %p61 = scmp.ne.s32.totalorder %s44, %s60
      %p62 = scmp.eq.s32.totalorder %s15, 0
      %p63 = por %p61, %p62
      %s64 = ssub.s32 %s18, %s27
      %s65 = ssub.s32 %s17, %s31
      %s66 = sor.u32 %s64, %s65
      %p67 = scmp.eq.s32.totalorder %s66, 0
      %s69 = sadd.s32 %s68, 1
      %s70 = scalar_select %p67, %s68, %s69
      %p73 = pneg %p67
      %p74 = scmp.eq.s32.totalorder %s9, 4
      %p75 = por %p73, %p74
      %p76 = scmp.ne.s32.totalorder %s68, %s71
      %p77 = scmp.eq.s32.totalorder %s9, 0
      %p78 = por %p76, %p77
      %p79 = scmp.ne.s32.totalorder %s68, %s71
      %p80 = scmp.eq.s32.totalorder %s14, 4
      %p81 = por %p79, %p80
      %p82 = scmp.ne.s32.totalorder %s71, %s72
      %p83 = scmp.eq.s32.totalorder %s14, 0
      %p84 = por %p82, %p83
      %p85 = scmp.ne.s32.totalorder %s71, %s72
      %p86 = scmp.eq.s32.totalorder %s15, 4
      %p87 = por %p85, %p86
      %p89 = scmp.ne.s32.totalorder %s72, %s88
      %p90 = scmp.eq.s32.totalorder %s15, 0
      %p91 = por %p89, %p90
      %s92 = ssub.s32 %s16, %s35
      %s93 = ssub.s32 %s17, %s31
      %s94 = sor.u32 %s92, %s93
      %p95 = scmp.eq.s32.totalorder %s94, 0
      %s97 = sadd.s32 %s96, 1
      %s98 = scalar_select %p95, %s96, %s97
      %p101 = pneg %p95
      %p102 = scmp.eq.s32.totalorder %s9, 4
      %p103 = por %p101, %p102
      %p104 = scmp.ne.s32.totalorder %s96, %s99
      %p105 = scmp.eq.s32.totalorder %s9, 0
      %p106 = por %p104, %p105
      %p107 = scmp.ne.s32.totalorder %s96, %s99
      %p108 = scmp.eq.s32.totalorder %s14, 4
      %p109 = por %p107, %p108
      %p110 = scmp.ne.s32.totalorder %s99, %s100
      %p111 = scmp.eq.s32.totalorder %s14, 0
      %p112 = por %p110, %p111
      %p113 = scmp.ne.s32.totalorder %s99, %s100
      %p114 = scmp.eq.s32.totalorder %s15, 4
      %p115 = por %p113, %p114
      %p117 = scmp.ne.s32.totalorder %s100, %s116
      %p118 = scmp.eq.s32.totalorder %s15, 0
      %p119 = por %p117, %p118
      %p120 = scmp.le.s32.totalorder 1, %s9
      %p121 = scmp.lt.s32.totalorder %s9, 6
      %p122 = pnand %p120, %p121
      %p123 = pneg %p122
      // Predicated region
      $region9: #{main_net_forward.2} parent=5 // pred_check
        _
      $region10: #{main_net_forward.2} parent=5 // pred_check_branch
        %125 = sbr.rel (%p122) target = $region12
      $region11: #{main_net_forward.2} parent=5 // pred_region
        %s126 = ssub.s32 %s9, 1
        // Predicated region
        $region13: #{main_net_forward.2} parent=11 // pred_check
          %p127 = pneg %p84
        $region14: #{main_net_forward.2} parent=11 // pred_check_branch
          %129 = sbr.rel (%p127) target = $region16
        $region15: #{main_net_forward.2} parent=11 // pred_region
          %s130 = smul.u32 16, %s21
          %s131 = smul.u32 2, %s20
          %s133 = ssub.s32 4096, 4096
          %134 = vsyncadd [#allocation4], %s133
          %s135 = smul.addr %s130, 2
          %s136 = sadd.s32 %s131, %s135
          %s137 = smul.addr %s136, 128
          %s138 = scalar_lea.hbm %s1, %s137
          %s139 = sshll.u32 [#allocation3], 4
          %s140 = int_to_ptr.vmem [resolvable:$true] %s139
          %145 = dma.hbm_to_vmem [thread:$0]  %s138, 4096, %s140, [#allocation4], 256, 256, 16
        $region16: #{main_net_forward.2} parent=11 // pred_fallthru
          _
      $region12: #{main_net_forward.2} parent=5 // pred_fallthru
        _
      %p146 = scmp.lt.s32.totalorder %s9, 5
      // Predicated region
      $region17: #{main_net_forward.2} parent=5 // pred_check
        %p147 = pneg %p146
      $region18: #{main_net_forward.2} parent=5 // pred_check_branch
        %149 = sbr.rel (%p147) target = $region20
      $region19: #{main_net_forward.2} parent=5 // pred_region
        // Predicated region
        $region21: #{main_net_forward.2} parent=19 // pred_check
          %p150 = pneg %p50
        $region22: #{main_net_forward.2} parent=19 // pred_check_branch
          %152 = sbr.rel (%p150) target = $region24
        $region23: #{main_net_forward.2} parent=19 // pred_region
          %s153 = smul.u32 32, %s16
          %p154 = scmp.lt.s32.totalorder %s153, 159
          %s155 = scalar_select %p154, %s153, 159
          %p156 = scmp.lt.s32.totalorder %s18, 0
          %s157 = scalar_select %p156, %s18, 0
          %s158 = sadd.s32 %s157, %s155
          %s159 = smul.addr %s158, 8
          %s160 = scalar_lea.vmem %s0, %s159
          %s161 = smul.u32 32, %s16
        $region24: #{main_net_forward.2} parent=19 // pred_fallthru
          _
      $region20: #{main_net_forward.2} parent=5 // pred_fallthru
        _
      %p162 = scmp.le.s32.totalorder 1, %s9
      %p163 = scmp.lt.s32.totalorder %s9, 6
      %p164 = pnand %p162, %p163
      %p165 = pneg %p164
      // Predicated region
      $region25: #{main_net_forward.2} parent=5 // pred_check
        _
      $region26: #{main_net_forward.2} parent=5 // pred_check_branch
        %167 = sbr.rel (%p164) target = $region28
      $region27: #{main_net_forward.2} parent=5 // pred_region
        %s168 = ssub.s32 %s9, 1
        // Predicated region
        $region29: #{main_net_forward.2} parent=27 // pred_check
          %p169 = pneg %p84
        $region30: #{main_net_forward.2} parent=27 // pred_check_branch
          %171 = sbr.rel (%p169) target = $region32
        $region31: #{main_net_forward.2} parent=27 // pred_region
          %172 = dma.done [#allocation4], 4096
        $region32: #{main_net_forward.2} parent=27 // pred_fallthru
          _
        %s173 = smul.u32 32, %s19
        %p174 = scmp.lt.s32.totalorder %s173, 159
        %s175 = scalar_select %p174, %s173, 159
        %p176 = scmp.lt.s32.totalorder %s21, 0
        %s177 = scalar_select %p176, %s21, 0
        %s178 = sadd.s32 %s177, %s175
        %s179 = smul.addr %s178, 8
        %s180 = scalar_lea.vmem %s0, %s179
        %p181 = pneg %p56
        %p182 = pneg %p53
        %p183 = pneg %p84
        %p184 = pneg %p81
        %p185 = pneg %p112
        %p186 = pneg %p109
        %s187 = smul.u32 32, %s19
        %s188 = smul.u32 2, %s20
        %p189 = scmp.lt.s32.totalorder %s187, 159
        %s190 = scalar_select %p189, %s187, 159
        %p191 = scmp.lt.s32.totalorder %s188, 1
        %s192 = scalar_select %p191, %s188, 1
        %s193 = smul.addr %s190, 2
        %s194 = sadd.s32 %s192, %s193
        %s195 = smul.addr %s194, 8
        %s196 = scalar_lea.vmem %s2, %s195
        %s197 = smul.u32 32, %s19
        %p198 = scmp.lt.s32.totalorder %s197, 159
        %s199 = scalar_select %p198, %s197, 159
        %p200 = scmp.lt.s32.totalorder %s21, 0
        %s201 = scalar_select %p200, %s21, 0
        %s202 = sadd.s32 %s201, %s199
        %s203 = smul.addr %s202, 8
        %s204 = scalar_lea.vmem %s0, %s203
        %s205 = smul.u32 32, %s19
        %s206 = smul.u32 16, %s21
        %s207 = smul.u32 2, %s20
        %s208 = smul.u32 32, %s19
        %s209 = smul.u32 2, %s20
        %p210 = scmp.lt.s32.totalorder %s208, 159
        %s211 = scalar_select %p210, %s208, 159
        %p212 = scmp.lt.s32.totalorder %s209, 1
        %s213 = scalar_select %p212, %s209, 1
        %s214 = smul.addr %s211, 2
        %s215 = sadd.s32 %s213, %s214
        %s216 = smul.addr %s215, 8
        %s217 = scalar_lea.vmem %s2, %s216
        %s218 = smul.u32 32, %s19
        %s219 = smul.u32 2, %s20
        %p220 = scmp.eq.s32.totalorder %s21, 0
        // Predicated region
        $region33: #{main_net_forward.2} parent=27 // pred_check
          %p221 = pneg %p220
        $region34: #{main_net_forward.2} parent=27 // pred_check_branch
          %223 = sbr.rel (%p221) target = $region36
        $region35: #{main_net_forward.2} parent=27 // pred_region
          %224 = vst [vmem:[#allocation2] sm:$0xff] 0.0
          %225 = vst [vmem:[#allocation2 + $0x8] sm:$0xff] 0.0
          %226 = vst [vmem:[#allocation2 + $0x10] sm:$0xff] 0.0
          %227 = vst [vmem:[#allocation2 + $0x18] sm:$0xff] 0.0
          %228 = vst [vmem:[#allocation2 + $0x20] sm:$0xff] 0.0
          %229 = vst [vmem:[#allocation2 + $0x28] sm:$0xff] 0.0
          %230 = vst [vmem:[#allocation2 + $0x30] sm:$0xff] 0.0
          %231 = vst [vmem:[#allocation2 + $0x38] sm:$0xff] 0.0
          %232 = vst [vmem:[#allocation2 + $0x40] sm:$0xff] 0.0
          %233 = vst [vmem:[#allocation2 + $0x48] sm:$0xff] 0.0
          %234 = vst [vmem:[#allocation2 + $0x50] sm:$0xff] 0.0
          %235 = vst [vmem:[#allocation2 + $0x58] sm:$0xff] 0.0
          %236 = vst [vmem:[#allocation2 + $0x60] sm:$0xff] 0.0
          %237 = vst [vmem:[#allocation2 + $0x68] sm:$0xff] 0.0
          %238 = vst [vmem:[#allocation2 + $0x70] sm:$0xff] 0.0
          %239 = vst [vmem:[#allocation2 + $0x78] sm:$0xff] 0.0
          %240 = vst [vmem:[#allocation2 + $0x80] sm:$0xff] 0.0
          %241 = vst [vmem:[#allocation2 + $0x88] sm:$0xff] 0.0
          %242 = vst [vmem:[#allocation2 + $0x90] sm:$0xff] 0.0
          %243 = vst [vmem:[#allocation2 + $0x98] sm:$0xff] 0.0
          %244 = vst [vmem:[#allocation2 + $0xa0] sm:$0xff] 0.0
          %245 = vst [vmem:[#allocation2 + $0xa8] sm:$0xff] 0.0
          %246 = vst [vmem:[#allocation2 + $0xb0] sm:$0xff] 0.0
          %247 = vst [vmem:[#allocation2 + $0xb8] sm:$0xff] 0.0
          %248 = vst [vmem:[#allocation2 + $0xc0] sm:$0xff] 0.0
          %249 = vst [vmem:[#allocation2 + $0xc8] sm:$0xff] 0.0
          %250 = vst [vmem:[#allocation2 + $0xd0] sm:$0xff] 0.0
          %251 = vst [vmem:[#allocation2 + $0xd8] sm:$0xff] 0.0
          %252 = vst [vmem:[#allocation2 + $0xe0] sm:$0xff] 0.0
          %253 = vst [vmem:[#allocation2 + $0xe8] sm:$0xff] 0.0
          %254 = vst [vmem:[#allocation2 + $0xf0] sm:$0xff] 0.0
          %255 = vst [vmem:[#allocation2 + $0xf8] sm:$0xff] 0.0
          %256 = vst [vmem:[#allocation2 + $0x100] sm:$0xff] 0.0
          %257 = vst [vmem:[#allocation2 + $0x108] sm:$0xff] 0.0
          %258 = vst [vmem:[#allocation2 + $0x110] sm:$0xff] 0.0
          %259 = vst [vmem:[#allocation2 + $0x118] sm:$0xff] 0.0
          %260 = vst [vmem:[#allocation2 + $0x120] sm:$0xff] 0.0
          %261 = vst [vmem:[#allocation2 + $0x128] sm:$0xff] 0.0
          %262 = vst [vmem:[#allocation2 + $0x130] sm:$0xff] 0.0
          %263 = vst [vmem:[#allocation2 + $0x138] sm:$0xff] 0.0
          %264 = vst [vmem:[#allocation2 + $0x140] sm:$0xff] 0.0
          %265 = vst [vmem:[#allocation2 + $0x148] sm:$0xff] 0.0
          %266 = vst [vmem:[#allocation2 + $0x150] sm:$0xff] 0.0
          %267 = vst [vmem:[#allocation2 + $0x158] sm:$0xff] 0.0
          %268 = vst [vmem:[#allocation2 + $0x160] sm:$0xff] 0.0
          %269 = vst [vmem:[#allocation2 + $0x168] sm:$0xff] 0.0
          %270 = vst [vmem:[#allocation2 + $0x170] sm:$0xff] 0.0
          %271 = vst [vmem:[#allocation2 + $0x178] sm:$0xff] 0.0
          %272 = vst [vmem:[#allocation2 + $0x180] sm:$0xff] 0.0
          %273 = vst [vmem:[#allocation2 + $0x188] sm:$0xff] 0.0
          %274 = vst [vmem:[#allocation2 + $0x190] sm:$0xff] 0.0
          %275 = vst [vmem:[#allocation2 + $0x198] sm:$0xff] 0.0
          %276 = vst [vmem:[#allocation2 + $0x1a0] sm:$0xff] 0.0
          %277 = vst [vmem:[#allocation2 + $0x1a8] sm:$0xff] 0.0
          %278 = vst [vmem:[#allocation2 + $0x1b0] sm:$0xff] 0.0
          %279 = vst [vmem:[#allocation2 + $0x1b8] sm:$0xff] 0.0
          %280 = vst [vmem:[#allocation2 + $0x1c0] sm:$0xff] 0.0
          %281 = vst [vmem:[#allocation2 + $0x1c8] sm:$0xff] 0.0
          %282 = vst [vmem:[#allocation2 + $0x1d0] sm:$0xff] 0.0
          %283 = vst [vmem:[#allocation2 + $0x1d8] sm:$0xff] 0.0
          %284 = vst [vmem:[#allocation2 + $0x1e0] sm:$0xff] 0.0
          %285 = vst [vmem:[#allocation2 + $0x1e8] sm:$0xff] 0.0
          %286 = vst [vmem:[#allocation2 + $0x1f0] sm:$0xff] 0.0
          %287 = vst [vmem:[#allocation2 + $0x1f8] sm:$0xff] 0.0
        $region36: #{main_net_forward.2} parent=27 // pred_fallthru
          _
        %v288 = vld [vmem:[#allocation2] sm:$0xff]
        %v289 = vld [vmem:[#allocation2 + $0x8] sm:$0xff]
        %v290 = vld [vmem:[#allocation2 + $0x10] sm:$0xff]
        %v291 = vld [vmem:[#allocation2 + $0x18] sm:$0xff]
        %v292 = vld [vmem:[#allocation2 + $0x20] sm:$0xff]
        %v293 = vld [vmem:[#allocation2 + $0x28] sm:$0xff]
        %v294 = vld [vmem:[#allocation2 + $0x30] sm:$0xff]
        %v295 = vld [vmem:[#allocation2 + $0x38] sm:$0xff]
        %v296 = vld [vmem:[#allocation2 + $0x40] sm:$0xff]
        %v297 = vld [vmem:[#allocation2 + $0x48] sm:$0xff]
        %v298 = vld [vmem:[#allocation2 + $0x50] sm:$0xff]
        %v299 = vld [vmem:[#allocation2 + $0x58] sm:$0xff]
        %v300 = vld [vmem:[#allocation2 + $0x60] sm:$0xff]
        %v301 = vld [vmem:[#allocation2 + $0x68] sm:$0xff]
        %v302 = vld [vmem:[#allocation2 + $0x70] sm:$0xff]
        %v303 = vld [vmem:[#allocation2 + $0x78] sm:$0xff]
        %v304 = vld [vmem:[#allocation2 + $0x80] sm:$0xff]
        %v305 = vld [vmem:[#allocation2 + $0x88] sm:$0xff]
        %v306 = vld [vmem:[#allocation2 + $0x90] sm:$0xff]
        %v307 = vld [vmem:[#allocation2 + $0x98] sm:$0xff]
        %v308 = vld [vmem:[#allocation2 + $0xa0] sm:$0xff]
        %v309 = vld [vmem:[#allocation2 + $0xa8] sm:$0xff]
        %v310 = vld [vmem:[#allocation2 + $0xb0] sm:$0xff]
        %v311 = vld [vmem:[#allocation2 + $0xb8] sm:$0xff]
        %v312 = vld [vmem:[#allocation2 + $0xc0] sm:$0xff]
        %v313 = vld [vmem:[#allocation2 + $0xc8] sm:$0xff]
        %v314 = vld [vmem:[#allocation2 + $0xd0] sm:$0xff]
        %v315 = vld [vmem:[#allocation2 + $0xd8] sm:$0xff]
        %v316 = vld [vmem:[#allocation2 + $0xe0] sm:$0xff]
        %v317 = vld [vmem:[#allocation2 + $0xe8] sm:$0xff]
        %v318 = vld [vmem:[#allocation2 + $0xf0] sm:$0xff]
        %v319 = vld [vmem:[#allocation2 + $0xf8] sm:$0xff]
        %v320 = vld [vmem:[#allocation2 + $0x100] sm:$0xff]
        %v321 = vld [vmem:[#allocation2 + $0x108] sm:$0xff]
        %v322 = vld [vmem:[#allocation2 + $0x110] sm:$0xff]
        %v323 = vld [vmem:[#allocation2 + $0x118] sm:$0xff]
        %v324 = vld [vmem:[#allocation2 + $0x120] sm:$0xff]
        %v325 = vld [vmem:[#allocation2 + $0x128] sm:$0xff]
        %v326 = vld [vmem:[#allocation2 + $0x130] sm:$0xff]
        %v327 = vld [vmem:[#allocation2 + $0x138] sm:$0xff]
        %v328 = vld [vmem:[#allocation2 + $0x140] sm:$0xff]
        %v329 = vld [vmem:[#allocation2 + $0x148] sm:$0xff]
        %v330 = vld [vmem:[#allocation2 + $0x150] sm:$0xff]
        %v331 = vld [vmem:[#allocation2 + $0x158] sm:$0xff]
        %v332 = vld [vmem:[#allocation2 + $0x160] sm:$0xff]
        %v333 = vld [vmem:[#allocation2 + $0x168] sm:$0xff]
        %v334 = vld [vmem:[#allocation2 + $0x170] sm:$0xff]
        %v335 = vld [vmem:[#allocation2 + $0x178] sm:$0xff]
        %v336 = vld [vmem:[#allocation2 + $0x180] sm:$0xff]
        %v337 = vld [vmem:[#allocation2 + $0x188] sm:$0xff]
        %v338 = vld [vmem:[#allocation2 + $0x190] sm:$0xff]
        %v339 = vld [vmem:[#allocation2 + $0x198] sm:$0xff]
        %v340 = vld [vmem:[#allocation2 + $0x1a0] sm:$0xff]
        %v341 = vld [vmem:[#allocation2 + $0x1a8] sm:$0xff]
        %v342 = vld [vmem:[#allocation2 + $0x1b0] sm:$0xff]
        %v343 = vld [vmem:[#allocation2 + $0x1b8] sm:$0xff]
        %v344 = vld [vmem:[#allocation2 + $0x1c0] sm:$0xff]
        %v345 = vld [vmem:[#allocation2 + $0x1c8] sm:$0xff]
        %v346 = vld [vmem:[#allocation2 + $0x1d0] sm:$0xff]
        %v347 = vld [vmem:[#allocation2 + $0x1d8] sm:$0xff]
        %v348 = vld [vmem:[#allocation2 + $0x1e0] sm:$0xff]
        %v349 = vld [vmem:[#allocation2 + $0x1e8] sm:$0xff]
        %v350 = vld [vmem:[#allocation2 + $0x1f0] sm:$0xff]
        %v351 = vld [vmem:[#allocation2 + $0x1f8] sm:$0xff]
        %v352 = vld [vmem:[%s204] sm:$0xff]
        %v353 = vld [vmem:[%s204 + $0x8] sm:$0xff]
        %v354 = vld [vmem:[%s204 + $0x10] sm:$0xff]
        %v355 = vld [vmem:[%s204 + $0x18] sm:$0xff]
        %v356 = vld [vmem:[%s204 + $0x20] sm:$0xff]
        %v357 = vld [vmem:[%s204 + $0x28] sm:$0xff]
        %v358 = vld [vmem:[%s204 + $0x30] sm:$0xff]
        %v359 = vld [vmem:[%s204 + $0x38] sm:$0xff]
        %v360 = vld [vmem:[%s204 + $0x40] sm:$0xff]
        %v361 = vld [vmem:[%s204 + $0x48] sm:$0xff]
        %v362 = vld [vmem:[%s204 + $0x50] sm:$0xff]
        %v363 = vld [vmem:[%s204 + $0x58] sm:$0xff]
        %v364 = vld [vmem:[%s204 + $0x60] sm:$0xff]
        %v365 = vld [vmem:[%s204 + $0x68] sm:$0xff]
        %v366 = vld [vmem:[%s204 + $0x70] sm:$0xff]
        %v367 = vld [vmem:[%s204 + $0x78] sm:$0xff]
        %v368 = vld [vmem:[%s204 + $0x80] sm:$0xff]
        %v369 = vld [vmem:[%s204 + $0x88] sm:$0xff]
        %v370 = vld [vmem:[%s204 + $0x90] sm:$0xff]
        %v371 = vld [vmem:[%s204 + $0x98] sm:$0xff]
        %v372 = vld [vmem:[%s204 + $0xa0] sm:$0xff]
        %v373 = vld [vmem:[%s204 + $0xa8] sm:$0xff]
        %v374 = vld [vmem:[%s204 + $0xb0] sm:$0xff]
        %v375 = vld [vmem:[%s204 + $0xb8] sm:$0xff]
        %v376 = vld [vmem:[%s204 + $0xc0] sm:$0xff]
        %v377 = vld [vmem:[%s204 + $0xc8] sm:$0xff]
        %v378 = vld [vmem:[%s204 + $0xd0] sm:$0xff]
        %v379 = vld [vmem:[%s204 + $0xd8] sm:$0xff]
        %v380 = vld [vmem:[%s204 + $0xe0] sm:$0xff]
        %v381 = vld [vmem:[%s204 + $0xe8] sm:$0xff]
        %v382 = vld [vmem:[%s204 + $0xf0] sm:$0xff]
        %v383 = vld [vmem:[%s204 + $0xf8] sm:$0xff]
        %v384 = vld [vmem:[#allocation3] sm:$0xff]
        %v385 = vld [vmem:[#allocation3 + $0x8] sm:$0xff]
        %v386 = vld [vmem:[#allocation3 + $0x10] sm:$0xff]
        %v387 = vld [vmem:[#allocation3 + $0x18] sm:$0xff]
        %v388 = vld [vmem:[#allocation3 + $0x20] sm:$0xff]
        %v389 = vld [vmem:[#allocation3 + $0x28] sm:$0xff]
        %v390 = vld [vmem:[#allocation3 + $0x30] sm:$0xff]
        %v391 = vld [vmem:[#allocation3 + $0x38] sm:$0xff]
        %v392 = vld [vmem:[#allocation3 + $0x40] sm:$0xff]
        %v393 = vld [vmem:[#allocation3 + $0x48] sm:$0xff]
        %v394 = vld [vmem:[#allocation3 + $0x50] sm:$0xff]
        %v395 = vld [vmem:[#allocation3 + $0x58] sm:$0xff]
        %v396 = vld [vmem:[#allocation3 + $0x60] sm:$0xff]
        %v397 = vld [vmem:[#allocation3 + $0x68] sm:$0xff]
        %v398 = vld [vmem:[#allocation3 + $0x70] sm:$0xff]
        %v399 = vld [vmem:[#allocation3 + $0x78] sm:$0xff]
        %v400 = vld [vmem:[#allocation3 + $0x80] sm:$0xff]
        %v401 = vld [vmem:[#allocation3 + $0x88] sm:$0xff]
        %v402 = vld [vmem:[#allocation3 + $0x90] sm:$0xff]
        %v403 = vld [vmem:[#allocation3 + $0x98] sm:$0xff]
        %v404 = vld [vmem:[#allocation3 + $0xa0] sm:$0xff]
        %v405 = vld [vmem:[#allocation3 + $0xa8] sm:$0xff]
        %v406 = vld [vmem:[#allocation3 + $0xb0] sm:$0xff]
        %v407 = vld [vmem:[#allocation3 + $0xb8] sm:$0xff]
        %v408 = vld [vmem:[#allocation3 + $0xc0] sm:$0xff]
        %v409 = vld [vmem:[#allocation3 + $0xc8] sm:$0xff]
        %v410 = vld [vmem:[#allocation3 + $0xd0] sm:$0xff]
        %v411 = vld [vmem:[#allocation3 + $0xd8] sm:$0xff]
        %v412 = vld [vmem:[#allocation3 + $0xe0] sm:$0xff]
        %v413 = vld [vmem:[#allocation3 + $0xe8] sm:$0xff]
        %v414 = vld [vmem:[#allocation3 + $0xf0] sm:$0xff]
        %v415 = vld [vmem:[#allocation3 + $0xf8] sm:$0xff]
        %416 = vmatprep.subr.mxu0 %v385
        %417 = vmatpush1.msra.mxu0 %v384
        %418 = vmatprep.subr.mxu0 %v387
        %419 = vmatpush1.msra.mxu0 %v386
        %420 = vmatprep.subr.mxu0 %v389
        %421 = vmatpush1.msra.mxu0 %v388
        %422 = vmatprep.subr.mxu0 %v391
        %423 = vmatpush1.msra.mxu0 %v390
        %424 = vmatprep.subr.mxu0 %v393
        %425 = vmatpush1.msra.mxu0 %v392
        %426 = vmatprep.subr.mxu0 %v395
        %427 = vmatpush1.msra.mxu0 %v394
        %428 = vmatprep.subr.mxu0 %v397
        %429 = vmatpush1.msra.mxu0 %v396
        %430 = vmatprep.subr.mxu0 %v399
        %431 = vmatpush1.msra.mxu0 %v398
        %432 = vmatprep.subr.mxu0 %v401
        %433 = vmatpush1.msra.mxu0 %v400
        %434 = vmatprep.subr.mxu0 %v403
        %435 = vmatpush1.msra.mxu0 %v402
        %436 = vmatprep.subr.mxu0 %v405
        %437 = vmatpush1.msra.mxu0 %v404
        %438 = vmatprep.subr.mxu0 %v407
        %439 = vmatpush1.msra.mxu0 %v406
        %440 = vmatprep.subr.mxu0 %v409
        %441 = vmatpush1.msra.mxu0 %v408
        %442 = vmatprep.subr.mxu0 %v411
        %443 = vmatpush1.msra.mxu0 %v410
        %444 = vmatprep.subr.mxu0 %v413
        %445 = vmatpush1.msra.mxu0 %v412
        %446 = vmatprep.subr.mxu0 %v415
        %447 = vmatpush1.msra.mxu0 %v414
        %448 = vmatprep.subr.mxu0 0.0
        %449 = vmatpush1.msra.mxu0 0.0
        %450 = vmatprep.subr.mxu0 0.0
        %451 = vmatpush1.msra.mxu0 0.0
        %452 = vmatprep.subr.mxu0 0.0
        %453 = vmatpush1.msra.mxu0 0.0
        %454 = vmatprep.subr.mxu0 0.0
        %455 = vmatpush1.msra.mxu0 0.0
        %456 = vmatprep.subr.mxu0 0.0
        %457 = vmatpush1.msra.mxu0 0.0
        %458 = vmatprep.subr.mxu0 0.0
        %459 = vmatpush1.msra.mxu0 0.0
        %460 = vmatprep.subr.mxu0 0.0
        %461 = vmatpush1.msra.mxu0 0.0
        %462 = vmatprep.subr.mxu0 0.0
        %463 = vmatpush1.msra.mxu0 0.0
        %464 = vmatprep.subr.mxu0 0.0
        %465 = vmatpush1.msra.mxu0 0.0
        %466 = vmatprep.subr.mxu0 0.0
        %467 = vmatpush1.msra.mxu0 0.0
        %468 = vmatprep.subr.mxu0 0.0
        %469 = vmatpush1.msra.mxu0 0.0
        %470 = vmatprep.subr.mxu0 0.0
        %471 = vmatpush1.msra.mxu0 0.0
        %472 = vmatprep.subr.mxu0 0.0
        %473 = vmatpush1.msra.mxu0 0.0
        %474 = vmatprep.subr.mxu0 0.0
        %475 = vmatpush1.msra.mxu0 0.0
        %476 = vmatprep.subr.mxu0 0.0
        %477 = vmatpush1.msra.mxu0 0.0
        %478 = vmatprep.subr.mxu0 0.0
        %479 = vmatpush1.msra.mxu0 0.0
        %480 = vmatprep.mubr.f32.mxu0 0.0
        %481 = vmatmul.mubr.f32.gmra.mrb[0].mxu0 %v352
        %v482 = vpop.f32.mrb[0].mxu0
        %v483 = vadd.f32 0.0, %v482
        %v484 = vpop.f32.mrb[0].mxu0
        %v485 = vadd.f32 0.0, %v484
        %486 = vmatprep.mubr.f32.mxu0 0.0
        %487 = vmatmul.mubr.f32.gmra.mrb[0].mxu0 %v353
        %v488 = vpop.f32.mrb[0].mxu0
        %v489 = vadd.f32 0.0, %v488
        %v490 = vpop.f32.mrb[0].mxu0
        %v491 = vadd.f32 0.0, %v490
        %492 = vmatprep.mubr.f32.mxu0 0.0
        %493 = vmatmul.mubr.f32.gmra.mrb[0].mxu0 %v354
        %v494 = vpop.f32.mrb[0].mxu0
        %v495 = vadd.f32 0.0, %v494
        %v496 = vpop.f32.mrb[0].mxu0
        %v497 = vadd.f32 0.0, %v496
        %498 = vmatprep.mubr.f32.mxu0 0.0
        %499 = vmatmul.mubr.f32.gmra.mrb[0].mxu0 %v355
        %v500 = vpop.f32.mrb[0].mxu0
        %v501 = vadd.f32 0.0, %v500
        %v502 = vpop.f32.mrb[0].mxu0
        %v503 = vadd.f32 0.0, %v502
        %504 = vmatprep.mubr.f32.mxu0 0.0
        %505 = vmatmul.mubr.f32.gmra.mrb[0].mxu0 %v356
        %v506 = vpop.f32.mrb[0].mxu0
        %v507 = vadd.f32 0.0, %v506
        %v508 = vpop.f32.mrb[0].mxu0
        %v509 = vadd.f32 0.0, %v508
        %510 = vmatprep.mubr.f32.mxu0 0.0
        %511 = vmatmul.mubr.f32.gmra.mrb[0].mxu0 %v357
        %v512 = vpop.f32.mrb[0].mxu0
        %v513 = vadd.f32 0.0, %v512
        %v514 = vpop.f32.mrb[0].mxu0
        %v515 = vadd.f32 0.0, %v514
        %516 = vmatprep.mubr.f32.mxu0 0.0
        %517 = vmatmul.mubr.f32.gmra.mrb[0].mxu0 %v358
        %v518 = vpop.f32.mrb[0].mxu0
        %v519 = vadd.f32 0.0, %v518
        %v520 = vpop.f32.mrb[0].mxu0
        %v521 = vadd.f32 0.0, %v520
        %522 = vmatprep.mubr.f32.mxu0 0.0
        %523 = vmatmul.mubr.f32.gmra.mrb[0].mxu0 %v359
        %v524 = vpop.f32.mrb[0].mxu0
        %v525 = vadd.f32 0.0, %v524
        %v526 = vpop.f32.mrb[0].mxu0
        %v527 = vadd.f32 0.0, %v526
        %528 = vmatprep.mubr.f32.mxu0 0.0
        %529 = vmatmul.mubr.f32.gmra.mrb[0].mxu0 %v360
        %v530 = vpop.f32.mrb[0].mxu0
        %v531 = vadd.f32 0.0, %v530
        %v532 = vpop.f32.mrb[0].mxu0
        %v533 = vadd.f32 0.0, %v532
        %534 = vmatprep.mubr.f32.mxu0 0.0
        %535 = vmatmul.mubr.f32.gmra.mrb[0].mxu0 %v361
        %v536 = vpop.f32.mrb[0].mxu0
        %v537 = vadd.f32 0.0, %v536
        %v538 = vpop.f32.mrb[0].mxu0
        %v539 = vadd.f32 0.0, %v538
        %540 = vmatprep.mubr.f32.mxu0 0.0
        %541 = vmatmul.mubr.f32.gmra.mrb[0].mxu0 %v362
        %v542 = vpop.f32.mrb[0].mxu0
        %v543 = vadd.f32 0.0, %v542
        %v544 = vpop.f32.mrb[0].mxu0
        %v545 = vadd.f32 0.0, %v544
        %546 = vmatprep.mubr.f32.mxu0 0.0
        %547 = vmatmul.mubr.f32.gmra.mrb[0].mxu0 %v363
        %v548 = vpop.f32.mrb[0].mxu0
        %v549 = vadd.f32 0.0, %v548
        %v550 = vpop.f32.mrb[0].mxu0
        %v551 = vadd.f32 0.0, %v550
        %552 = vmatprep.mubr.f32.mxu0 0.0
        %553 = vmatmul.mubr.f32.gmra.mrb[0].mxu0 %v364
        %v554 = vpop.f32.mrb[0].mxu0
        %v555 = vadd.f32 0.0, %v554
        %v556 = vpop.f32.mrb[0].mxu0
        %v557 = vadd.f32 0.0, %v556
        %558 = vmatprep.mubr.f32.mxu0 0.0
        %559 = vmatmul.mubr.f32.gmra.mrb[0].mxu0 %v365
        %v560 = vpop.f32.mrb[0].mxu0
        %v561 = vadd.f32 0.0, %v560
        %v562 = vpop.f32.mrb[0].mxu0
        %v563 = vadd.f32 0.0, %v562
        %564 = vmatprep.mubr.f32.mxu0 0.0
        %565 = vmatmul.mubr.f32.gmra.mrb[0].mxu0 %v366
        %v566 = vpop.f32.mrb[0].mxu0
        %v567 = vadd.f32 0.0, %v566
        %v568 = vpop.f32.mrb[0].mxu0
        %v569 = vadd.f32 0.0, %v568
        %570 = vmatprep.mubr.f32.mxu0 0.0
        %571 = vmatmul.mubr.f32.gmra.mrb[0].mxu0 %v367
        %v572 = vpop.f32.mrb[0].mxu0
        %v573 = vadd.f32 0.0, %v572
        %v574 = vpop.f32.mrb[0].mxu0
        %v575 = vadd.f32 0.0, %v574
        %576 = vmatprep.mubr.f32.mxu0 0.0
        %577 = vmatmul.mubr.f32.gmra.mrb[0].mxu0 %v368
        %v578 = vpop.f32.mrb[0].mxu0
        %v579 = vadd.f32 0.0, %v578
        %v580 = vpop.f32.mrb[0].mxu0
        %v581 = vadd.f32 0.0, %v580
        %582 = vmatprep.mubr.f32.mxu0 0.0
        %583 = vmatmul.mubr.f32.gmra.mrb[0].mxu0 %v369
        %v584 = vpop.f32.mrb[0].mxu0
        %v585 = vadd.f32 0.0, %v584
        %v586 = vpop.f32.mrb[0].mxu0
        %v587 = vadd.f32 0.0, %v586
        %588 = vmatprep.mubr.f32.mxu0 0.0
        %589 = vmatmul.mubr.f32.gmra.mrb[0].mxu0 %v370
        %v590 = vpop.f32.mrb[0].mxu0
        %v591 = vadd.f32 0.0, %v590
        %v592 = vpop.f32.mrb[0].mxu0
        %v593 = vadd.f32 0.0, %v592
        %594 = vmatprep.mubr.f32.mxu0 0.0
        %595 = vmatmul.mubr.f32.gmra.mrb[0].mxu0 %v371
        %v596 = vpop.f32.mrb[0].mxu0
        %v597 = vadd.f32 0.0, %v596
        %v598 = vpop.f32.mrb[0].mxu0
        %v599 = vadd.f32 0.0, %v598
        %600 = vmatprep.mubr.f32.mxu0 0.0
        %601 = vmatmul.mubr.f32.gmra.mrb[0].mxu0 %v372
        %v602 = vpop.f32.mrb[0].mxu0
        %v603 = vadd.f32 0.0, %v602
        %v604 = vpop.f32.mrb[0].mxu0
        %v605 = vadd.f32 0.0, %v604
        %606 = vmatprep.mubr.f32.mxu0 0.0
        %607 = vmatmul.mubr.f32.gmra.mrb[0].mxu0 %v373
        %v608 = vpop.f32.mrb[0].mxu0
        %v609 = vadd.f32 0.0, %v608
        %v610 = vpop.f32.mrb[0].mxu0
        %v611 = vadd.f32 0.0, %v610
        %612 = vmatprep.mubr.f32.mxu0 0.0
        %613 = vmatmul.mubr.f32.gmra.mrb[0].mxu0 %v374
        %v614 = vpop.f32.mrb[0].mxu0
        %v615 = vadd.f32 0.0, %v614
        %v616 = vpop.f32.mrb[0].mxu0
        %v617 = vadd.f32 0.0, %v616
        %618 = vmatprep.mubr.f32.mxu0 0.0
        %619 = vmatmul.mubr.f32.gmra.mrb[0].mxu0 %v375
        %v620 = vpop.f32.mrb[0].mxu0
        %v621 = vadd.f32 0.0, %v620
        %v622 = vpop.f32.mrb[0].mxu0
        %v623 = vadd.f32 0.0, %v622
        %624 = vmatprep.mubr.f32.mxu0 0.0
        %625 = vmatmul.mubr.f32.gmra.mrb[0].mxu0 %v376
        %v626 = vpop.f32.mrb[0].mxu0
        %v627 = vadd.f32 0.0, %v626
        %v628 = vpop.f32.mrb[0].mxu0
        %v629 = vadd.f32 0.0, %v628
        %630 = vmatprep.mubr.f32.mxu0 0.0
        %631 = vmatmul.mubr.f32.gmra.mrb[0].mxu0 %v377
        %v632 = vpop.f32.mrb[0].mxu0
        %v633 = vadd.f32 0.0, %v632
        %v634 = vpop.f32.mrb[0].mxu0
        %v635 = vadd.f32 0.0, %v634
        %636 = vmatprep.mubr.f32.mxu0 0.0
        %637 = vmatmul.mubr.f32.gmra.mrb[0].mxu0 %v378
        %v638 = vpop.f32.mrb[0].mxu0
        %v639 = vadd.f32 0.0, %v638
        %v640 = vpop.f32.mrb[0].mxu0
        %v641 = vadd.f32 0.0, %v640
        %642 = vmatprep.mubr.f32.mxu0 0.0
        %643 = vmatmul.mubr.f32.gmra.mrb[0].mxu0 %v379
        %v644 = vpop.f32.mrb[0].mxu0
        %v645 = vadd.f32 0.0, %v644
        %v646 = vpop.f32.mrb[0].mxu0
        %v647 = vadd.f32 0.0, %v646
        %648 = vmatprep.mubr.f32.mxu0 0.0
        %649 = vmatmul.mubr.f32.gmra.mrb[0].mxu0 %v380
        %v650 = vpop.f32.mrb[0].mxu0
        %v651 = vadd.f32 0.0, %v650
        %v652 = vpop.f32.mrb[0].mxu0
        %v653 = vadd.f32 0.0, %v652
        %654 = vmatprep.mubr.f32.mxu0 0.0
        %655 = vmatmul.mubr.f32.gmra.mrb[0].mxu0 %v381
        %v656 = vpop.f32.mrb[0].mxu0
        %v657 = vadd.f32 0.0, %v656
        %v658 = vpop.f32.mrb[0].mxu0
        %v659 = vadd.f32 0.0, %v658
        %660 = vmatprep.mubr.f32.mxu0 0.0
        %661 = vmatmul.mubr.f32.gmra.mrb[0].mxu0 %v382
        %v662 = vpop.f32.mrb[0].mxu0
        %v663 = vadd.f32 0.0, %v662
        %v664 = vpop.f32.mrb[0].mxu0
        %v665 = vadd.f32 0.0, %v664
        %666 = vmatprep.mubr.f32.mxu0 0.0
        %667 = vmatmul.mubr.f32.gmra.mrb[0].mxu0 %v383
        %v668 = vpop.f32.mrb[0].mxu0
        %v669 = vadd.f32 0.0, %v668
        %v670 = vpop.f32.mrb[0].mxu0
        %v671 = vadd.f32 0.0, %v670
        %672 = vdwg.mxu0
        %v673 = vadd.f32 %v288, %v483
        %v674 = vadd.f32 %v289, %v485
        %v675 = vadd.f32 %v290, %v489
        %v676 = vadd.f32 %v291, %v491
        %v677 = vadd.f32 %v292, %v495
        %v678 = vadd.f32 %v293, %v497
        %v679 = vadd.f32 %v294, %v501
        %v680 = vadd.f32 %v295, %v503
        %v681 = vadd.f32 %v296, %v507
        %v682 = vadd.f32 %v297, %v509
        %v683 = vadd.f32 %v298, %v513
        %v684 = vadd.f32 %v299, %v515
        %v685 = vadd.f32 %v300, %v519
        %v686 = vadd.f32 %v301, %v521
        %v687 = vadd.f32 %v302, %v525
        %v688 = vadd.f32 %v303, %v527
        %v689 = vadd.f32 %v304, %v531
        %v690 = vadd.f32 %v305, %v533
        %v691 = vadd.f32 %v306, %v537
        %v692 = vadd.f32 %v307, %v539
        %v693 = vadd.f32 %v308, %v543
        %v694 = vadd.f32 %v309, %v545
        %v695 = vadd.f32 %v310, %v549
        %v696 = vadd.f32 %v311, %v551
        %v697 = vadd.f32 %v312, %v555
        %v698 = vadd.f32 %v313, %v557
        %v699 = vadd.f32 %v314, %v561
        %v700 = vadd.f32 %v315, %v563
        %v701 = vadd.f32 %v316, %v567
        %v702 = vadd.f32 %v317, %v569
        %v703 = vadd.f32 %v318, %v573
        %v704 = vadd.f32 %v319, %v575
        %v705 = vadd.f32 %v320, %v579
        %v706 = vadd.f32 %v321, %v581
        %v707 = vadd.f32 %v322, %v585
        %v708 = vadd.f32 %v323, %v587
        %v709 = vadd.f32 %v324, %v591
        %v710 = vadd.f32 %v325, %v593
        %v711 = vadd.f32 %v326, %v597
        %v712 = vadd.f32 %v327, %v599
        %v713 = vadd.f32 %v328, %v603
        %v714 = vadd.f32 %v329, %v605
        %v715 = vadd.f32 %v330, %v609
        %v716 = vadd.f32 %v331, %v611
        %v717 = vadd.f32 %v332, %v615
        %v718 = vadd.f32 %v333, %v617
        %v719 = vadd.f32 %v334, %v621
        %v720 = vadd.f32 %v335, %v623
        %v721 = vadd.f32 %v336, %v627
        %v722 = vadd.f32 %v337, %v629
        %v723 = vadd.f32 %v338, %v633
        %v724 = vadd.f32 %v339, %v635
        %v725 = vadd.f32 %v340, %v639
        %v726 = vadd.f32 %v341, %v641
        %v727 = vadd.f32 %v342, %v645
        %v728 = vadd.f32 %v343, %v647
        %v729 = vadd.f32 %v344, %v651
        %v730 = vadd.f32 %v345, %v653
        %v731 = vadd.f32 %v346, %v657
        %v732 = vadd.f32 %v347, %v659
        %v733 = vadd.f32 %v348, %v663
        %v734 = vadd.f32 %v349, %v665
        %v735 = vadd.f32 %v350, %v669
        %v736 = vadd.f32 %v351, %v671
        %737 = vst [vmem:[#allocation2] sm:$0xff] %v673
        %738 = vst [vmem:[#allocation2 + $0x8] sm:$0xff] %v674
        %739 = vst [vmem:[#allocation2 + $0x10] sm:$0xff] %v675
        %740 = vst [vmem:[#allocation2 + $0x18] sm:$0xff] %v676
        %741 = vst [vmem:[#allocation2 + $0x20] sm:$0xff] %v677
        %742 = vst [vmem:[#allocation2 + $0x28] sm:$0xff] %v678
        %743 = vst [vmem:[#allocation2 + $0x30] sm:$0xff] %v679
        %744 = vst [vmem:[#allocation2 + $0x38] sm:$0xff] %v680
        %745 = vst [vmem:[#allocation2 + $0x40] sm:$0xff] %v681
        %746 = vst [vmem:[#allocation2 + $0x48] sm:$0xff] %v682
        %747 = vst [vmem:[#allocation2 + $0x50] sm:$0xff] %v683
        %748 = vst [vmem:[#allocation2 + $0x58] sm:$0xff] %v684
        %749 = vst [vmem:[#allocation2 + $0x60] sm:$0xff] %v685
        %750 = vst [vmem:[#allocation2 + $0x68] sm:$0xff] %v686
        %751 = vst [vmem:[#allocation2 + $0x70] sm:$0xff] %v687
        %752 = vst [vmem:[#allocation2 + $0x78] sm:$0xff] %v688
        %753 = vst [vmem:[#allocation2 + $0x80] sm:$0xff] %v689
        %754 = vst [vmem:[#allocation2 + $0x88] sm:$0xff] %v690
        %755 = vst [vmem:[#allocation2 + $0x90] sm:$0xff] %v691
        %756 = vst [vmem:[#allocation2 + $0x98] sm:$0xff] %v692
        %757 = vst [vmem:[#allocation2 + $0xa0] sm:$0xff] %v693
        %758 = vst [vmem:[#allocation2 + $0xa8] sm:$0xff] %v694
        %759 = vst [vmem:[#allocation2 + $0xb0] sm:$0xff] %v695
        %760 = vst [vmem:[#allocation2 + $0xb8] sm:$0xff] %v696
        %761 = vst [vmem:[#allocation2 + $0xc0] sm:$0xff] %v697
        %762 = vst [vmem:[#allocation2 + $0xc8] sm:$0xff] %v698
        %763 = vst [vmem:[#allocation2 + $0xd0] sm:$0xff] %v699
        %764 = vst [vmem:[#allocation2 + $0xd8] sm:$0xff] %v700
        %765 = vst [vmem:[#allocation2 + $0xe0] sm:$0xff] %v701
        %766 = vst [vmem:[#allocation2 + $0xe8] sm:$0xff] %v702
        %767 = vst [vmem:[#allocation2 + $0xf0] sm:$0xff] %v703
        %768 = vst [vmem:[#allocation2 + $0xf8] sm:$0xff] %v704
        %769 = vst [vmem:[#allocation2 + $0x100] sm:$0xff] %v705
        %770 = vst [vmem:[#allocation2 + $0x108] sm:$0xff] %v706
        %771 = vst [vmem:[#allocation2 + $0x110] sm:$0xff] %v707
        %772 = vst [vmem:[#allocation2 + $0x118] sm:$0xff] %v708
        %773 = vst [vmem:[#allocation2 + $0x120] sm:$0xff] %v709
        %774 = vst [vmem:[#allocation2 + $0x128] sm:$0xff] %v710
        %775 = vst [vmem:[#allocation2 + $0x130] sm:$0xff] %v711
        %776 = vst [vmem:[#allocation2 + $0x138] sm:$0xff] %v712
        %777 = vst [vmem:[#allocation2 + $0x140] sm:$0xff] %v713
        %778 = vst [vmem:[#allocation2 + $0x148] sm:$0xff] %v714
        %779 = vst [vmem:[#allocation2 + $0x150] sm:$0xff] %v715
        %780 = vst [vmem:[#allocation2 + $0x158] sm:$0xff] %v716
        %781 = vst [vmem:[#allocation2 + $0x160] sm:$0xff] %v717
        %782 = vst [vmem:[#allocation2 + $0x168] sm:$0xff] %v718
        %783 = vst [vmem:[#allocation2 + $0x170] sm:$0xff] %v719
        %784 = vst [vmem:[#allocation2 + $0x178] sm:$0xff] %v720
        %785 = vst [vmem:[#allocation2 + $0x180] sm:$0xff] %v721
        %786 = vst [vmem:[#allocation2 + $0x188] sm:$0xff] %v722
        %787 = vst [vmem:[#allocation2 + $0x190] sm:$0xff] %v723
        %788 = vst [vmem:[#allocation2 + $0x198] sm:$0xff] %v724
        %789 = vst [vmem:[#allocation2 + $0x1a0] sm:$0xff] %v725
        %790 = vst [vmem:[#allocation2 + $0x1a8] sm:$0xff] %v726
        %791 = vst [vmem:[#allocation2 + $0x1b0] sm:$0xff] %v727
        %792 = vst [vmem:[#allocation2 + $0x1b8] sm:$0xff] %v728
        %793 = vst [vmem:[#allocation2 + $0x1c0] sm:$0xff] %v729
        %794 = vst [vmem:[#allocation2 + $0x1c8] sm:$0xff] %v730
        %795 = vst [vmem:[#allocation2 + $0x1d0] sm:$0xff] %v731
        %796 = vst [vmem:[#allocation2 + $0x1d8] sm:$0xff] %v732
        %797 = vst [vmem:[#allocation2 + $0x1e0] sm:$0xff] %v733
        %798 = vst [vmem:[#allocation2 + $0x1e8] sm:$0xff] %v734
        %799 = vst [vmem:[#allocation2 + $0x1f0] sm:$0xff] %v735
        %800 = vst [vmem:[#allocation2 + $0x1f8] sm:$0xff] %v736
        // Predicated region
        $region37: #{main_net_forward.2} parent=27 // pred_check
          %p801 = pneg %p220
        $region38: #{main_net_forward.2} parent=27 // pred_check_branch
          %803 = sbr.rel (%p801) target = $region40
        $region39: #{main_net_forward.2} parent=27 // pred_region
          %v804 = vld [vmem:[#allocation2] sm:$0xff]
          %v805 = vld [vmem:[#allocation2 + $0x8] sm:$0xff]
          %v806 = vld [vmem:[#allocation2 + $0x10] sm:$0xff]
          %v807 = vld [vmem:[#allocation2 + $0x18] sm:$0xff]
          %v808 = vld [vmem:[#allocation2 + $0x20] sm:$0xff]
          %v809 = vld [vmem:[#allocation2 + $0x28] sm:$0xff]
          %v810 = vld [vmem:[#allocation2 + $0x30] sm:$0xff]
          %v811 = vld [vmem:[#allocation2 + $0x38] sm:$0xff]
          %v812 = vld [vmem:[#allocation2 + $0x40] sm:$0xff]
          %v813 = vld [vmem:[#allocation2 + $0x48] sm:$0xff]
          %v814 = vld [vmem:[#allocation2 + $0x50] sm:$0xff]
          %v815 = vld [vmem:[#allocation2 + $0x58] sm:$0xff]
          %v816 = vld [vmem:[#allocation2 + $0x60] sm:$0xff]
          %v817 = vld [vmem:[#allocation2 + $0x68] sm:$0xff]
          %v818 = vld [vmem:[#allocation2 + $0x70] sm:$0xff]
          %v819 = vld [vmem:[#allocation2 + $0x78] sm:$0xff]
          %v820 = vld [vmem:[#allocation2 + $0x80] sm:$0xff]
          %v821 = vld [vmem:[#allocation2 + $0x88] sm:$0xff]
          %v822 = vld [vmem:[#allocation2 + $0x90] sm:$0xff]
          %v823 = vld [vmem:[#allocation2 + $0x98] sm:$0xff]
          %v824 = vld [vmem:[#allocation2 + $0xa0] sm:$0xff]
          %v825 = vld [vmem:[#allocation2 + $0xa8] sm:$0xff]
          %v826 = vld [vmem:[#allocation2 + $0xb0] sm:$0xff]
          %v827 = vld [vmem:[#allocation2 + $0xb8] sm:$0xff]
          %v828 = vld [vmem:[#allocation2 + $0xc0] sm:$0xff]
          %v829 = vld [vmem:[#allocation2 + $0xc8] sm:$0xff]
          %v830 = vld [vmem:[#allocation2 + $0xd0] sm:$0xff]
          %v831 = vld [vmem:[#allocation2 + $0xd8] sm:$0xff]
          %v832 = vld [vmem:[#allocation2 + $0xe0] sm:$0xff]
          %v833 = vld [vmem:[#allocation2 + $0xe8] sm:$0xff]
          %v834 = vld [vmem:[#allocation2 + $0xf0] sm:$0xff]
          %v835 = vld [vmem:[#allocation2 + $0xf8] sm:$0xff]
          %v836 = vld [vmem:[#allocation2 + $0x100] sm:$0xff]
          %v837 = vld [vmem:[#allocation2 + $0x108] sm:$0xff]
          %v838 = vld [vmem:[#allocation2 + $0x110] sm:$0xff]
          %v839 = vld [vmem:[#allocation2 + $0x118] sm:$0xff]
          %v840 = vld [vmem:[#allocation2 + $0x120] sm:$0xff]
          %v841 = vld [vmem:[#allocation2 + $0x128] sm:$0xff]
          %v842 = vld [vmem:[#allocation2 + $0x130] sm:$0xff]
          %v843 = vld [vmem:[#allocation2 + $0x138] sm:$0xff]
          %v844 = vld [vmem:[#allocation2 + $0x140] sm:$0xff]
          %v845 = vld [vmem:[#allocation2 + $0x148] sm:$0xff]
          %v846 = vld [vmem:[#allocation2 + $0x150] sm:$0xff]
          %v847 = vld [vmem:[#allocation2 + $0x158] sm:$0xff]
          %v848 = vld [vmem:[#allocation2 + $0x160] sm:$0xff]
          %v849 = vld [vmem:[#allocation2 + $0x168] sm:$0xff]
          %v850 = vld [vmem:[#allocation2 + $0x170] sm:$0xff]
          %v851 = vld [vmem:[#allocation2 + $0x178] sm:$0xff]
          %v852 = vld [vmem:[#allocation2 + $0x180] sm:$0xff]
          %v853 = vld [vmem:[#allocation2 + $0x188] sm:$0xff]
          %v854 = vld [vmem:[#allocation2 + $0x190] sm:$0xff]
          %v855 = vld [vmem:[#allocation2 + $0x198] sm:$0xff]
          %v856 = vld [vmem:[#allocation2 + $0x1a0] sm:$0xff]
          %v857 = vld [vmem:[#allocation2 + $0x1a8] sm:$0xff]
          %v858 = vld [vmem:[#allocation2 + $0x1b0] sm:$0xff]
          %v859 = vld [vmem:[#allocation2 + $0x1b8] sm:$0xff]
          %v860 = vld [vmem:[#allocation2 + $0x1c0] sm:$0xff]
          %v861 = vld [vmem:[#allocation2 + $0x1c8] sm:$0xff]
          %v862 = vld [vmem:[#allocation2 + $0x1d0] sm:$0xff]
          %v863 = vld [vmem:[#allocation2 + $0x1d8] sm:$0xff]
          %v864 = vld [vmem:[#allocation2 + $0x1e0] sm:$0xff]
          %v865 = vld [vmem:[#allocation2 + $0x1e8] sm:$0xff]
          %v866 = vld [vmem:[#allocation2 + $0x1f0] sm:$0xff]
          %v867 = vld [vmem:[#allocation2 + $0x1f8] sm:$0xff]
          %868 = vst [vmem:[%s217] sm:$0xff] %v804
          %869 = vst [vmem:[%s217 + $0x8] sm:$0xff] %v805
          %870 = vst [vmem:[%s217 + $0x10] sm:$0xff] %v806
          %871 = vst [vmem:[%s217 + $0x18] sm:$0xff] %v807
          %872 = vst [vmem:[%s217 + $0x20] sm:$0xff] %v808
          %873 = vst [vmem:[%s217 + $0x28] sm:$0xff] %v809
          %874 = vst [vmem:[%s217 + $0x30] sm:$0xff] %v810
          %875 = vst [vmem:[%s217 + $0x38] sm:$0xff] %v811
          %876 = vst [vmem:[%s217 + $0x40] sm:$0xff] %v812
          %877 = vst [vmem:[%s217 + $0x48] sm:$0xff] %v813
          %878 = vst [vmem:[%s217 + $0x50] sm:$0xff] %v814
          %879 = vst [vmem:[%s217 + $0x58] sm:$0xff] %v815
          %880 = vst [vmem:[%s217 + $0x60] sm:$0xff] %v816
          %881 = vst [vmem:[%s217 + $0x68] sm:$0xff] %v817
          %882 = vst [vmem:[%s217 + $0x70] sm:$0xff] %v818
          %883 = vst [vmem:[%s217 + $0x78] sm:$0xff] %v819
          %884 = vst [vmem:[%s217 + $0x80] sm:$0xff] %v820
          %885 = vst [vmem:[%s217 + $0x88] sm:$0xff] %v821
          %886 = vst [vmem:[%s217 + $0x90] sm:$0xff] %v822
          %887 = vst [vmem:[%s217 + $0x98] sm:$0xff] %v823
          %888 = vst [vmem:[%s217 + $0xa0] sm:$0xff] %v824
          %889 = vst [vmem:[%s217 + $0xa8] sm:$0xff] %v825
          %890 = vst [vmem:[%s217 + $0xb0] sm:$0xff] %v826
          %891 = vst [vmem:[%s217 + $0xb8] sm:$0xff] %v827
          %892 = vst [vmem:[%s217 + $0xc0] sm:$0xff] %v828
          %893 = vst [vmem:[%s217 + $0xc8] sm:$0xff] %v829
          %894 = vst [vmem:[%s217 + $0xd0] sm:$0xff] %v830
          %895 = vst [vmem:[%s217 + $0xd8] sm:$0xff] %v831
          %896 = vst [vmem:[%s217 + $0xe0] sm:$0xff] %v832
          %897 = vst [vmem:[%s217 + $0xe8] sm:$0xff] %v833
          %898 = vst [vmem:[%s217 + $0xf0] sm:$0xff] %v834
          %899 = vst [vmem:[%s217 + $0xf8] sm:$0xff] %v835
          %900 = vst [vmem:[%s217 + $0x100] sm:$0xff] %v836
          %901 = vst [vmem:[%s217 + $0x108] sm:$0xff] %v837
          %902 = vst [vmem:[%s217 + $0x110] sm:$0xff] %v838
          %903 = vst [vmem:[%s217 + $0x118] sm:$0xff] %v839
          %904 = vst [vmem:[%s217 + $0x120] sm:$0xff] %v840
          %905 = vst [vmem:[%s217 + $0x128] sm:$0xff] %v841
          %906 = vst [vmem:[%s217 + $0x130] sm:$0xff] %v842
          %907 = vst [vmem:[%s217 + $0x138] sm:$0xff] %v843
          %908 = vst [vmem:[%s217 + $0x140] sm:$0xff] %v844
          %909 = vst [vmem:[%s217 + $0x148] sm:$0xff] %v845
          %910 = vst [vmem:[%s217 + $0x150] sm:$0xff] %v846
          %911 = vst [vmem:[%s217 + $0x158] sm:$0xff] %v847
          %912 = vst [vmem:[%s217 + $0x160] sm:$0xff] %v848
          %913 = vst [vmem:[%s217 + $0x168] sm:$0xff] %v849
          %914 = vst [vmem:[%s217 + $0x170] sm:$0xff] %v850
          %915 = vst [vmem:[%s217 + $0x178] sm:$0xff] %v851
          %916 = vst [vmem:[%s217 + $0x180] sm:$0xff] %v852
          %917 = vst [vmem:[%s217 + $0x188] sm:$0xff] %v853
          %918 = vst [vmem:[%s217 + $0x190] sm:$0xff] %v854
          %919 = vst [vmem:[%s217 + $0x198] sm:$0xff] %v855
          %920 = vst [vmem:[%s217 + $0x1a0] sm:$0xff] %v856
          %921 = vst [vmem:[%s217 + $0x1a8] sm:$0xff] %v857
          %922 = vst [vmem:[%s217 + $0x1b0] sm:$0xff] %v858
          %923 = vst [vmem:[%s217 + $0x1b8] sm:$0xff] %v859
          %924 = vst [vmem:[%s217 + $0x1c0] sm:$0xff] %v860
          %925 = vst [vmem:[%s217 + $0x1c8] sm:$0xff] %v861
          %926 = vst [vmem:[%s217 + $0x1d0] sm:$0xff] %v862
          %927 = vst [vmem:[%s217 + $0x1d8] sm:$0xff] %v863
          %928 = vst [vmem:[%s217 + $0x1e0] sm:$0xff] %v864
          %929 = vst [vmem:[%s217 + $0x1e8] sm:$0xff] %v865
          %930 = vst [vmem:[%s217 + $0x1f0] sm:$0xff] %v866
          %931 = vst [vmem:[%s217 + $0x1f8] sm:$0xff] %v867
        $region40: #{main_net_forward.2} parent=27 // pred_fallthru
          _
        %s932 = smul.u32 32, %s19
        %s933 = smul.u32 2, %s20
        %p934 = scmp.lt.s32.totalorder %s932, 159
        %s935 = scalar_select %p934, %s932, 159
        %p936 = scmp.lt.s32.totalorder %s933, 1
        %s937 = scalar_select %p936, %s933, 1
        %s938 = smul.addr %s935, 2
        %s939 = sadd.s32 %s937, %s938
        %s940 = smul.addr %s939, 8
        %s941 = scalar_lea.vmem %s2, %s940
        // Predicated region
        $region41: #{main_net_forward.2} parent=27 // pred_check
          %p942 = pneg %p109
        $region42: #{main_net_forward.2} parent=27 // pred_check_branch
          %944 = sbr.rel (%p942) target = $region44
        $region43: #{main_net_forward.2} parent=27 // pred_region
          %s945 = smul.u32 32, %s19
          %s946 = smul.u32 2, %s20
        $region44: #{main_net_forward.2} parent=27 // pred_fallthru
          _
      $region28: #{main_net_forward.2} parent=5 // pred_fallthru
        _
      %p947 = scmp.le.s32.totalorder 2, %s9
      // Predicated region
      $region45: #{main_net_forward.2} parent=5 // pred_check
        %p948 = pneg %p947
      $region46: #{main_net_forward.2} parent=5 // pred_check_branch
        %950 = sbr.rel (%p948) target = $region48
      $region47: #{main_net_forward.2} parent=5 // pred_region
        %s951 = ssub.s32 %s9, 2
        // Predicated region
        $region49: #{main_net_forward.2} parent=47 // pred_check
          %p952 = pneg %p115
        $region50: #{main_net_forward.2} parent=47 // pred_check_branch
          %954 = sbr.rel (%p952) target = $region52
        $region51: #{main_net_forward.2} parent=47 // pred_region
          %s955 = smul.u32 32, %s22
          %s956 = smul.u32 2, %s23
          %p957 = scmp.lt.s32.totalorder %s955, 159
          %s958 = scalar_select %p957, %s955, 159
          %p959 = scmp.lt.s32.totalorder %s956, 1
          %s960 = scalar_select %p959, %s956, 1
          %s961 = smul.addr %s958, 2
          %s962 = sadd.s32 %s960, %s961
          %s963 = smul.addr %s962, 8
          %s964 = scalar_lea.vmem %s2, %s963
        $region52: #{main_net_forward.2} parent=47 // pred_fallthru
          _
      $region48: #{main_net_forward.2} parent=5 // pred_fallthru
        _
    $region6: #{main_net_forward.2} parent=1 // loop_footer
      %s13 = sadd.s32 1, %s9
    $region7: #{main_net_forward.2} parent=1 // loop_footer_branch
      %8 = sbr.rel target = $region3
    $region8: #{main_net_forward.2} parent=1 // loop_exit
      _
    %965 = vsyncpa [#allocation4], 1
    %s966 = scalar_lea.sflag [#allocation4], 1
    %967 = vsyncpa %s966, 1

// kernel: main_net_forward.3
$region0: #{main_net_forward.3}
  #allocation0 [shape = 'u32[]', space=smem, size = 0x4, offset = 0x4, fixed_abs, tag = 'smem constant byte address 0x4 - core index']
  #allocation1 [shape = 'u32[144,128]{1,0:T(1,128)}', space=vmem, size = 0x12000, scoped, tag = 'internal scratch']
  #allocation2 [shape = 'f32[128,256]{1,0:T(8,128)}', space=vmem, size = 0x20000, scoped, tag = 'scratch operand']
  #allocation3 [shape = 'f32[128,256]{1,0:T(8,128)}', space=vmem, size = 0x20000, scoped, tag = 'scratch operand']
  #allocation4 [shape = 'f32[128,256]{1,0:T(8,128)}', space=vmem, size = 0x20000, scoped, tag = 'scratch operand']
  #allocation5 [shape = 'f32[128,256]{1,0:T(8,128)}', space=vmem, size = 0x20000, scoped, tag = 'scratch operand']
  #allocation6 [shape = 'f32[128,128]{1,0:T(8,128)}', space=vmem, size = 0x10000, scoped, tag = 'scratch operand']
  #allocation7 [shape = 'f32[128,128]{1,0:T(8,128)}', space=vmem, size = 0x10000, scoped, tag = 'scratch operand']
  %s0 = inlined_call_operand.vmem [shape: f32[10,128,256], index: 0, kind: input, shape index: {}]
  %s1 = inlined_call_operand.vmem [shape: f32[256,256], index: 1, kind: input, shape index: {}]
  %s2 = inlined_call_operand.vmem [shape: f32[256,128], index: 2, kind: input, shape index: {}]
  %s3 = inlined_call_operand.vmem [shape: f32[1,256], index: 3, kind: input, shape index: {}]
  %s4 = inlined_call_operand.vmem [shape: f32[1,256], index: 4, kind: input, shape index: {}]
  %s5 = inlined_call_operand.vmem [shape: f32[128,256], index: 5, kind: output, shape index: {0}]
  %s6 = inlined_call_operand.vmem [shape: f32[128,256], index: 6, kind: output, shape index: {1}]
  %s7 = inlined_call_operand.vmem [shape: f32[128,128], index: 7, kind: output, shape index: {2}]
  %8 = xla_tuple %s5, %s6, %s7
  %s9 = sld [smem:[#allocation0]]
  $region77: #{main_net_forward.3} parent=0
    _
  %s11 = ssub.s32 1, %s9
  %s12 = scalar_select 0, %s11, %s9
  loop: start=0, step=1, limit=12
  $region2: #{main_net_forward.3} parent=0 // loop_pre_header
    _
  $region3: #{main_net_forward.3} parent=0 // loop_header
    %s14 = sphi 0, %s18
    %p15 = scmp.ge.s32.totalorder %s14, 12
    %s21 = sphi 0, %s33
    %s22 = sphi 0, %s29
    %s23 = sphi 0, %s21
    %s24 = sphi 0, %s22
    %s25 = sphi 0, %s23
    %s26 = sphi 0, %s24
    %s38 = sphi 0, %s40
    %s41 = sphi 0, %s38
    %s42 = sphi 0, %s41
    %s58 = sphi 0, %s42
    %s62 = sphi 0, %s62
    %s64 = sphi 0, %s62
    %s65 = sphi 0, %s64
    %s79 = sphi 0, %s65
    %s83 = sphi 0, %s83
    %s85 = sphi 0, %s83
    %s86 = sphi 0, %s85
    %s100 = sphi 0, %s86
    %s104 = sphi 0, %s104
    %s106 = sphi 0, %s104
    %s107 = sphi 0, %s106
    %s121 = sphi 0, %s107
    %s125 = sphi 0, %s125
    %s127 = sphi 0, %s125
    %s128 = sphi 0, %s127
    %s142 = sphi 0, %s128
    %s148 = sphi 0, %s150
    %s151 = sphi 0, %s148
    %s152 = sphi 0, %s151
    %s168 = sphi 0, %s152
    %s174 = sphi 0, %s176
    %s177 = sphi 0, %s174
    %s178 = sphi 0, %s177
    %s194 = sphi 0, %s178
    %s200 = sphi 0, %s202
    %s203 = sphi 0, %s200
    %s204 = sphi 0, %s203
    %s220 = sphi 0, %s204
  $region4: #{main_net_forward.3} parent=0 // loop_header_branch
    %17 = sbr.rel (%p15) target = $region8
  $region5: #{main_net_forward.3} parent=0 // loop_body
    %s19 = ssub.s32 %s14, 1
    %s20 = ssub.s32 %s14, 2
    %s27 = sadd.s32 1, %s22
    %p28 = scmp.ge.s32.totalorder %s27, 10
    %s29 = scalar_select %p28, 0, %s27
    %s30 = sadd.s32 1, %s21
    %s31 = scalar_select %p28, %s30, %s21
    %p32 = scmp.ge.s32.totalorder %s31, 1
    %s33 = scalar_select %p32, 0, %s31
    %s34 = ssub.s32 %s22, %s29
    %s35 = ssub.s32 %s21, %s33
    %s36 = sor.u32 %s34, %s35
    %p37 = scmp.eq.s32.totalorder %s36, 0
    %s39 = sadd.s32 %s38, 1
    %s40 = scalar_select %p37, %s38, %s39
    %p43 = pneg %p37
    %p44 = scmp.eq.s32.totalorder %s14, 9
    %p45 = por %p43, %p44
    %p46 = scmp.ne.s32.totalorder %s38, %s41
    %p47 = scmp.eq.s32.totalorder %s14, 0
    %p48 = por %p46, %p47
    %p49 = scmp.ne.s32.totalorder %s38, %s41
    %p50 = scmp.eq.s32.totalorder %s19, 9
    %p51 = por %p49, %p50
    %p52 = scmp.ne.s32.totalorder %s41, %s42
    %p53 = scmp.eq.s32.totalorder %s19, 0
    %p54 = por %p52, %p53
    %p55 = scmp.ne.s32.totalorder %s41, %s42
    %p56 = scmp.eq.s32.totalorder %s20, 9
    %p57 = por %p55, %p56
    %p59 = scmp.ne.s32.totalorder %s42, %s58
    %p60 = scmp.eq.s32.totalorder %s20, 0
    %p61 = por %p59, %p60
    %s63 = sadd.s32 %s62, 1
    %p66 = scmp.eq.s32.totalorder %s14, 9
    %p67 = scmp.ne.s32.totalorder %s62, %s64
    %p68 = scmp.eq.s32.totalorder %s14, 0
    %p69 = por %p67, %p68
    %p70 = scmp.ne.s32.totalorder %s62, %s64
    %p71 = scmp.eq.s32.totalorder %s19, 9
    %p72 = por %p70, %p71
    %p73 = scmp.ne.s32.totalorder %s64, %s65
    %p74 = scmp.eq.s32.totalorder %s19, 0
    %p75 = por %p73, %p74
    %p76 = scmp.ne.s32.totalorder %s64, %s65
    %p77 = scmp.eq.s32.totalorder %s20, 9
    %p78 = por %p76, %p77
    %p80 = scmp.ne.s32.totalorder %s65, %s79
    %p81 = scmp.eq.s32.totalorder %s20, 0
    %p82 = por %p80, %p81
    %s84 = sadd.s32 %s83, 1
    %p87 = scmp.eq.s32.totalorder %s14, 9
    %p88 = scmp.ne.s32.totalorder %s83, %s85
    %p89 = scmp.eq.s32.totalorder %s14, 0
    %p90 = por %p88, %p89
    %p91 = scmp.ne.s32.totalorder %s83, %s85
    %p92 = scmp.eq.s32.totalorder %s19, 9
    %p93 = por %p91, %p92
    %p94 = scmp.ne.s32.totalorder %s85, %s86
    %p95 = scmp.eq.s32.totalorder %s19, 0
    %p96 = por %p94, %p95
    %p97 = scmp.ne.s32.totalorder %s85, %s86
    %p98 = scmp.eq.s32.totalorder %s20, 9
    %p99 = por %p97, %p98
    %p101 = scmp.ne.s32.totalorder %s86, %s100
    %p102 = scmp.eq.s32.totalorder %s20, 0
    %p103 = por %p101, %p102
    %s105 = sadd.s32 %s104, 1
    %p108 = scmp.eq.s32.totalorder %s14, 9
    %p109 = scmp.ne.s32.totalorder %s104, %s106
    %p110 = scmp.eq.s32.totalorder %s14, 0
    %p111 = por %p109, %p110
    %p112 = scmp.ne.s32.totalorder %s104, %s106
    %p113 = scmp.eq.s32.totalorder %s19, 9
    %p114 = por %p112, %p113
    %p115 = scmp.ne.s32.totalorder %s106, %s107
    %p116 = scmp.eq.s32.totalorder %s19, 0
    %p117 = por %p115, %p116
    %p118 = scmp.ne.s32.totalorder %s106, %s107
    %p119 = scmp.eq.s32.totalorder %s20, 9
    %p120 = por %p118, %p119
    %p122 = scmp.ne.s32.totalorder %s107, %s121
    %p123 = scmp.eq.s32.totalorder %s20, 0
    %p124 = por %p122, %p123
    %s126 = sadd.s32 %s125, 1
    %p129 = scmp.eq.s32.totalorder %s14, 9
    %p130 = scmp.ne.s32.totalorder %s125, %s127
    %p131 = scmp.eq.s32.totalorder %s14, 0
    %p132 = por %p130, %p131
    %p133 = scmp.ne.s32.totalorder %s125, %s127
    %p134 = scmp.eq.s32.totalorder %s19, 9
    %p135 = por %p133, %p134
    %p136 = scmp.ne.s32.totalorder %s127, %s128
    %p137 = scmp.eq.s32.totalorder %s19, 0
    %p138 = por %p136, %p137
    %p139 = scmp.ne.s32.totalorder %s127, %s128
    %p140 = scmp.eq.s32.totalorder %s20, 9
    %p141 = por %p139, %p140
    %p143 = scmp.ne.s32.totalorder %s128, %s142
    %p144 = scmp.eq.s32.totalorder %s20, 0
    %p145 = por %p143, %p144
    %s146 = ssub.s32 %s21, %s33
    %p147 = scmp.eq.s32.totalorder %s146, 0
    %s149 = sadd.s32 %s148, 1
    %s150 = scalar_select %p147, %s148, %s149
    %p153 = pneg %p147
    %p154 = scmp.eq.s32.totalorder %s14, 9
    %p155 = por %p153, %p154
    %p156 = scmp.ne.s32.totalorder %s148, %s151
    %p157 = scmp.eq.s32.totalorder %s14, 0
    %p158 = por %p156, %p157
    %p159 = scmp.ne.s32.totalorder %s148, %s151
    %p160 = scmp.eq.s32.totalorder %s19, 9
    %p161 = por %p159, %p160
    %p162 = scmp.ne.s32.totalorder %s151, %s152
    %p163 = scmp.eq.s32.totalorder %s19, 0
    %p164 = por %p162, %p163
    %p165 = scmp.ne.s32.totalorder %s151, %s152
    %p166 = scmp.eq.s32.totalorder %s20, 9
    %p167 = por %p165, %p166
    %p169 = scmp.ne.s32.totalorder %s152, %s168
    %p170 = scmp.eq.s32.totalorder %s20, 0
    %p171 = por %p169, %p170
    %s172 = ssub.s32 %s21, %s33
    %p173 = scmp.eq.s32.totalorder %s172, 0
    %s175 = sadd.s32 %s174, 1
    %s176 = scalar_select %p173, %s174, %s175
    %p179 = pneg %p173
    %p180 = scmp.eq.s32.totalorder %s14, 9
    %p181 = por %p179, %p180
    %p182 = scmp.ne.s32.totalorder %s174, %s177
    %p183 = scmp.eq.s32.totalorder %s14, 0
    %p184 = por %p182, %p183
    %p185 = scmp.ne.s32.totalorder %s174, %s177
    %p186 = scmp.eq.s32.totalorder %s19, 9
    %p187 = por %p185, %p186
    %p188 = scmp.ne.s32.totalorder %s177, %s178
    %p189 = scmp.eq.s32.totalorder %s19, 0
    %p190 = por %p188, %p189
    %p191 = scmp.ne.s32.totalorder %s177, %s178
    %p192 = scmp.eq.s32.totalorder %s20, 9
    %p193 = por %p191, %p192
    %p195 = scmp.ne.s32.totalorder %s178, %s194
    %p196 = scmp.eq.s32.totalorder %s20, 0
    %p197 = por %p195, %p196
    %s198 = ssub.s32 %s21, %s33
    %p199 = scmp.eq.s32.totalorder %s198, 0
    %s201 = sadd.s32 %s200, 1
    %s202 = scalar_select %p199, %s200, %s201
    %p205 = pneg %p199
    %p206 = scmp.eq.s32.totalorder %s14, 9
    %p207 = por %p205, %p206
    %p208 = scmp.ne.s32.totalorder %s200, %s203
    %p209 = scmp.eq.s32.totalorder %s14, 0
    %p210 = por %p208, %p209
    %p211 = scmp.ne.s32.totalorder %s200, %s203
    %p212 = scmp.eq.s32.totalorder %s19, 9
    %p213 = por %p211, %p212
    %p214 = scmp.ne.s32.totalorder %s203, %s204
    %p215 = scmp.eq.s32.totalorder %s19, 0
    %p216 = por %p214, %p215
    %p217 = scmp.ne.s32.totalorder %s203, %s204
    %p218 = scmp.eq.s32.totalorder %s20, 9
    %p219 = por %p217, %p218
    %p221 = scmp.ne.s32.totalorder %s204, %s220
    %p222 = scmp.eq.s32.totalorder %s20, 0
    %p223 = por %p221, %p222
    %p224 = scmp.le.s32.totalorder 1, %s14
    %p225 = scmp.lt.s32.totalorder %s14, 11
    %p226 = pnand %p224, %p225
    %p227 = pneg %p226
    // Predicated region
    $region9: #{main_net_forward.3} parent=5 // pred_check
      _
    $region10: #{main_net_forward.3} parent=5 // pred_check_branch
      %229 = sbr.rel (%p226) target = $region12
    $region11: #{main_net_forward.3} parent=5 // pred_region
      %s230 = ssub.s32 %s14, 1
      // Predicated region
      $region13: #{main_net_forward.3} parent=11 // pred_check
        %p231 = pneg %p75
      $region14: #{main_net_forward.3} parent=11 // pred_check_branch
        %233 = sbr.rel (%p231) target = $region16
      $region15: #{main_net_forward.3} parent=11 // pred_region
        _
      $region16: #{main_net_forward.3} parent=11 // pred_fallthru
        _
      // Predicated region
      $region17: #{main_net_forward.3} parent=11 // pred_check
        %p234 = pneg %p96
      $region18: #{main_net_forward.3} parent=11 // pred_check_branch
        %236 = sbr.rel (%p234) target = $region20
      $region19: #{main_net_forward.3} parent=11 // pred_region
        _
      $region20: #{main_net_forward.3} parent=11 // pred_fallthru
        _
      // Predicated region
      $region21: #{main_net_forward.3} parent=11 // pred_check
        %p237 = pneg %p117
      $region22: #{main_net_forward.3} parent=11 // pred_check_branch
        %239 = sbr.rel (%p237) target = $region24
      $region23: #{main_net_forward.3} parent=11 // pred_region
        _
      $region24: #{main_net_forward.3} parent=11 // pred_fallthru
        _
      // Predicated region
      $region25: #{main_net_forward.3} parent=11 // pred_check
        %p240 = pneg %p138
      $region26: #{main_net_forward.3} parent=11 // pred_check_branch
        %242 = sbr.rel (%p240) target = $region28
      $region27: #{main_net_forward.3} parent=11 // pred_region
        _
      $region28: #{main_net_forward.3} parent=11 // pred_fallthru
        _
    $region12: #{main_net_forward.3} parent=5 // pred_fallthru
      _
    %p243 = scmp.lt.s32.totalorder %s14, 10
    // Predicated region
    $region29: #{main_net_forward.3} parent=5 // pred_check
      %p244 = pneg %p243
    $region30: #{main_net_forward.3} parent=5 // pred_check_branch
      %246 = sbr.rel (%p244) target = $region32
    $region31: #{main_net_forward.3} parent=5 // pred_region
      // Predicated region
      $region33: #{main_net_forward.3} parent=31 // pred_check
        %p247 = pneg %p48
      $region34: #{main_net_forward.3} parent=31 // pred_check_branch
        %249 = sbr.rel (%p247) target = $region36
      $region35: #{main_net_forward.3} parent=31 // pred_region
        %s250 = smul.u32 16, %s21
        %p251 = scmp.lt.s32.totalorder %s22, 9
        %s252 = scalar_select %p251, %s22, 9
        %p253 = scmp.lt.s32.totalorder %s250, 15
        %s254 = scalar_select %p253, %s250, 15
        %s255 = smul.addr %s254, 2
        %s256 = smul.addr %s252, 32
        %s257 = sadd.s32 %s255, %s256
        %s258 = smul.addr %s257, 8
        %s259 = scalar_lea.vmem %s0, %s258
        %s260 = smul.u32 16, %s21
      $region36: #{main_net_forward.3} parent=31 // pred_fallthru
        _
    $region32: #{main_net_forward.3} parent=5 // pred_fallthru
      _
    %p261 = scmp.le.s32.totalorder 1, %s14
    %p262 = scmp.lt.s32.totalorder %s14, 11
    %p263 = pnand %p261, %p262
    %p264 = pneg %p263
    // Predicated region
    $region37: #{main_net_forward.3} parent=5 // pred_check
      _
    $region38: #{main_net_forward.3} parent=5 // pred_check_branch
      %266 = sbr.rel (%p263) target = $region40
    $region39: #{main_net_forward.3} parent=5 // pred_region
      %s267 = ssub.s32 %s14, 1
      %s268 = smul.u32 16, %s23
      %p269 = scmp.lt.s32.totalorder %s24, 9
      %s270 = scalar_select %p269, %s24, 9
      %p271 = scmp.lt.s32.totalorder %s268, 15
      %s272 = scalar_select %p271, %s268, 15
      %s273 = smul.addr %s272, 2
      %s274 = smul.addr %s270, 32
      %s275 = sadd.s32 %s273, %s274
      %s276 = smul.addr %s275, 8
      %s277 = scalar_lea.vmem %s0, %s276
      %p278 = pneg %p54
      %p279 = pneg %p51
      %p280 = pneg %p75
      %p281 = pneg %p72
      %p282 = pneg %p96
      %p283 = pneg %p93
      %p284 = pneg %p117
      %p285 = pneg %p114
      %p286 = pneg %p138
      %p287 = pneg %p135
      %p288 = pneg %p164
      %p289 = pneg %p161
      %s290 = smul.u32 16, %s23
      %p291 = scmp.lt.s32.totalorder %s290, 15
      %s292 = scalar_select %p291, %s290, 15
      %s293 = smul.addr %s292, 2
      %s294 = smul.addr %s293, 8
      %s295 = scalar_lea.vmem %s5, %s294
      %p296 = pneg %p190
      %p297 = pneg %p187
      %s298 = smul.u32 16, %s23
      %p299 = scmp.lt.s32.totalorder %s298, 15
      %s300 = scalar_select %p299, %s298, 15
      %s301 = smul.addr %s300, 2
      %s302 = smul.addr %s301, 8
      %s303 = scalar_lea.vmem %s6, %s302
      %p304 = pneg %p216
      %p305 = pneg %p213
      %s306 = smul.u32 16, %s23
      %p307 = scmp.lt.s32.totalorder %s306, 15
      %s308 = scalar_select %p307, %s306, 15
      %s309 = smul.addr %s308, 8
      %s310 = scalar_lea.vmem %s7, %s309
      %s311 = smul.u32 16, %s23
      %p312 = scmp.lt.s32.totalorder %s24, 9
      %s313 = scalar_select %p312, %s24, 9
      %p314 = scmp.lt.s32.totalorder %s311, 15
      %s315 = scalar_select %p314, %s311, 15
      %s316 = smul.addr %s315, 2
      %s317 = smul.addr %s313, 32
      %s318 = sadd.s32 %s316, %s317
      %s319 = smul.addr %s318, 8
      %s320 = scalar_lea.vmem %s0, %s319
      %s321 = smul.u32 16, %s23
      %s322 = smul.u32 16, %s23
      %p323 = scmp.lt.s32.totalorder %s322, 15
      %s324 = scalar_select %p323, %s322, 15
      %s325 = smul.addr %s324, 2
      %s326 = smul.addr %s325, 8
      %s327 = scalar_lea.vmem %s5, %s326
      %s328 = smul.u32 16, %s23
      %s329 = smul.u32 16, %s23
      %p330 = scmp.lt.s32.totalorder %s329, 15
      %s331 = scalar_select %p330, %s329, 15
      %s332 = smul.addr %s331, 2
      %s333 = smul.addr %s332, 8
      %s334 = scalar_lea.vmem %s6, %s333
      %s335 = smul.u32 16, %s23
      %s336 = smul.u32 16, %s23
      %p337 = scmp.lt.s32.totalorder %s336, 15
      %s338 = scalar_select %p337, %s336, 15
      %s339 = smul.addr %s338, 8
      %s340 = scalar_lea.vmem %s7, %s339
      %s341 = smul.u32 16, %s23
      %p342 = scmp.eq.s32.totalorder %s24, 0
      // Predicated region
      $region41: #{main_net_forward.3} parent=39 // pred_check
        %p343 = pneg %p342
      $region42: #{main_net_forward.3} parent=39 // pred_check_branch
        %345 = sbr.rel (%p343) target = $region44
      $region43: #{main_net_forward.3} parent=39 // pred_region
        %346 = vst [vmem:[#allocation2] sm:$0xff] 0.0
        %347 = vst [vmem:[#allocation2 + $0x8] sm:$0xff] 0.0
        %348 = vst [vmem:[#allocation2 + $0x10] sm:$0xff] 0.0
        %349 = vst [vmem:[#allocation2 + $0x18] sm:$0xff] 0.0
        %350 = vst [vmem:[#allocation2 + $0x20] sm:$0xff] 0.0
        %351 = vst [vmem:[#allocation2 + $0x28] sm:$0xff] 0.0
        %352 = vst [vmem:[#allocation2 + $0x30] sm:$0xff] 0.0
        %353 = vst [vmem:[#allocation2 + $0x38] sm:$0xff] 0.0
        %354 = vst [vmem:[#allocation2 + $0x40] sm:$0xff] 0.0
        %355 = vst [vmem:[#allocation2 + $0x48] sm:$0xff] 0.0
        %356 = vst [vmem:[#allocation2 + $0x50] sm:$0xff] 0.0
        %357 = vst [vmem:[#allocation2 + $0x58] sm:$0xff] 0.0
        %358 = vst [vmem:[#allocation2 + $0x60] sm:$0xff] 0.0
        %359 = vst [vmem:[#allocation2 + $0x68] sm:$0xff] 0.0
        %360 = vst [vmem:[#allocation2 + $0x70] sm:$0xff] 0.0
        %361 = vst [vmem:[#allocation2 + $0x78] sm:$0xff] 0.0
        %362 = vst [vmem:[#allocation2 + $0x80] sm:$0xff] 0.0
        %363 = vst [vmem:[#allocation2 + $0x88] sm:$0xff] 0.0
        %364 = vst [vmem:[#allocation2 + $0x90] sm:$0xff] 0.0
        %365 = vst [vmem:[#allocation2 + $0x98] sm:$0xff] 0.0
        %366 = vst [vmem:[#allocation2 + $0xa0] sm:$0xff] 0.0
        %367 = vst [vmem:[#allocation2 + $0xa8] sm:$0xff] 0.0
        %368 = vst [vmem:[#allocation2 + $0xb0] sm:$0xff] 0.0
        %369 = vst [vmem:[#allocation2 + $0xb8] sm:$0xff] 0.0
        %370 = vst [vmem:[#allocation2 + $0xc0] sm:$0xff] 0.0
        %371 = vst [vmem:[#allocation2 + $0xc8] sm:$0xff] 0.0
        %372 = vst [vmem:[#allocation2 + $0xd0] sm:$0xff] 0.0
        %373 = vst [vmem:[#allocation2 + $0xd8] sm:$0xff] 0.0
        %374 = vst [vmem:[#allocation2 + $0xe0] sm:$0xff] 0.0
        %375 = vst [vmem:[#allocation2 + $0xe8] sm:$0xff] 0.0
        %376 = vst [vmem:[#allocation2 + $0xf0] sm:$0xff] 0.0
        %377 = vst [vmem:[#allocation2 + $0xf8] sm:$0xff] 0.0
        %378 = vst [vmem:[#allocation3] sm:$0xff] 0.0
        %379 = vst [vmem:[#allocation3 + $0x8] sm:$0xff] 0.0
        %380 = vst [vmem:[#allocation3 + $0x10] sm:$0xff] 0.0
        %381 = vst [vmem:[#allocation3 + $0x18] sm:$0xff] 0.0
        %382 = vst [vmem:[#allocation3 + $0x20] sm:$0xff] 0.0
        %383 = vst [vmem:[#allocation3 + $0x28] sm:$0xff] 0.0
        %384 = vst [vmem:[#allocation3 + $0x30] sm:$0xff] 0.0
        %385 = vst [vmem:[#allocation3 + $0x38] sm:$0xff] 0.0
        %386 = vst [vmem:[#allocation3 + $0x40] sm:$0xff] 0.0
        %387 = vst [vmem:[#allocation3 + $0x48] sm:$0xff] 0.0
        %388 = vst [vmem:[#allocation3 + $0x50] sm:$0xff] 0.0
        %389 = vst [vmem:[#allocation3 + $0x58] sm:$0xff] 0.0
        %390 = vst [vmem:[#allocation3 + $0x60] sm:$0xff] 0.0
        %391 = vst [vmem:[#allocation3 + $0x68] sm:$0xff] 0.0
        %392 = vst [vmem:[#allocation3 + $0x70] sm:$0xff] 0.0
        %393 = vst [vmem:[#allocation3 + $0x78] sm:$0xff] 0.0
        %394 = vst [vmem:[#allocation3 + $0x80] sm:$0xff] 0.0
        %395 = vst [vmem:[#allocation3 + $0x88] sm:$0xff] 0.0
        %396 = vst [vmem:[#allocation3 + $0x90] sm:$0xff] 0.0
        %397 = vst [vmem:[#allocation3 + $0x98] sm:$0xff] 0.0
        %398 = vst [vmem:[#allocation3 + $0xa0] sm:$0xff] 0.0
        %399 = vst [vmem:[#allocation3 + $0xa8] sm:$0xff] 0.0
        %400 = vst [vmem:[#allocation3 + $0xb0] sm:$0xff] 0.0
        %401 = vst [vmem:[#allocation3 + $0xb8] sm:$0xff] 0.0
        %402 = vst [vmem:[#allocation3 + $0xc0] sm:$0xff] 0.0
        %403 = vst [vmem:[#allocation3 + $0xc8] sm:$0xff] 0.0
        %404 = vst [vmem:[#allocation3 + $0xd0] sm:$0xff] 0.0
        %405 = vst [vmem:[#allocation3 + $0xd8] sm:$0xff] 0.0
        %406 = vst [vmem:[#allocation3 + $0xe0] sm:$0xff] 0.0
        %407 = vst [vmem:[#allocation3 + $0xe8] sm:$0xff] 0.0
        %408 = vst [vmem:[#allocation3 + $0xf0] sm:$0xff] 0.0
        %409 = vst [vmem:[#allocation3 + $0xf8] sm:$0xff] 0.0
        %410 = vst [vmem:[#allocation4] sm:$0xff] 0.0
        %411 = vst [vmem:[#allocation4 + $0x8] sm:$0xff] 0.0
        %412 = vst [vmem:[#allocation4 + $0x10] sm:$0xff] 0.0
        %413 = vst [vmem:[#allocation4 + $0x18] sm:$0xff] 0.0
        %414 = vst [vmem:[#allocation4 + $0x20] sm:$0xff] 0.0
        %415 = vst [vmem:[#allocation4 + $0x28] sm:$0xff] 0.0
        %416 = vst [vmem:[#allocation4 + $0x30] sm:$0xff] 0.0
        %417 = vst [vmem:[#allocation4 + $0x38] sm:$0xff] 0.0
        %418 = vst [vmem:[#allocation4 + $0x40] sm:$0xff] 0.0
        %419 = vst [vmem:[#allocation4 + $0x48] sm:$0xff] 0.0
        %420 = vst [vmem:[#allocation4 + $0x50] sm:$0xff] 0.0
        %421 = vst [vmem:[#allocation4 + $0x58] sm:$0xff] 0.0
        %422 = vst [vmem:[#allocation4 + $0x60] sm:$0xff] 0.0
        %423 = vst [vmem:[#allocation4 + $0x68] sm:$0xff] 0.0
        %424 = vst [vmem:[#allocation4 + $0x70] sm:$0xff] 0.0
        %425 = vst [vmem:[#allocation4 + $0x78] sm:$0xff] 0.0
        %426 = vst [vmem:[#allocation4 + $0x80] sm:$0xff] 0.0
        %427 = vst [vmem:[#allocation4 + $0x88] sm:$0xff] 0.0
        %428 = vst [vmem:[#allocation4 + $0x90] sm:$0xff] 0.0
        %429 = vst [vmem:[#allocation4 + $0x98] sm:$0xff] 0.0
        %430 = vst [vmem:[#allocation4 + $0xa0] sm:$0xff] 0.0
        %431 = vst [vmem:[#allocation4 + $0xa8] sm:$0xff] 0.0
        %432 = vst [vmem:[#allocation4 + $0xb0] sm:$0xff] 0.0
        %433 = vst [vmem:[#allocation4 + $0xb8] sm:$0xff] 0.0
        %434 = vst [vmem:[#allocation4 + $0xc0] sm:$0xff] 0.0
        %435 = vst [vmem:[#allocation4 + $0xc8] sm:$0xff] 0.0
        %436 = vst [vmem:[#allocation4 + $0xd0] sm:$0xff] 0.0
        %437 = vst [vmem:[#allocation4 + $0xd8] sm:$0xff] 0.0
        %438 = vst [vmem:[#allocation4 + $0xe0] sm:$0xff] 0.0
        %439 = vst [vmem:[#allocation4 + $0xe8] sm:$0xff] 0.0
        %440 = vst [vmem:[#allocation4 + $0xf0] sm:$0xff] 0.0
        %441 = vst [vmem:[#allocation4 + $0xf8] sm:$0xff] 0.0
        %442 = vst [vmem:[#allocation5] sm:$0xff] 0.0
        %443 = vst [vmem:[#allocation5 + $0x8] sm:$0xff] 0.0
        %444 = vst [vmem:[#allocation5 + $0x10] sm:$0xff] 0.0
        %445 = vst [vmem:[#allocation5 + $0x18] sm:$0xff] 0.0
        %446 = vst [vmem:[#allocation5 + $0x20] sm:$0xff] 0.0
        %447 = vst [vmem:[#allocation5 + $0x28] sm:$0xff] 0.0
        %448 = vst [vmem:[#allocation5 + $0x30] sm:$0xff] 0.0
        %449 = vst [vmem:[#allocation5 + $0x38] sm:$0xff] 0.0
        %450 = vst [vmem:[#allocation5 + $0x40] sm:$0xff] 0.0
        %451 = vst [vmem:[#allocation5 + $0x48] sm:$0xff] 0.0
        %452 = vst [vmem:[#allocation5 + $0x50] sm:$0xff] 0.0
        %453 = vst [vmem:[#allocation5 + $0x58] sm:$0xff] 0.0
        %454 = vst [vmem:[#allocation5 + $0x60] sm:$0xff] 0.0
        %455 = vst [vmem:[#allocation5 + $0x68] sm:$0xff] 0.0
        %456 = vst [vmem:[#allocation5 + $0x70] sm:$0xff] 0.0
        %457 = vst [vmem:[#allocation5 + $0x78] sm:$0xff] 0.0
        %458 = vst [vmem:[#allocation5 + $0x80] sm:$0xff] 0.0
        %459 = vst [vmem:[#allocation5 + $0x88] sm:$0xff] 0.0
        %460 = vst [vmem:[#allocation5 + $0x90] sm:$0xff] 0.0
        %461 = vst [vmem:[#allocation5 + $0x98] sm:$0xff] 0.0
        %462 = vst [vmem:[#allocation5 + $0xa0] sm:$0xff] 0.0
        %463 = vst [vmem:[#allocation5 + $0xa8] sm:$0xff] 0.0
        %464 = vst [vmem:[#allocation5 + $0xb0] sm:$0xff] 0.0
        %465 = vst [vmem:[#allocation5 + $0xb8] sm:$0xff] 0.0
        %466 = vst [vmem:[#allocation5 + $0xc0] sm:$0xff] 0.0
        %467 = vst [vmem:[#allocation5 + $0xc8] sm:$0xff] 0.0
        %468 = vst [vmem:[#allocation5 + $0xd0] sm:$0xff] 0.0
        %469 = vst [vmem:[#allocation5 + $0xd8] sm:$0xff] 0.0
        %470 = vst [vmem:[#allocation5 + $0xe0] sm:$0xff] 0.0
        %471 = vst [vmem:[#allocation5 + $0xe8] sm:$0xff] 0.0
        %472 = vst [vmem:[#allocation5 + $0xf0] sm:$0xff] 0.0
        %473 = vst [vmem:[#allocation5 + $0xf8] sm:$0xff] 0.0
        %474 = vst [vmem:[#allocation6] sm:$0xff] 0.0
        %475 = vst [vmem:[#allocation6 + $0x8] sm:$0xff] 0.0
        %476 = vst [vmem:[#allocation6 + $0x10] sm:$0xff] 0.0
        %477 = vst [vmem:[#allocation6 + $0x18] sm:$0xff] 0.0
        %478 = vst [vmem:[#allocation6 + $0x20] sm:$0xff] 0.0
        %479 = vst [vmem:[#allocation6 + $0x28] sm:$0xff] 0.0
        %480 = vst [vmem:[#allocation6 + $0x30] sm:$0xff] 0.0
        %481 = vst [vmem:[#allocation6 + $0x38] sm:$0xff] 0.0
        %482 = vst [vmem:[#allocation6 + $0x40] sm:$0xff] 0.0
        %483 = vst [vmem:[#allocation6 + $0x48] sm:$0xff] 0.0
        %484 = vst [vmem:[#allocation6 + $0x50] sm:$0xff] 0.0
        %485 = vst [vmem:[#allocation6 + $0x58] sm:$0xff] 0.0
        %486 = vst [vmem:[#allocation6 + $0x60] sm:$0xff] 0.0
        %487 = vst [vmem:[#allocation6 + $0x68] sm:$0xff] 0.0
        %488 = vst [vmem:[#allocation6 + $0x70] sm:$0xff] 0.0
        %489 = vst [vmem:[#allocation6 + $0x78] sm:$0xff] 0.0
        %490 = vst [vmem:[#allocation7] sm:$0xff] 0.0
        %491 = vst [vmem:[#allocation7 + $0x8] sm:$0xff] 0.0
        %492 = vst [vmem:[#allocation7 + $0x10] sm:$0xff] 0.0
        %493 = vst [vmem:[#allocation7 + $0x18] sm:$0xff] 0.0
        %494 = vst [vmem:[#allocation7 + $0x20] sm:$0xff] 0.0
        %495 = vst [vmem:[#allocation7 + $0x28] sm:$0xff] 0.0
        %496 = vst [vmem:[#allocation7 + $0x30] sm:$0xff] 0.0
        %497 = vst [vmem:[#allocation7 + $0x38] sm:$0xff] 0.0
        %498 = vst [vmem:[#allocation7 + $0x40] sm:$0xff] 0.0
        %499 = vst [vmem:[#allocation7 + $0x48] sm:$0xff] 0.0
        %500 = vst [vmem:[#allocation7 + $0x50] sm:$0xff] 0.0
        %501 = vst [vmem:[#allocation7 + $0x58] sm:$0xff] 0.0
        %502 = vst [vmem:[#allocation7 + $0x60] sm:$0xff] 0.0
        %503 = vst [vmem:[#allocation7 + $0x68] sm:$0xff] 0.0
        %504 = vst [vmem:[#allocation7 + $0x70] sm:$0xff] 0.0
        %505 = vst [vmem:[#allocation7 + $0x78] sm:$0xff] 0.0
        %506 = vst [vmem:[%s327] sm:$0xff] 0.0
        %507 = vst [vmem:[%s327 + $0x8] sm:$0xff] 0.0
        %508 = vst [vmem:[%s327 + $0x10] sm:$0xff] 0.0
        %509 = vst [vmem:[%s327 + $0x18] sm:$0xff] 0.0
        %510 = vst [vmem:[%s327 + $0x20] sm:$0xff] 0.0
        %511 = vst [vmem:[%s327 + $0x28] sm:$0xff] 0.0
        %512 = vst [vmem:[%s327 + $0x30] sm:$0xff] 0.0
        %513 = vst [vmem:[%s327 + $0x38] sm:$0xff] 0.0
        %514 = vst [vmem:[%s327 + $0x40] sm:$0xff] 0.0
        %515 = vst [vmem:[%s327 + $0x48] sm:$0xff] 0.0
        %516 = vst [vmem:[%s327 + $0x50] sm:$0xff] 0.0
        %517 = vst [vmem:[%s327 + $0x58] sm:$0xff] 0.0
        %518 = vst [vmem:[%s327 + $0x60] sm:$0xff] 0.0
        %519 = vst [vmem:[%s327 + $0x68] sm:$0xff] 0.0
        %520 = vst [vmem:[%s327 + $0x70] sm:$0xff] 0.0
        %521 = vst [vmem:[%s327 + $0x78] sm:$0xff] 0.0
        %522 = vst [vmem:[%s327 + $0x80] sm:$0xff] 0.0
        %523 = vst [vmem:[%s327 + $0x88] sm:$0xff] 0.0
        %524 = vst [vmem:[%s327 + $0x90] sm:$0xff] 0.0
        %525 = vst [vmem:[%s327 + $0x98] sm:$0xff] 0.0
        %526 = vst [vmem:[%s327 + $0xa0] sm:$0xff] 0.0
        %527 = vst [vmem:[%s327 + $0xa8] sm:$0xff] 0.0
        %528 = vst [vmem:[%s327 + $0xb0] sm:$0xff] 0.0
        %529 = vst [vmem:[%s327 + $0xb8] sm:$0xff] 0.0
        %530 = vst [vmem:[%s327 + $0xc0] sm:$0xff] 0.0
        %531 = vst [vmem:[%s327 + $0xc8] sm:$0xff] 0.0
        %532 = vst [vmem:[%s327 + $0xd0] sm:$0xff] 0.0
        %533 = vst [vmem:[%s327 + $0xd8] sm:$0xff] 0.0
        %534 = vst [vmem:[%s327 + $0xe0] sm:$0xff] 0.0
        %535 = vst [vmem:[%s327 + $0xe8] sm:$0xff] 0.0
        %536 = vst [vmem:[%s327 + $0xf0] sm:$0xff] 0.0
        %537 = vst [vmem:[%s327 + $0xf8] sm:$0xff] 0.0
        %538 = vst [vmem:[%s334] sm:$0xff] 0.0
        %539 = vst [vmem:[%s334 + $0x8] sm:$0xff] 0.0
        %540 = vst [vmem:[%s334 + $0x10] sm:$0xff] 0.0
        %541 = vst [vmem:[%s334 + $0x18] sm:$0xff] 0.0
        %542 = vst [vmem:[%s334 + $0x20] sm:$0xff] 0.0
        %543 = vst [vmem:[%s334 + $0x28] sm:$0xff] 0.0
        %544 = vst [vmem:[%s334 + $0x30] sm:$0xff] 0.0
        %545 = vst [vmem:[%s334 + $0x38] sm:$0xff] 0.0
        %546 = vst [vmem:[%s334 + $0x40] sm:$0xff] 0.0
        %547 = vst [vmem:[%s334 + $0x48] sm:$0xff] 0.0
        %548 = vst [vmem:[%s334 + $0x50] sm:$0xff] 0.0
        %549 = vst [vmem:[%s334 + $0x58] sm:$0xff] 0.0
        %550 = vst [vmem:[%s334 + $0x60] sm:$0xff] 0.0
        %551 = vst [vmem:[%s334 + $0x68] sm:$0xff] 0.0
        %552 = vst [vmem:[%s334 + $0x70] sm:$0xff] 0.0
        %553 = vst [vmem:[%s334 + $0x78] sm:$0xff] 0.0
        %554 = vst [vmem:[%s334 + $0x80] sm:$0xff] 0.0
        %555 = vst [vmem:[%s334 + $0x88] sm:$0xff] 0.0
        %556 = vst [vmem:[%s334 + $0x90] sm:$0xff] 0.0
        %557 = vst [vmem:[%s334 + $0x98] sm:$0xff] 0.0
        %558 = vst [vmem:[%s334 + $0xa0] sm:$0xff] 0.0
        %559 = vst [vmem:[%s334 + $0xa8] sm:$0xff] 0.0
        %560 = vst [vmem:[%s334 + $0xb0] sm:$0xff] 0.0
        %561 = vst [vmem:[%s334 + $0xb8] sm:$0xff] 0.0
        %562 = vst [vmem:[%s334 + $0xc0] sm:$0xff] 0.0
        %563 = vst [vmem:[%s334 + $0xc8] sm:$0xff] 0.0
        %564 = vst [vmem:[%s334 + $0xd0] sm:$0xff] 0.0
        %565 = vst [vmem:[%s334 + $0xd8] sm:$0xff] 0.0
        %566 = vst [vmem:[%s334 + $0xe0] sm:$0xff] 0.0
        %567 = vst [vmem:[%s334 + $0xe8] sm:$0xff] 0.0
        %568 = vst [vmem:[%s334 + $0xf0] sm:$0xff] 0.0
        %569 = vst [vmem:[%s334 + $0xf8] sm:$0xff] 0.0
        %570 = vst [vmem:[%s340] sm:$0xff] 0.0
        %571 = vst [vmem:[%s340 + $0x8] sm:$0xff] 0.0
        %572 = vst [vmem:[%s340 + $0x10] sm:$0xff] 0.0
        %573 = vst [vmem:[%s340 + $0x18] sm:$0xff] 0.0
        %574 = vst [vmem:[%s340 + $0x20] sm:$0xff] 0.0
        %575 = vst [vmem:[%s340 + $0x28] sm:$0xff] 0.0
        %576 = vst [vmem:[%s340 + $0x30] sm:$0xff] 0.0
        %577 = vst [vmem:[%s340 + $0x38] sm:$0xff] 0.0
        %578 = vst [vmem:[%s340 + $0x40] sm:$0xff] 0.0
        %579 = vst [vmem:[%s340 + $0x48] sm:$0xff] 0.0
        %580 = vst [vmem:[%s340 + $0x50] sm:$0xff] 0.0
        %581 = vst [vmem:[%s340 + $0x58] sm:$0xff] 0.0
        %582 = vst [vmem:[%s340 + $0x60] sm:$0xff] 0.0
        %583 = vst [vmem:[%s340 + $0x68] sm:$0xff] 0.0
        %584 = vst [vmem:[%s340 + $0x70] sm:$0xff] 0.0
        %585 = vst [vmem:[%s340 + $0x78] sm:$0xff] 0.0
      $region44: #{main_net_forward.3} parent=39 // pred_fallthru
        _
      %v586 = vld [vmem:[%s3] sm:$0x3]
      %v587 = vld [vmem:[%s4] sm:$0x3]
      %v588 = vld [vmem:[%s320] sm:$0xff]
      %v589 = vld [vmem:[%s320 + $0x8] sm:$0xff]
      %v590 = vld [vmem:[%s320 + $0x10] sm:$0xff]
      %v591 = vld [vmem:[%s320 + $0x18] sm:$0xff]
      %v592 = vld [vmem:[%s320 + $0x20] sm:$0xff]
      %v593 = vld [vmem:[%s320 + $0x28] sm:$0xff]
      %v594 = vld [vmem:[%s320 + $0x30] sm:$0xff]
      %v595 = vld [vmem:[%s320 + $0x38] sm:$0xff]
      %v596 = vld [vmem:[%s320 + $0x40] sm:$0xff]
      %v597 = vld [vmem:[%s320 + $0x48] sm:$0xff]
      %v598 = vld [vmem:[%s320 + $0x50] sm:$0xff]
      %v599 = vld [vmem:[%s320 + $0x58] sm:$0xff]
      %v600 = vld [vmem:[%s320 + $0x60] sm:$0xff]
      %v601 = vld [vmem:[%s320 + $0x68] sm:$0xff]
      %v602 = vld [vmem:[%s320 + $0x70] sm:$0xff]
      %v603 = vld [vmem:[%s320 + $0x78] sm:$0xff]
      %v604 = vld [vmem:[%s320 + $0x80] sm:$0xff]
      %v605 = vld [vmem:[%s320 + $0x88] sm:$0xff]
      %v606 = vld [vmem:[%s320 + $0x90] sm:$0xff]
      %v607 = vld [vmem:[%s320 + $0x98] sm:$0xff]
      %v608 = vld [vmem:[%s320 + $0xa0] sm:$0xff]
      %v609 = vld [vmem:[%s320 + $0xa8] sm:$0xff]
      %v610 = vld [vmem:[%s320 + $0xb0] sm:$0xff]
      %v611 = vld [vmem:[%s320 + $0xb8] sm:$0xff]
      %v612 = vld [vmem:[%s320 + $0xc0] sm:$0xff]
      %v613 = vld [vmem:[%s320 + $0xc8] sm:$0xff]
      %v614 = vld [vmem:[%s320 + $0xd0] sm:$0xff]
      %v615 = vld [vmem:[%s320 + $0xd8] sm:$0xff]
      %v616 = vld [vmem:[%s320 + $0xe0] sm:$0xff]
      %v617 = vld [vmem:[%s320 + $0xe8] sm:$0xff]
      %v618 = vld [vmem:[%s320 + $0xf0] sm:$0xff]
      %v619 = vld [vmem:[%s320 + $0xf8] sm:$0xff]
      %v620 = vld [vmem:[#allocation3] sm:$0xff]
      %v621 = vld [vmem:[#allocation3 + $0x8] sm:$0xff]
      %v622 = vld [vmem:[#allocation3 + $0x10] sm:$0xff]
      %v623 = vld [vmem:[#allocation3 + $0x18] sm:$0xff]
      %v624 = vld [vmem:[#allocation3 + $0x20] sm:$0xff]
      %v625 = vld [vmem:[#allocation3 + $0x28] sm:$0xff]
      %v626 = vld [vmem:[#allocation3 + $0x30] sm:$0xff]
      %v627 = vld [vmem:[#allocation3 + $0x38] sm:$0xff]
      %v628 = vld [vmem:[#allocation3 + $0x40] sm:$0xff]
      %v629 = vld [vmem:[#allocation3 + $0x48] sm:$0xff]
      %v630 = vld [vmem:[#allocation3 + $0x50] sm:$0xff]
      %v631 = vld [vmem:[#allocation3 + $0x58] sm:$0xff]
      %v632 = vld [vmem:[#allocation3 + $0x60] sm:$0xff]
      %v633 = vld [vmem:[#allocation3 + $0x68] sm:$0xff]
      %v634 = vld [vmem:[#allocation3 + $0x70] sm:$0xff]
      %v635 = vld [vmem:[#allocation3 + $0x78] sm:$0xff]
      %v636 = vld [vmem:[#allocation3 + $0x80] sm:$0xff]
      %v637 = vld [vmem:[#allocation3 + $0x88] sm:$0xff]
      %v638 = vld [vmem:[#allocation3 + $0x90] sm:$0xff]
      %v639 = vld [vmem:[#allocation3 + $0x98] sm:$0xff]
      %v640 = vld [vmem:[#allocation3 + $0xa0] sm:$0xff]
      %v641 = vld [vmem:[#allocation3 + $0xa8] sm:$0xff]
      %v642 = vld [vmem:[#allocation3 + $0xb0] sm:$0xff]
      %v643 = vld [vmem:[#allocation3 + $0xb8] sm:$0xff]
      %v644 = vld [vmem:[#allocation3 + $0xc0] sm:$0xff]
      %v645 = vld [vmem:[#allocation3 + $0xc8] sm:$0xff]
      %v646 = vld [vmem:[#allocation3 + $0xd0] sm:$0xff]
      %v647 = vld [vmem:[#allocation3 + $0xd8] sm:$0xff]
      %v648 = vld [vmem:[#allocation3 + $0xe0] sm:$0xff]
      %v649 = vld [vmem:[#allocation3 + $0xe8] sm:$0xff]
      %v650 = vld [vmem:[#allocation3 + $0xf0] sm:$0xff]
      %v651 = vld [vmem:[#allocation3 + $0xf8] sm:$0xff]
      %vm652 = vcmp.gt.f32.partialorder %v620, 0.0
      %vm653 = vcmp.gt.f32.partialorder %v621, 0.0
      %vm654 = vcmp.gt.f32.partialorder %v622, 0.0
      %vm655 = vcmp.gt.f32.partialorder %v623, 0.0
      %vm656 = vcmp.gt.f32.partialorder %v624, 0.0
      %vm657 = vcmp.gt.f32.partialorder %v625, 0.0
      %vm658 = vcmp.gt.f32.partialorder %v626, 0.0
      %vm659 = vcmp.gt.f32.partialorder %v627, 0.0
      %vm660 = vcmp.gt.f32.partialorder %v628, 0.0
      %vm661 = vcmp.gt.f32.partialorder %v629, 0.0
      %vm662 = vcmp.gt.f32.partialorder %v630, 0.0
      %vm663 = vcmp.gt.f32.partialorder %v631, 0.0
      %vm664 = vcmp.gt.f32.partialorder %v632, 0.0
      %vm665 = vcmp.gt.f32.partialorder %v633, 0.0
      %vm666 = vcmp.gt.f32.partialorder %v634, 0.0
      %vm667 = vcmp.gt.f32.partialorder %v635, 0.0
      %vm668 = vcmp.gt.f32.partialorder %v636, 0.0
      %vm669 = vcmp.gt.f32.partialorder %v637, 0.0
      %vm670 = vcmp.gt.f32.partialorder %v638, 0.0
      %vm671 = vcmp.gt.f32.partialorder %v639, 0.0
      %vm672 = vcmp.gt.f32.partialorder %v640, 0.0
      %vm673 = vcmp.gt.f32.partialorder %v641, 0.0
      %vm674 = vcmp.gt.f32.partialorder %v642, 0.0
      %vm675 = vcmp.gt.f32.partialorder %v643, 0.0
      %vm676 = vcmp.gt.f32.partialorder %v644, 0.0
      %vm677 = vcmp.gt.f32.partialorder %v645, 0.0
      %vm678 = vcmp.gt.f32.partialorder %v646, 0.0
      %vm679 = vcmp.gt.f32.partialorder %v647, 0.0
      %vm680 = vcmp.gt.f32.partialorder %v648, 0.0
      %vm681 = vcmp.gt.f32.partialorder %v649, 0.0
      %vm682 = vcmp.gt.f32.partialorder %v650, 0.0
      %vm683 = vcmp.gt.f32.partialorder %v651, 0.0
      %v684 = vld [vmem:[#allocation2] sm:$0xff]
      %v685 = vld [vmem:[#allocation2 + $0x8] sm:$0xff]
      %v686 = vld [vmem:[#allocation2 + $0x10] sm:$0xff]
      %v687 = vld [vmem:[#allocation2 + $0x18] sm:$0xff]
      %v688 = vld [vmem:[#allocation2 + $0x20] sm:$0xff]
      %v689 = vld [vmem:[#allocation2 + $0x28] sm:$0xff]
      %v690 = vld [vmem:[#allocation2 + $0x30] sm:$0xff]
      %v691 = vld [vmem:[#allocation2 + $0x38] sm:$0xff]
      %v692 = vld [vmem:[#allocation2 + $0x40] sm:$0xff]
      %v693 = vld [vmem:[#allocation2 + $0x48] sm:$0xff]
      %v694 = vld [vmem:[#allocation2 + $0x50] sm:$0xff]
      %v695 = vld [vmem:[#allocation2 + $0x58] sm:$0xff]
      %v696 = vld [vmem:[#allocation2 + $0x60] sm:$0xff]
      %v697 = vld [vmem:[#allocation2 + $0x68] sm:$0xff]
      %v698 = vld [vmem:[#allocation2 + $0x70] sm:$0xff]
      %v699 = vld [vmem:[#allocation2 + $0x78] sm:$0xff]
      %v700 = vld [vmem:[#allocation2 + $0x80] sm:$0xff]
      %v701 = vld [vmem:[#allocation2 + $0x88] sm:$0xff]
      %v702 = vld [vmem:[#allocation2 + $0x90] sm:$0xff]
      %v703 = vld [vmem:[#allocation2 + $0x98] sm:$0xff]
      %v704 = vld [vmem:[#allocation2 + $0xa0] sm:$0xff]
      %v705 = vld [vmem:[#allocation2 + $0xa8] sm:$0xff]
      %v706 = vld [vmem:[#allocation2 + $0xb0] sm:$0xff]
      %v707 = vld [vmem:[#allocation2 + $0xb8] sm:$0xff]
      %v708 = vld [vmem:[#allocation2 + $0xc0] sm:$0xff]
      %v709 = vld [vmem:[#allocation2 + $0xc8] sm:$0xff]
      %v710 = vld [vmem:[#allocation2 + $0xd0] sm:$0xff]
      %v711 = vld [vmem:[#allocation2 + $0xd8] sm:$0xff]
      %v712 = vld [vmem:[#allocation2 + $0xe0] sm:$0xff]
      %v713 = vld [vmem:[#allocation2 + $0xe8] sm:$0xff]
      %v714 = vld [vmem:[#allocation2 + $0xf0] sm:$0xff]
      %v715 = vld [vmem:[#allocation2 + $0xf8] sm:$0xff]
      %v716 = vadd.f32 %v684, %v588
      %v717 = vadd.f32 %v685, %v589
      %v718 = vadd.f32 %v686, %v590
      %v719 = vadd.f32 %v687, %v591
      %v720 = vadd.f32 %v688, %v592
      %v721 = vadd.f32 %v689, %v593
      %v722 = vadd.f32 %v690, %v594
      %v723 = vadd.f32 %v691, %v595
      %v724 = vadd.f32 %v692, %v596
      %v725 = vadd.f32 %v693, %v597
      %v726 = vadd.f32 %v694, %v598
      %v727 = vadd.f32 %v695, %v599
      %v728 = vadd.f32 %v696, %v600
      %v729 = vadd.f32 %v697, %v601
      %v730 = vadd.f32 %v698, %v602
      %v731 = vadd.f32 %v699, %v603
      %v732 = vadd.f32 %v700, %v604
      %v733 = vadd.f32 %v701, %v605
      %v734 = vadd.f32 %v702, %v606
      %v735 = vadd.f32 %v703, %v607
      %v736 = vadd.f32 %v704, %v608
      %v737 = vadd.f32 %v705, %v609
      %v738 = vadd.f32 %v706, %v610
      %v739 = vadd.f32 %v707, %v611
      %v740 = vadd.f32 %v708, %v612
      %v741 = vadd.f32 %v709, %v613
      %v742 = vadd.f32 %v710, %v614
      %v743 = vadd.f32 %v711, %v615
      %v744 = vadd.f32 %v712, %v616
      %v745 = vadd.f32 %v713, %v617
      %v746 = vadd.f32 %v714, %v618
      %v747 = vadd.f32 %v715, %v619
      %v748 = vsel %vm652, %v588, %v716
      %v749 = vsel %vm653, %v589, %v717
      %v750 = vsel %vm654, %v590, %v718
      %v751 = vsel %vm655, %v591, %v719
      %v752 = vsel %vm656, %v592, %v720
      %v753 = vsel %vm657, %v593, %v721
      %v754 = vsel %vm658, %v594, %v722
      %v755 = vsel %vm659, %v595, %v723
      %v756 = vsel %vm660, %v596, %v724
      %v757 = vsel %vm661, %v597, %v725
      %v758 = vsel %vm662, %v598, %v726
      %v759 = vsel %vm663, %v599, %v727
      %v760 = vsel %vm664, %v600, %v728
      %v761 = vsel %vm665, %v601, %v729
      %v762 = vsel %vm666, %v602, %v730
      %v763 = vsel %vm667, %v603, %v731
      %v764 = vsel %vm668, %v604, %v732
      %v765 = vsel %vm669, %v605, %v733
      %v766 = vsel %vm670, %v606, %v734
      %v767 = vsel %vm671, %v607, %v735
      %v768 = vsel %vm672, %v608, %v736
      %v769 = vsel %vm673, %v609, %v737
      %v770 = vsel %vm674, %v610, %v738
      %v771 = vsel %vm675, %v611, %v739
      %v772 = vsel %vm676, %v612, %v740
      %v773 = vsel %vm677, %v613, %v741
      %v774 = vsel %vm678, %v614, %v742
      %v775 = vsel %vm679, %v615, %v743
      %v776 = vsel %vm680, %v616, %v744
      %v777 = vsel %vm681, %v617, %v745
      %v778 = vsel %vm682, %v618, %v746
      %v779 = vsel %vm683, %v619, %v747
      %v780 = vsub.f32 %v748, 0.2
      %v781 = vsub.f32 %v749, 0.2
      %v782 = vsub.f32 %v750, 0.2
      %v783 = vsub.f32 %v751, 0.2
      %v784 = vsub.f32 %v752, 0.2
      %v785 = vsub.f32 %v753, 0.2
      %v786 = vsub.f32 %v754, 0.2
      %v787 = vsub.f32 %v755, 0.2
      %v788 = vsub.f32 %v756, 0.2
      %v789 = vsub.f32 %v757, 0.2
      %v790 = vsub.f32 %v758, 0.2
      %v791 = vsub.f32 %v759, 0.2
      %v792 = vsub.f32 %v760, 0.2
      %v793 = vsub.f32 %v761, 0.2
      %v794 = vsub.f32 %v762, 0.2
      %v795 = vsub.f32 %v763, 0.2
      %v796 = vsub.f32 %v764, 0.2
      %v797 = vsub.f32 %v765, 0.2
      %v798 = vsub.f32 %v766, 0.2
      %v799 = vsub.f32 %v767, 0.2
      %v800 = vsub.f32 %v768, 0.2
      %v801 = vsub.f32 %v769, 0.2
      %v802 = vsub.f32 %v770, 0.2
      %v803 = vsub.f32 %v771, 0.2
      %v804 = vsub.f32 %v772, 0.2
      %v805 = vsub.f32 %v773, 0.2
      %v806 = vsub.f32 %v774, 0.2
      %v807 = vsub.f32 %v775, 0.2
      %v808 = vsub.f32 %v776, 0.2
      %v809 = vsub.f32 %v777, 0.2
      %v810 = vsub.f32 %v778, 0.2
      %v811 = vsub.f32 %v779, 0.2
      %vm812 = vcmp.gt.f32.partialorder %v780, 0.0
      %vm813 = vcmp.gt.f32.partialorder %v781, 0.0
      %vm814 = vcmp.gt.f32.partialorder %v782, 0.0
      %vm815 = vcmp.gt.f32.partialorder %v783, 0.0
      %vm816 = vcmp.gt.f32.partialorder %v784, 0.0
      %vm817 = vcmp.gt.f32.partialorder %v785, 0.0
      %vm818 = vcmp.gt.f32.partialorder %v786, 0.0
      %vm819 = vcmp.gt.f32.partialorder %v787, 0.0
      %vm820 = vcmp.gt.f32.partialorder %v788, 0.0
      %vm821 = vcmp.gt.f32.partialorder %v789, 0.0
      %vm822 = vcmp.gt.f32.partialorder %v790, 0.0
      %vm823 = vcmp.gt.f32.partialorder %v791, 0.0
      %vm824 = vcmp.gt.f32.partialorder %v792, 0.0
      %vm825 = vcmp.gt.f32.partialorder %v793, 0.0
      %vm826 = vcmp.gt.f32.partialorder %v794, 0.0
      %vm827 = vcmp.gt.f32.partialorder %v795, 0.0
      %vm828 = vcmp.gt.f32.partialorder %v796, 0.0
      %vm829 = vcmp.gt.f32.partialorder %v797, 0.0
      %vm830 = vcmp.gt.f32.partialorder %v798, 0.0
      %vm831 = vcmp.gt.f32.partialorder %v799, 0.0
      %vm832 = vcmp.gt.f32.partialorder %v800, 0.0
      %vm833 = vcmp.gt.f32.partialorder %v801, 0.0
      %vm834 = vcmp.gt.f32.partialorder %v802, 0.0
      %vm835 = vcmp.gt.f32.partialorder %v803, 0.0
      %vm836 = vcmp.gt.f32.partialorder %v804, 0.0
      %vm837 = vcmp.gt.f32.partialorder %v805, 0.0
      %vm838 = vcmp.gt.f32.partialorder %v806, 0.0
      %vm839 = vcmp.gt.f32.partialorder %v807, 0.0
      %vm840 = vcmp.gt.f32.partialorder %v808, 0.0
      %vm841 = vcmp.gt.f32.partialorder %v809, 0.0
      %vm842 = vcmp.gt.f32.partialorder %v810, 0.0
      %vm843 = vcmp.gt.f32.partialorder %v811, 0.0
      %v844 = vsel %vm812, 1.0, 0.0
      %v845 = vsel %vm813, 1.0, 0.0
      %v846 = vsel %vm814, 1.0, 0.0
      %v847 = vsel %vm815, 1.0, 0.0
      %v848 = vsel %vm816, 1.0, 0.0
      %v849 = vsel %vm817, 1.0, 0.0
      %v850 = vsel %vm818, 1.0, 0.0
      %v851 = vsel %vm819, 1.0, 0.0
      %v852 = vsel %vm820, 1.0, 0.0
      %v853 = vsel %vm821, 1.0, 0.0
      %v854 = vsel %vm822, 1.0, 0.0
      %v855 = vsel %vm823, 1.0, 0.0
      %v856 = vsel %vm824, 1.0, 0.0
      %v857 = vsel %vm825, 1.0, 0.0
      %v858 = vsel %vm826, 1.0, 0.0
      %v859 = vsel %vm827, 1.0, 0.0
      %v860 = vsel %vm828, 1.0, 0.0
      %v861 = vsel %vm829, 1.0, 0.0
      %v862 = vsel %vm830, 1.0, 0.0
      %v863 = vsel %vm831, 1.0, 0.0
      %v864 = vsel %vm832, 1.0, 0.0
      %v865 = vsel %vm833, 1.0, 0.0
      %v866 = vsel %vm834, 1.0, 0.0
      %v867 = vsel %vm835, 1.0, 0.0
      %v868 = vsel %vm836, 1.0, 0.0
      %v869 = vsel %vm837, 1.0, 0.0
      %v870 = vsel %vm838, 1.0, 0.0
      %v871 = vsel %vm839, 1.0, 0.0
      %v872 = vsel %vm840, 1.0, 0.0
      %v873 = vsel %vm841, 1.0, 0.0
      %v874 = vsel %vm842, 1.0, 0.0
      %v875 = vsel %vm843, 1.0, 0.0
      %v877 = vlaneseq
      %v878 = vshrl.u32 %v877, 7
      %v879 = vsub.s32 0, %v878
      %v880 = vrot.slane %v586, %v879
      %v881 = vlaneseq
      %v882 = vshrl.u32 %v881, 7
      %v883 = vsub.s32 1, %v882
      %v884 = vrot.slane %v586, %v883
      %v887 = vmul.f32 %v844, %v880
      %v888 = vmul.f32 %v845, %v884
      %v889 = vmul.f32 %v846, %v880
      %v890 = vmul.f32 %v847, %v884
      %v891 = vmul.f32 %v848, %v880
      %v892 = vmul.f32 %v849, %v884
      %v893 = vmul.f32 %v850, %v880
      %v894 = vmul.f32 %v851, %v884
      %v895 = vmul.f32 %v852, %v880
      %v896 = vmul.f32 %v853, %v884
      %v897 = vmul.f32 %v854, %v880
      %v898 = vmul.f32 %v855, %v884
      %v899 = vmul.f32 %v856, %v880
      %v900 = vmul.f32 %v857, %v884
      %v901 = vmul.f32 %v858, %v880
      %v902 = vmul.f32 %v859, %v884
      %v903 = vmul.f32 %v860, %v880
      %v904 = vmul.f32 %v861, %v884
      %v905 = vmul.f32 %v862, %v880
      %v906 = vmul.f32 %v863, %v884
      %v907 = vmul.f32 %v864, %v880
      %v908 = vmul.f32 %v865, %v884
      %v909 = vmul.f32 %v866, %v880
      %v910 = vmul.f32 %v867, %v884
      %v911 = vmul.f32 %v868, %v880
      %v912 = vmul.f32 %v869, %v884
      %v913 = vmul.f32 %v870, %v880
      %v914 = vmul.f32 %v871, %v884
      %v915 = vmul.f32 %v872, %v880
      %v916 = vmul.f32 %v873, %v884
      %v917 = vmul.f32 %v874, %v880
      %v918 = vmul.f32 %v875, %v884
      %919 = vst [vmem:[#allocation2] sm:$0xff] %v748
      %920 = vst [vmem:[#allocation2 + $0x8] sm:$0xff] %v749
      %921 = vst [vmem:[#allocation2 + $0x10] sm:$0xff] %v750
      %922 = vst [vmem:[#allocation2 + $0x18] sm:$0xff] %v751
      %923 = vst [vmem:[#allocation2 + $0x20] sm:$0xff] %v752
      %924 = vst [vmem:[#allocation2 + $0x28] sm:$0xff] %v753
      %925 = vst [vmem:[#allocation2 + $0x30] sm:$0xff] %v754
      %926 = vst [vmem:[#allocation2 + $0x38] sm:$0xff] %v755
      %927 = vst [vmem:[#allocation2 + $0x40] sm:$0xff] %v756
      %928 = vst [vmem:[#allocation2 + $0x48] sm:$0xff] %v757
      %929 = vst [vmem:[#allocation2 + $0x50] sm:$0xff] %v758
      %930 = vst [vmem:[#allocation2 + $0x58] sm:$0xff] %v759
      %931 = vst [vmem:[#allocation2 + $0x60] sm:$0xff] %v760
      %932 = vst [vmem:[#allocation2 + $0x68] sm:$0xff] %v761
      %933 = vst [vmem:[#allocation2 + $0x70] sm:$0xff] %v762
      %934 = vst [vmem:[#allocation2 + $0x78] sm:$0xff] %v763
      %935 = vst [vmem:[#allocation2 + $0x80] sm:$0xff] %v764
      %936 = vst [vmem:[#allocation2 + $0x88] sm:$0xff] %v765
      %937 = vst [vmem:[#allocation2 + $0x90] sm:$0xff] %v766
      %938 = vst [vmem:[#allocation2 + $0x98] sm:$0xff] %v767
      %939 = vst [vmem:[#allocation2 + $0xa0] sm:$0xff] %v768
      %940 = vst [vmem:[#allocation2 + $0xa8] sm:$0xff] %v769
      %941 = vst [vmem:[#allocation2 + $0xb0] sm:$0xff] %v770
      %942 = vst [vmem:[#allocation2 + $0xb8] sm:$0xff] %v771
      %943 = vst [vmem:[#allocation2 + $0xc0] sm:$0xff] %v772
      %944 = vst [vmem:[#allocation2 + $0xc8] sm:$0xff] %v773
      %945 = vst [vmem:[#allocation2 + $0xd0] sm:$0xff] %v774
      %946 = vst [vmem:[#allocation2 + $0xd8] sm:$0xff] %v775
      %947 = vst [vmem:[#allocation2 + $0xe0] sm:$0xff] %v776
      %948 = vst [vmem:[#allocation2 + $0xe8] sm:$0xff] %v777
      %949 = vst [vmem:[#allocation2 + $0xf0] sm:$0xff] %v778
      %950 = vst [vmem:[#allocation2 + $0xf8] sm:$0xff] %v779
      %951 = vst [vmem:[#allocation3] sm:$0xff] %v887
      %952 = vst [vmem:[#allocation3 + $0x8] sm:$0xff] %v888
      %953 = vst [vmem:[#allocation3 + $0x10] sm:$0xff] %v889
      %954 = vst [vmem:[#allocation3 + $0x18] sm:$0xff] %v890
      %955 = vst [vmem:[#allocation3 + $0x20] sm:$0xff] %v891
      %956 = vst [vmem:[#allocation3 + $0x28] sm:$0xff] %v892
      %957 = vst [vmem:[#allocation3 + $0x30] sm:$0xff] %v893
      %958 = vst [vmem:[#allocation3 + $0x38] sm:$0xff] %v894
      %959 = vst [vmem:[#allocation3 + $0x40] sm:$0xff] %v895
      %960 = vst [vmem:[#allocation3 + $0x48] sm:$0xff] %v896
      %961 = vst [vmem:[#allocation3 + $0x50] sm:$0xff] %v897
      %962 = vst [vmem:[#allocation3 + $0x58] sm:$0xff] %v898
      %963 = vst [vmem:[#allocation3 + $0x60] sm:$0xff] %v899
      %964 = vst [vmem:[#allocation3 + $0x68] sm:$0xff] %v900
      %965 = vst [vmem:[#allocation3 + $0x70] sm:$0xff] %v901
      %966 = vst [vmem:[#allocation3 + $0x78] sm:$0xff] %v902
      %967 = vst [vmem:[#allocation3 + $0x80] sm:$0xff] %v903
      %968 = vst [vmem:[#allocation3 + $0x88] sm:$0xff] %v904
      %969 = vst [vmem:[#allocation3 + $0x90] sm:$0xff] %v905
      %970 = vst [vmem:[#allocation3 + $0x98] sm:$0xff] %v906
      %971 = vst [vmem:[#allocation3 + $0xa0] sm:$0xff] %v907
      %972 = vst [vmem:[#allocation3 + $0xa8] sm:$0xff] %v908
      %973 = vst [vmem:[#allocation3 + $0xb0] sm:$0xff] %v909
      %974 = vst [vmem:[#allocation3 + $0xb8] sm:$0xff] %v910
      %975 = vst [vmem:[#allocation3 + $0xc0] sm:$0xff] %v911
      %976 = vst [vmem:[#allocation3 + $0xc8] sm:$0xff] %v912
      %977 = vst [vmem:[#allocation3 + $0xd0] sm:$0xff] %v913
      %978 = vst [vmem:[#allocation3 + $0xd8] sm:$0xff] %v914
      %979 = vst [vmem:[#allocation3 + $0xe0] sm:$0xff] %v915
      %980 = vst [vmem:[#allocation3 + $0xe8] sm:$0xff] %v916
      %981 = vst [vmem:[#allocation3 + $0xf0] sm:$0xff] %v917
      %982 = vst [vmem:[#allocation3 + $0xf8] sm:$0xff] %v918
      %v983 = vld [vmem:[%s327] sm:$0xff]
      %v984 = vld [vmem:[%s327 + $0x8] sm:$0xff]
      %v985 = vld [vmem:[%s327 + $0x10] sm:$0xff]
      %v986 = vld [vmem:[%s327 + $0x18] sm:$0xff]
      %v987 = vld [vmem:[%s327 + $0x20] sm:$0xff]
      %v988 = vld [vmem:[%s327 + $0x28] sm:$0xff]
      %v989 = vld [vmem:[%s327 + $0x30] sm:$0xff]
      %v990 = vld [vmem:[%s327 + $0x38] sm:$0xff]
      %v991 = vld [vmem:[%s327 + $0x40] sm:$0xff]
      %v992 = vld [vmem:[%s327 + $0x48] sm:$0xff]
      %v993 = vld [vmem:[%s327 + $0x50] sm:$0xff]
      %v994 = vld [vmem:[%s327 + $0x58] sm:$0xff]
      %v995 = vld [vmem:[%s327 + $0x60] sm:$0xff]
      %v996 = vld [vmem:[%s327 + $0x68] sm:$0xff]
      %v997 = vld [vmem:[%s327 + $0x70] sm:$0xff]
      %v998 = vld [vmem:[%s327 + $0x78] sm:$0xff]
      %v999 = vld [vmem:[%s327 + $0x80] sm:$0xff]
      %v1000 = vld [vmem:[%s327 + $0x88] sm:$0xff]
      %v1001 = vld [vmem:[%s327 + $0x90] sm:$0xff]
      %v1002 = vld [vmem:[%s327 + $0x98] sm:$0xff]
      %v1003 = vld [vmem:[%s327 + $0xa0] sm:$0xff]
      %v1004 = vld [vmem:[%s327 + $0xa8] sm:$0xff]
      %v1005 = vld [vmem:[%s327 + $0xb0] sm:$0xff]
      %v1006 = vld [vmem:[%s327 + $0xb8] sm:$0xff]
      %v1007 = vld [vmem:[%s327 + $0xc0] sm:$0xff]
      %v1008 = vld [vmem:[%s327 + $0xc8] sm:$0xff]
      %v1009 = vld [vmem:[%s327 + $0xd0] sm:$0xff]
      %v1010 = vld [vmem:[%s327 + $0xd8] sm:$0xff]
      %v1011 = vld [vmem:[%s327 + $0xe0] sm:$0xff]
      %v1012 = vld [vmem:[%s327 + $0xe8] sm:$0xff]
      %v1013 = vld [vmem:[%s327 + $0xf0] sm:$0xff]
      %v1014 = vld [vmem:[%s327 + $0xf8] sm:$0xff]
      %v1015 = vadd.f32 %v983, %v887
      %v1016 = vadd.f32 %v984, %v888
      %v1017 = vadd.f32 %v985, %v889
      %v1018 = vadd.f32 %v986, %v890
      %v1019 = vadd.f32 %v987, %v891
      %v1020 = vadd.f32 %v988, %v892
      %v1021 = vadd.f32 %v989, %v893
      %v1022 = vadd.f32 %v990, %v894
      %v1023 = vadd.f32 %v991, %v895
      %v1024 = vadd.f32 %v992, %v896
      %v1025 = vadd.f32 %v993, %v897
      %v1026 = vadd.f32 %v994, %v898
      %v1027 = vadd.f32 %v995, %v899
      %v1028 = vadd.f32 %v996, %v900
      %v1029 = vadd.f32 %v997, %v901
      %v1030 = vadd.f32 %v998, %v902
      %v1031 = vadd.f32 %v999, %v903
      %v1032 = vadd.f32 %v1000, %v904
      %v1033 = vadd.f32 %v1001, %v905
      %v1034 = vadd.f32 %v1002, %v906
      %v1035 = vadd.f32 %v1003, %v907
      %v1036 = vadd.f32 %v1004, %v908
      %v1037 = vadd.f32 %v1005, %v909
      %v1038 = vadd.f32 %v1006, %v910
      %v1039 = vadd.f32 %v1007, %v911
      %v1040 = vadd.f32 %v1008, %v912
      %v1041 = vadd.f32 %v1009, %v913
      %v1042 = vadd.f32 %v1010, %v914
      %v1043 = vadd.f32 %v1011, %v915
      %v1044 = vadd.f32 %v1012, %v916
      %v1045 = vadd.f32 %v1013, %v917
      %v1046 = vadd.f32 %v1014, %v918
      %1047 = vst [vmem:[%s327] sm:$0xff] %v1015
      %1048 = vst [vmem:[%s327 + $0x8] sm:$0xff] %v1016
      %1049 = vst [vmem:[%s327 + $0x10] sm:$0xff] %v1017
      %1050 = vst [vmem:[%s327 + $0x18] sm:$0xff] %v1018
      %1051 = vst [vmem:[%s327 + $0x20] sm:$0xff] %v1019
      %1052 = vst [vmem:[%s327 + $0x28] sm:$0xff] %v1020
      %1053 = vst [vmem:[%s327 + $0x30] sm:$0xff] %v1021
      %1054 = vst [vmem:[%s327 + $0x38] sm:$0xff] %v1022
      %1055 = vst [vmem:[%s327 + $0x40] sm:$0xff] %v1023
      %1056 = vst [vmem:[%s327 + $0x48] sm:$0xff] %v1024
      %1057 = vst [vmem:[%s327 + $0x50] sm:$0xff] %v1025
      %1058 = vst [vmem:[%s327 + $0x58] sm:$0xff] %v1026
      %1059 = vst [vmem:[%s327 + $0x60] sm:$0xff] %v1027
      %1060 = vst [vmem:[%s327 + $0x68] sm:$0xff] %v1028
      %1061 = vst [vmem:[%s327 + $0x70] sm:$0xff] %v1029
      %1062 = vst [vmem:[%s327 + $0x78] sm:$0xff] %v1030
      %1063 = vst [vmem:[%s327 + $0x80] sm:$0xff] %v1031
      %1064 = vst [vmem:[%s327 + $0x88] sm:$0xff] %v1032
      %1065 = vst [vmem:[%s327 + $0x90] sm:$0xff] %v1033
      %1066 = vst [vmem:[%s327 + $0x98] sm:$0xff] %v1034
      %1067 = vst [vmem:[%s327 + $0xa0] sm:$0xff] %v1035
      %1068 = vst [vmem:[%s327 + $0xa8] sm:$0xff] %v1036
      %1069 = vst [vmem:[%s327 + $0xb0] sm:$0xff] %v1037
      %1070 = vst [vmem:[%s327 + $0xb8] sm:$0xff] %v1038
      %1071 = vst [vmem:[%s327 + $0xc0] sm:$0xff] %v1039
      %1072 = vst [vmem:[%s327 + $0xc8] sm:$0xff] %v1040
      %1073 = vst [vmem:[%s327 + $0xd0] sm:$0xff] %v1041
      %1074 = vst [vmem:[%s327 + $0xd8] sm:$0xff] %v1042
      %1075 = vst [vmem:[%s327 + $0xe0] sm:$0xff] %v1043
      %1076 = vst [vmem:[%s327 + $0xe8] sm:$0xff] %v1044
      %1077 = vst [vmem:[%s327 + $0xf0] sm:$0xff] %v1045
      %1078 = vst [vmem:[%s327 + $0xf8] sm:$0xff] %v1046
      %v1079 = vld [vmem:[#allocation3] sm:$0xff]
      %v1080 = vld [vmem:[#allocation3 + $0x8] sm:$0xff]
      %v1081 = vld [vmem:[#allocation3 + $0x10] sm:$0xff]
      %v1082 = vld [vmem:[#allocation3 + $0x18] sm:$0xff]
      %v1083 = vld [vmem:[#allocation3 + $0x20] sm:$0xff]
      %v1084 = vld [vmem:[#allocation3 + $0x28] sm:$0xff]
      %v1085 = vld [vmem:[#allocation3 + $0x30] sm:$0xff]
      %v1086 = vld [vmem:[#allocation3 + $0x38] sm:$0xff]
      %v1087 = vld [vmem:[#allocation3 + $0x40] sm:$0xff]
      %v1088 = vld [vmem:[#allocation3 + $0x48] sm:$0xff]
      %v1089 = vld [vmem:[#allocation3 + $0x50] sm:$0xff]
      %v1090 = vld [vmem:[#allocation3 + $0x58] sm:$0xff]
      %v1091 = vld [vmem:[#allocation3 + $0x60] sm:$0xff]
      %v1092 = vld [vmem:[#allocation3 + $0x68] sm:$0xff]
      %v1093 = vld [vmem:[#allocation3 + $0x70] sm:$0xff]
      %v1094 = vld [vmem:[#allocation3 + $0x78] sm:$0xff]
      %v1095 = vld [vmem:[#allocation3 + $0x80] sm:$0xff]
      %v1096 = vld [vmem:[#allocation3 + $0x88] sm:$0xff]
      %v1097 = vld [vmem:[#allocation3 + $0x90] sm:$0xff]
      %v1098 = vld [vmem:[#allocation3 + $0x98] sm:$0xff]
      %v1099 = vld [vmem:[#allocation3 + $0xa0] sm:$0xff]
      %v1100 = vld [vmem:[#allocation3 + $0xa8] sm:$0xff]
      %v1101 = vld [vmem:[#allocation3 + $0xb0] sm:$0xff]
      %v1102 = vld [vmem:[#allocation3 + $0xb8] sm:$0xff]
      %v1103 = vld [vmem:[#allocation3 + $0xc0] sm:$0xff]
      %v1104 = vld [vmem:[#allocation3 + $0xc8] sm:$0xff]
      %v1105 = vld [vmem:[#allocation3 + $0xd0] sm:$0xff]
      %v1106 = vld [vmem:[#allocation3 + $0xd8] sm:$0xff]
      %v1107 = vld [vmem:[#allocation3 + $0xe0] sm:$0xff]
      %v1108 = vld [vmem:[#allocation3 + $0xe8] sm:$0xff]
      %v1109 = vld [vmem:[#allocation3 + $0xf0] sm:$0xff]
      %v1110 = vld [vmem:[#allocation3 + $0xf8] sm:$0xff]
      %v1111 = vld [vmem:[%s1] sm:$0xff]
      %v1112 = vld [vmem:[%s1 + $0x8] sm:$0xff]
      %v1113 = vld [vmem:[%s1 + $0x10] sm:$0xff]
      %v1114 = vld [vmem:[%s1 + $0x18] sm:$0xff]
      %v1115 = vld [vmem:[%s1 + $0x20] sm:$0xff]
      %v1116 = vld [vmem:[%s1 + $0x28] sm:$0xff]
      %v1117 = vld [vmem:[%s1 + $0x30] sm:$0xff]
      %v1118 = vld [vmem:[%s1 + $0x38] sm:$0xff]
      %v1119 = vld [vmem:[%s1 + $0x40] sm:$0xff]
      %v1120 = vld [vmem:[%s1 + $0x48] sm:$0xff]
      %v1121 = vld [vmem:[%s1 + $0x50] sm:$0xff]
      %v1122 = vld [vmem:[%s1 + $0x58] sm:$0xff]
      %v1123 = vld [vmem:[%s1 + $0x60] sm:$0xff]
      %v1124 = vld [vmem:[%s1 + $0x68] sm:$0xff]
      %v1125 = vld [vmem:[%s1 + $0x70] sm:$0xff]
      %v1126 = vld [vmem:[%s1 + $0x78] sm:$0xff]
      %v1127 = vld [vmem:[%s1 + $0x80] sm:$0xff]
      %v1128 = vld [vmem:[%s1 + $0x88] sm:$0xff]
      %v1129 = vld [vmem:[%s1 + $0x90] sm:$0xff]
      %v1130 = vld [vmem:[%s1 + $0x98] sm:$0xff]
      %v1131 = vld [vmem:[%s1 + $0xa0] sm:$0xff]
      %v1132 = vld [vmem:[%s1 + $0xa8] sm:$0xff]
      %v1133 = vld [vmem:[%s1 + $0xb0] sm:$0xff]
      %v1134 = vld [vmem:[%s1 + $0xb8] sm:$0xff]
      %v1135 = vld [vmem:[%s1 + $0xc0] sm:$0xff]
      %v1136 = vld [vmem:[%s1 + $0xc8] sm:$0xff]
      %v1137 = vld [vmem:[%s1 + $0xd0] sm:$0xff]
      %v1138 = vld [vmem:[%s1 + $0xd8] sm:$0xff]
      %v1139 = vld [vmem:[%s1 + $0xe0] sm:$0xff]
      %v1140 = vld [vmem:[%s1 + $0xe8] sm:$0xff]
      %v1141 = vld [vmem:[%s1 + $0xf0] sm:$0xff]
      %v1142 = vld [vmem:[%s1 + $0xf8] sm:$0xff]
      %v1143 = vld [vmem:[%s1 + $0x100] sm:$0xff]
      %v1144 = vld [vmem:[%s1 + $0x108] sm:$0xff]
      %v1145 = vld [vmem:[%s1 + $0x110] sm:$0xff]
      %v1146 = vld [vmem:[%s1 + $0x118] sm:$0xff]
      %v1147 = vld [vmem:[%s1 + $0x120] sm:$0xff]
      %v1148 = vld [vmem:[%s1 + $0x128] sm:$0xff]
      %v1149 = vld [vmem:[%s1 + $0x130] sm:$0xff]
      %v1150 = vld [vmem:[%s1 + $0x138] sm:$0xff]
      %v1151 = vld [vmem:[%s1 + $0x140] sm:$0xff]
      %v1152 = vld [vmem:[%s1 + $0x148] sm:$0xff]
      %v1153 = vld [vmem:[%s1 + $0x150] sm:$0xff]
      %v1154 = vld [vmem:[%s1 + $0x158] sm:$0xff]
      %v1155 = vld [vmem:[%s1 + $0x160] sm:$0xff]
      %v1156 = vld [vmem:[%s1 + $0x168] sm:$0xff]
      %v1157 = vld [vmem:[%s1 + $0x170] sm:$0xff]
      %v1158 = vld [vmem:[%s1 + $0x178] sm:$0xff]
      %v1159 = vld [vmem:[%s1 + $0x180] sm:$0xff]
      %v1160 = vld [vmem:[%s1 + $0x188] sm:$0xff]
      %v1161 = vld [vmem:[%s1 + $0x190] sm:$0xff]
      %v1162 = vld [vmem:[%s1 + $0x198] sm:$0xff]
      %v1163 = vld [vmem:[%s1 + $0x1a0] sm:$0xff]
      %v1164 = vld [vmem:[%s1 + $0x1a8] sm:$0xff]
      %v1165 = vld [vmem:[%s1 + $0x1b0] sm:$0xff]
      %v1166 = vld [vmem:[%s1 + $0x1b8] sm:$0xff]
      %v1167 = vld [vmem:[%s1 + $0x1c0] sm:$0xff]
      %v1168 = vld [vmem:[%s1 + $0x1c8] sm:$0xff]
      %v1169 = vld [vmem:[%s1 + $0x1d0] sm:$0xff]
      %v1170 = vld [vmem:[%s1 + $0x1d8] sm:$0xff]
      %v1171 = vld [vmem:[%s1 + $0x1e0] sm:$0xff]
      %v1172 = vld [vmem:[%s1 + $0x1e8] sm:$0xff]
      %v1173 = vld [vmem:[%s1 + $0x1f0] sm:$0xff]
      %v1174 = vld [vmem:[%s1 + $0x1f8] sm:$0xff]
      %1175 = vmatprep.subr.mxu0 %v1112
      %1176 = vmatpush1.msra.mxu0 %v1111
      %1177 = vmatprep.subr.mxu0 %v1114
      %1178 = vmatpush1.msra.mxu0 %v1113
      %1179 = vmatprep.subr.mxu0 %v1116
      %1180 = vmatpush1.msra.mxu0 %v1115
      %1181 = vmatprep.subr.mxu0 %v1118
      %1182 = vmatpush1.msra.mxu0 %v1117
      %1183 = vmatprep.subr.mxu0 %v1120
      %1184 = vmatpush1.msra.mxu0 %v1119
      %1185 = vmatprep.subr.mxu0 %v1122
      %1186 = vmatpush1.msra.mxu0 %v1121
      %1187 = vmatprep.subr.mxu0 %v1124
      %1188 = vmatpush1.msra.mxu0 %v1123
      %1189 = vmatprep.subr.mxu0 %v1126
      %1190 = vmatpush1.msra.mxu0 %v1125
      %1191 = vmatprep.subr.mxu0 %v1128
      %1192 = vmatpush1.msra.mxu0 %v1127
      %1193 = vmatprep.subr.mxu0 %v1130
      %1194 = vmatpush1.msra.mxu0 %v1129
      %1195 = vmatprep.subr.mxu0 %v1132
      %1196 = vmatpush1.msra.mxu0 %v1131
      %1197 = vmatprep.subr.mxu0 %v1134
      %1198 = vmatpush1.msra.mxu0 %v1133
      %1199 = vmatprep.subr.mxu0 %v1136
      %1200 = vmatpush1.msra.mxu0 %v1135
      %1201 = vmatprep.subr.mxu0 %v1138
      %1202 = vmatpush1.msra.mxu0 %v1137
      %1203 = vmatprep.subr.mxu0 %v1140
      %1204 = vmatpush1.msra.mxu0 %v1139
      %1205 = vmatprep.subr.mxu0 %v1142
      %1206 = vmatpush1.msra.mxu0 %v1141
      %1207 = vmatprep.subr.mxu0 %v1144
      %1208 = vmatpush1.msra.mxu0 %v1143
      %1209 = vmatprep.subr.mxu0 %v1146
      %1210 = vmatpush1.msra.mxu0 %v1145
      %1211 = vmatprep.subr.mxu0 %v1148
      %1212 = vmatpush1.msra.mxu0 %v1147
      %1213 = vmatprep.subr.mxu0 %v1150
      %1214 = vmatpush1.msra.mxu0 %v1149
      %1215 = vmatprep.subr.mxu0 %v1152
      %1216 = vmatpush1.msra.mxu0 %v1151
      %1217 = vmatprep.subr.mxu0 %v1154
      %1218 = vmatpush1.msra.mxu0 %v1153
      %1219 = vmatprep.subr.mxu0 %v1156
      %1220 = vmatpush1.msra.mxu0 %v1155
      %1221 = vmatprep.subr.mxu0 %v1158
      %1222 = vmatpush1.msra.mxu0 %v1157
      %1223 = vmatprep.subr.mxu0 %v1160
      %1224 = vmatpush1.msra.mxu0 %v1159
      %1225 = vmatprep.subr.mxu0 %v1162
      %1226 = vmatpush1.msra.mxu0 %v1161
      %1227 = vmatprep.subr.mxu0 %v1164
      %1228 = vmatpush1.msra.mxu0 %v1163
      %1229 = vmatprep.subr.mxu0 %v1166
      %1230 = vmatpush1.msra.mxu0 %v1165
      %1231 = vmatprep.subr.mxu0 %v1168
      %1232 = vmatpush1.msra.mxu0 %v1167
      %1233 = vmatprep.subr.mxu0 %v1170
      %1234 = vmatpush1.msra.mxu0 %v1169
      %1235 = vmatprep.subr.mxu0 %v1172
      %1236 = vmatpush1.msra.mxu0 %v1171
      %1237 = vmatprep.subr.mxu0 %v1174
      %1238 = vmatpush1.msra.mxu0 %v1173
      %1239 = vmatprep.mubr.f32.mxu0 %v1080
      %1240 = vmatmul.mubr.f32.gmra.mrb[0].mxu0 %v1079
      %v1241 = vpop.f32.mrb[0].mxu0
      %v1242 = vadd.f32 0.0, %v1241
      %v1243 = vpop.f32.mrb[0].mxu0
      %v1244 = vadd.f32 0.0, %v1243
      %1245 = vmatprep.mubr.f32.mxu0 %v1082
      %1246 = vmatmul.mubr.f32.gmra.mrb[0].mxu0 %v1081
      %v1247 = vpop.f32.mrb[0].mxu0
      %v1248 = vadd.f32 0.0, %v1247
      %v1249 = vpop.f32.mrb[0].mxu0
      %v1250 = vadd.f32 0.0, %v1249
      %1251 = vmatprep.mubr.f32.mxu0 %v1084
      %1252 = vmatmul.mubr.f32.gmra.mrb[0].mxu0 %v1083
      %v1253 = vpop.f32.mrb[0].mxu0
      %v1254 = vadd.f32 0.0, %v1253
      %v1255 = vpop.f32.mrb[0].mxu0
      %v1256 = vadd.f32 0.0, %v1255
      %1257 = vmatprep.mubr.f32.mxu0 %v1086
      %1258 = vmatmul.mubr.f32.gmra.mrb[0].mxu0 %v1085
      %v1259 = vpop.f32.mrb[0].mxu0
      %v1260 = vadd.f32 0.0, %v1259
      %v1261 = vpop.f32.mrb[0].mxu0
      %v1262 = vadd.f32 0.0, %v1261
      %1263 = vmatprep.mubr.f32.mxu0 %v1088
      %1264 = vmatmul.mubr.f32.gmra.mrb[0].mxu0 %v1087
      %v1265 = vpop.f32.mrb[0].mxu0
      %v1266 = vadd.f32 0.0, %v1265
      %v1267 = vpop.f32.mrb[0].mxu0
      %v1268 = vadd.f32 0.0, %v1267
      %1269 = vmatprep.mubr.f32.mxu0 %v1090
      %1270 = vmatmul.mubr.f32.gmra.mrb[0].mxu0 %v1089
      %v1271 = vpop.f32.mrb[0].mxu0
      %v1272 = vadd.f32 0.0, %v1271
      %v1273 = vpop.f32.mrb[0].mxu0
      %v1274 = vadd.f32 0.0, %v1273
      %1275 = vmatprep.mubr.f32.mxu0 %v1092
      %1276 = vmatmul.mubr.f32.gmra.mrb[0].mxu0 %v1091
      %v1277 = vpop.f32.mrb[0].mxu0
      %v1278 = vadd.f32 0.0, %v1277
      %v1279 = vpop.f32.mrb[0].mxu0
      %v1280 = vadd.f32 0.0, %v1279
      %1281 = vmatprep.mubr.f32.mxu0 %v1094
      %1282 = vmatmul.mubr.f32.gmra.mrb[0].mxu0 %v1093
      %v1283 = vpop.f32.mrb[0].mxu0
      %v1284 = vadd.f32 0.0, %v1283
      %v1285 = vpop.f32.mrb[0].mxu0
      %v1286 = vadd.f32 0.0, %v1285
      %1287 = vmatprep.mubr.f32.mxu0 %v1096
      %1288 = vmatmul.mubr.f32.gmra.mrb[0].mxu0 %v1095
      %v1289 = vpop.f32.mrb[0].mxu0
      %v1290 = vadd.f32 0.0, %v1289
      %v1291 = vpop.f32.mrb[0].mxu0
      %v1292 = vadd.f32 0.0, %v1291
      %1293 = vmatprep.mubr.f32.mxu0 %v1098
      %1294 = vmatmul.mubr.f32.gmra.mrb[0].mxu0 %v1097
      %v1295 = vpop.f32.mrb[0].mxu0
      %v1296 = vadd.f32 0.0, %v1295
      %v1297 = vpop.f32.mrb[0].mxu0
      %v1298 = vadd.f32 0.0, %v1297
      %1299 = vmatprep.mubr.f32.mxu0 %v1100
      %1300 = vmatmul.mubr.f32.gmra.mrb[0].mxu0 %v1099
      %v1301 = vpop.f32.mrb[0].mxu0
      %v1302 = vadd.f32 0.0, %v1301
      %v1303 = vpop.f32.mrb[0].mxu0
      %v1304 = vadd.f32 0.0, %v1303
      %1305 = vmatprep.mubr.f32.mxu0 %v1102
      %1306 = vmatmul.mubr.f32.gmra.mrb[0].mxu0 %v1101
      %v1307 = vpop.f32.mrb[0].mxu0
      %v1308 = vadd.f32 0.0, %v1307
      %v1309 = vpop.f32.mrb[0].mxu0
      %v1310 = vadd.f32 0.0, %v1309
      %1311 = vmatprep.mubr.f32.mxu0 %v1104
      %1312 = vmatmul.mubr.f32.gmra.mrb[0].mxu0 %v1103
      %v1313 = vpop.f32.mrb[0].mxu0
      %v1314 = vadd.f32 0.0, %v1313
      %v1315 = vpop.f32.mrb[0].mxu0
      %v1316 = vadd.f32 0.0, %v1315
      %1317 = vmatprep.mubr.f32.mxu0 %v1106
      %1318 = vmatmul.mubr.f32.gmra.mrb[0].mxu0 %v1105
      %v1319 = vpop.f32.mrb[0].mxu0
      %v1320 = vadd.f32 0.0, %v1319
      %v1321 = vpop.f32.mrb[0].mxu0
      %v1322 = vadd.f32 0.0, %v1321
      %1323 = vmatprep.mubr.f32.mxu0 %v1108
      %1324 = vmatmul.mubr.f32.gmra.mrb[0].mxu0 %v1107
      %v1325 = vpop.f32.mrb[0].mxu0
      %v1326 = vadd.f32 0.0, %v1325
      %v1327 = vpop.f32.mrb[0].mxu0
      %v1328 = vadd.f32 0.0, %v1327
      %1329 = vmatprep.mubr.f32.mxu0 %v1110
      %1330 = vmatmul.mubr.f32.gmra.mrb[0].mxu0 %v1109
      %v1331 = vpop.f32.mrb[0].mxu0
      %v1332 = vadd.f32 0.0, %v1331
      %v1333 = vpop.f32.mrb[0].mxu0
      %v1334 = vadd.f32 0.0, %v1333
      %1335 = vdwg.mxu0
      %v1336 = vld [vmem:[#allocation5] sm:$0xff]
      %v1337 = vld [vmem:[#allocation5 + $0x8] sm:$0xff]
      %v1338 = vld [vmem:[#allocation5 + $0x10] sm:$0xff]
      %v1339 = vld [vmem:[#allocation5 + $0x18] sm:$0xff]
      %v1340 = vld [vmem:[#allocation5 + $0x20] sm:$0xff]
      %v1341 = vld [vmem:[#allocation5 + $0x28] sm:$0xff]
      %v1342 = vld [vmem:[#allocation5 + $0x30] sm:$0xff]
      %v1343 = vld [vmem:[#allocation5 + $0x38] sm:$0xff]
      %v1344 = vld [vmem:[#allocation5 + $0x40] sm:$0xff]
      %v1345 = vld [vmem:[#allocation5 + $0x48] sm:$0xff]
      %v1346 = vld [vmem:[#allocation5 + $0x50] sm:$0xff]
      %v1347 = vld [vmem:[#allocation5 + $0x58] sm:$0xff]
      %v1348 = vld [vmem:[#allocation5 + $0x60] sm:$0xff]
      %v1349 = vld [vmem:[#allocation5 + $0x68] sm:$0xff]
      %v1350 = vld [vmem:[#allocation5 + $0x70] sm:$0xff]
      %v1351 = vld [vmem:[#allocation5 + $0x78] sm:$0xff]
      %v1352 = vld [vmem:[#allocation5 + $0x80] sm:$0xff]
      %v1353 = vld [vmem:[#allocation5 + $0x88] sm:$0xff]
      %v1354 = vld [vmem:[#allocation5 + $0x90] sm:$0xff]
      %v1355 = vld [vmem:[#allocation5 + $0x98] sm:$0xff]
      %v1356 = vld [vmem:[#allocation5 + $0xa0] sm:$0xff]
      %v1357 = vld [vmem:[#allocation5 + $0xa8] sm:$0xff]
      %v1358 = vld [vmem:[#allocation5 + $0xb0] sm:$0xff]
      %v1359 = vld [vmem:[#allocation5 + $0xb8] sm:$0xff]
      %v1360 = vld [vmem:[#allocation5 + $0xc0] sm:$0xff]
      %v1361 = vld [vmem:[#allocation5 + $0xc8] sm:$0xff]
      %v1362 = vld [vmem:[#allocation5 + $0xd0] sm:$0xff]
      %v1363 = vld [vmem:[#allocation5 + $0xd8] sm:$0xff]
      %v1364 = vld [vmem:[#allocation5 + $0xe0] sm:$0xff]
      %v1365 = vld [vmem:[#allocation5 + $0xe8] sm:$0xff]
      %v1366 = vld [vmem:[#allocation5 + $0xf0] sm:$0xff]
      %v1367 = vld [vmem:[#allocation5 + $0xf8] sm:$0xff]
      %vm1368 = vcmp.gt.f32.partialorder %v1336, 0.0
      %vm1369 = vcmp.gt.f32.partialorder %v1337, 0.0
      %vm1370 = vcmp.gt.f32.partialorder %v1338, 0.0
      %vm1371 = vcmp.gt.f32.partialorder %v1339, 0.0
      %vm1372 = vcmp.gt.f32.partialorder %v1340, 0.0
      %vm1373 = vcmp.gt.f32.partialorder %v1341, 0.0
      %vm1374 = vcmp.gt.f32.partialorder %v1342, 0.0
      %vm1375 = vcmp.gt.f32.partialorder %v1343, 0.0
      %vm1376 = vcmp.gt.f32.partialorder %v1344, 0.0
      %vm1377 = vcmp.gt.f32.partialorder %v1345, 0.0
      %vm1378 = vcmp.gt.f32.partialorder %v1346, 0.0
      %vm1379 = vcmp.gt.f32.partialorder %v1347, 0.0
      %vm1380 = vcmp.gt.f32.partialorder %v1348, 0.0
      %vm1381 = vcmp.gt.f32.partialorder %v1349, 0.0
      %vm1382 = vcmp.gt.f32.partialorder %v1350, 0.0
      %vm1383 = vcmp.gt.f32.partialorder %v1351, 0.0
      %vm1384 = vcmp.gt.f32.partialorder %v1352, 0.0
      %vm1385 = vcmp.gt.f32.partialorder %v1353, 0.0
      %vm1386 = vcmp.gt.f32.partialorder %v1354, 0.0
      %vm1387 = vcmp.gt.f32.partialorder %v1355, 0.0
      %vm1388 = vcmp.gt.f32.partialorder %v1356, 0.0
      %vm1389 = vcmp.gt.f32.partialorder %v1357, 0.0
      %vm1390 = vcmp.gt.f32.partialorder %v1358, 0.0
      %vm1391 = vcmp.gt.f32.partialorder %v1359, 0.0
      %vm1392 = vcmp.gt.f32.partialorder %v1360, 0.0
      %vm1393 = vcmp.gt.f32.partialorder %v1361, 0.0
      %vm1394 = vcmp.gt.f32.partialorder %v1362, 0.0
      %vm1395 = vcmp.gt.f32.partialorder %v1363, 0.0
      %vm1396 = vcmp.gt.f32.partialorder %v1364, 0.0
      %vm1397 = vcmp.gt.f32.partialorder %v1365, 0.0
      %vm1398 = vcmp.gt.f32.partialorder %v1366, 0.0
      %vm1399 = vcmp.gt.f32.partialorder %v1367, 0.0
      %v1400 = vld [vmem:[#allocation4] sm:$0xff]
      %v1401 = vld [vmem:[#allocation4 + $0x8] sm:$0xff]
      %v1402 = vld [vmem:[#allocation4 + $0x10] sm:$0xff]
      %v1403 = vld [vmem:[#allocation4 + $0x18] sm:$0xff]
      %v1404 = vld [vmem:[#allocation4 + $0x20] sm:$0xff]
      %v1405 = vld [vmem:[#allocation4 + $0x28] sm:$0xff]
      %v1406 = vld [vmem:[#allocation4 + $0x30] sm:$0xff]
      %v1407 = vld [vmem:[#allocation4 + $0x38] sm:$0xff]
      %v1408 = vld [vmem:[#allocation4 + $0x40] sm:$0xff]
      %v1409 = vld [vmem:[#allocation4 + $0x48] sm:$0xff]
      %v1410 = vld [vmem:[#allocation4 + $0x50] sm:$0xff]
      %v1411 = vld [vmem:[#allocation4 + $0x58] sm:$0xff]
      %v1412 = vld [vmem:[#allocation4 + $0x60] sm:$0xff]
      %v1413 = vld [vmem:[#allocation4 + $0x68] sm:$0xff]
      %v1414 = vld [vmem:[#allocation4 + $0x70] sm:$0xff]
      %v1415 = vld [vmem:[#allocation4 + $0x78] sm:$0xff]
      %v1416 = vld [vmem:[#allocation4 + $0x80] sm:$0xff]
      %v1417 = vld [vmem:[#allocation4 + $0x88] sm:$0xff]
      %v1418 = vld [vmem:[#allocation4 + $0x90] sm:$0xff]
      %v1419 = vld [vmem:[#allocation4 + $0x98] sm:$0xff]
      %v1420 = vld [vmem:[#allocation4 + $0xa0] sm:$0xff]
      %v1421 = vld [vmem:[#allocation4 + $0xa8] sm:$0xff]
      %v1422 = vld [vmem:[#allocation4 + $0xb0] sm:$0xff]
      %v1423 = vld [vmem:[#allocation4 + $0xb8] sm:$0xff]
      %v1424 = vld [vmem:[#allocation4 + $0xc0] sm:$0xff]
      %v1425 = vld [vmem:[#allocation4 + $0xc8] sm:$0xff]
      %v1426 = vld [vmem:[#allocation4 + $0xd0] sm:$0xff]
      %v1427 = vld [vmem:[#allocation4 + $0xd8] sm:$0xff]
      %v1428 = vld [vmem:[#allocation4 + $0xe0] sm:$0xff]
      %v1429 = vld [vmem:[#allocation4 + $0xe8] sm:$0xff]
      %v1430 = vld [vmem:[#allocation4 + $0xf0] sm:$0xff]
      %v1431 = vld [vmem:[#allocation4 + $0xf8] sm:$0xff]
      %v1432 = vadd.f32 %v1400, %v1242
      %v1433 = vadd.f32 %v1401, %v1244
      %v1434 = vadd.f32 %v1402, %v1248
      %v1435 = vadd.f32 %v1403, %v1250
      %v1436 = vadd.f32 %v1404, %v1254
      %v1437 = vadd.f32 %v1405, %v1256
      %v1438 = vadd.f32 %v1406, %v1260
      %v1439 = vadd.f32 %v1407, %v1262
      %v1440 = vadd.f32 %v1408, %v1266
      %v1441 = vadd.f32 %v1409, %v1268
      %v1442 = vadd.f32 %v1410, %v1272
      %v1443 = vadd.f32 %v1411, %v1274
      %v1444 = vadd.f32 %v1412, %v1278
      %v1445 = vadd.f32 %v1413, %v1280
      %v1446 = vadd.f32 %v1414, %v1284
      %v1447 = vadd.f32 %v1415, %v1286
      %v1448 = vadd.f32 %v1416, %v1290
      %v1449 = vadd.f32 %v1417, %v1292
      %v1450 = vadd.f32 %v1418, %v1296
      %v1451 = vadd.f32 %v1419, %v1298
      %v1452 = vadd.f32 %v1420, %v1302
      %v1453 = vadd.f32 %v1421, %v1304
      %v1454 = vadd.f32 %v1422, %v1308
      %v1455 = vadd.f32 %v1423, %v1310
      %v1456 = vadd.f32 %v1424, %v1314
      %v1457 = vadd.f32 %v1425, %v1316
      %v1458 = vadd.f32 %v1426, %v1320
      %v1459 = vadd.f32 %v1427, %v1322
      %v1460 = vadd.f32 %v1428, %v1326
      %v1461 = vadd.f32 %v1429, %v1328
      %v1462 = vadd.f32 %v1430, %v1332
      %v1463 = vadd.f32 %v1431, %v1334
      %v1464 = vsel %vm1368, %v1242, %v1432
      %v1465 = vsel %vm1369, %v1244, %v1433
      %v1466 = vsel %vm1370, %v1248, %v1434
      %v1467 = vsel %vm1371, %v1250, %v1435
      %v1468 = vsel %vm1372, %v1254, %v1436
      %v1469 = vsel %vm1373, %v1256, %v1437
      %v1470 = vsel %vm1374, %v1260, %v1438
      %v1471 = vsel %vm1375, %v1262, %v1439
      %v1472 = vsel %vm1376, %v1266, %v1440
      %v1473 = vsel %vm1377, %v1268, %v1441
      %v1474 = vsel %vm1378, %v1272, %v1442
      %v1475 = vsel %vm1379, %v1274, %v1443
      %v1476 = vsel %vm1380, %v1278, %v1444
      %v1477 = vsel %vm1381, %v1280, %v1445
      %v1478 = vsel %vm1382, %v1284, %v1446
      %v1479 = vsel %vm1383, %v1286, %v1447
      %v1480 = vsel %vm1384, %v1290, %v1448
      %v1481 = vsel %vm1385, %v1292, %v1449
      %v1482 = vsel %vm1386, %v1296, %v1450
      %v1483 = vsel %vm1387, %v1298, %v1451
      %v1484 = vsel %vm1388, %v1302, %v1452
      %v1485 = vsel %vm1389, %v1304, %v1453
      %v1486 = vsel %vm1390, %v1308, %v1454
      %v1487 = vsel %vm1391, %v1310, %v1455
      %v1488 = vsel %vm1392, %v1314, %v1456
      %v1489 = vsel %vm1393, %v1316, %v1457
      %v1490 = vsel %vm1394, %v1320, %v1458
      %v1491 = vsel %vm1395, %v1322, %v1459
      %v1492 = vsel %vm1396, %v1326, %v1460
      %v1493 = vsel %vm1397, %v1328, %v1461
      %v1494 = vsel %vm1398, %v1332, %v1462
      %v1495 = vsel %vm1399, %v1334, %v1463
      %v1496 = vsub.f32 %v1464, 0.2
      %v1497 = vsub.f32 %v1465, 0.2
      %v1498 = vsub.f32 %v1466, 0.2
      %v1499 = vsub.f32 %v1467, 0.2
      %v1500 = vsub.f32 %v1468, 0.2
      %v1501 = vsub.f32 %v1469, 0.2
      %v1502 = vsub.f32 %v1470, 0.2
      %v1503 = vsub.f32 %v1471, 0.2
      %v1504 = vsub.f32 %v1472, 0.2
      %v1505 = vsub.f32 %v1473, 0.2
      %v1506 = vsub.f32 %v1474, 0.2
      %v1507 = vsub.f32 %v1475, 0.2
      %v1508 = vsub.f32 %v1476, 0.2
      %v1509 = vsub.f32 %v1477, 0.2
      %v1510 = vsub.f32 %v1478, 0.2
      %v1511 = vsub.f32 %v1479, 0.2
      %v1512 = vsub.f32 %v1480, 0.2
      %v1513 = vsub.f32 %v1481, 0.2
      %v1514 = vsub.f32 %v1482, 0.2
      %v1515 = vsub.f32 %v1483, 0.2
      %v1516 = vsub.f32 %v1484, 0.2
      %v1517 = vsub.f32 %v1485, 0.2
      %v1518 = vsub.f32 %v1486, 0.2
      %v1519 = vsub.f32 %v1487, 0.2
      %v1520 = vsub.f32 %v1488, 0.2
      %v1521 = vsub.f32 %v1489, 0.2
      %v1522 = vsub.f32 %v1490, 0.2
      %v1523 = vsub.f32 %v1491, 0.2
      %v1524 = vsub.f32 %v1492, 0.2
      %v1525 = vsub.f32 %v1493, 0.2
      %v1526 = vsub.f32 %v1494, 0.2
      %v1527 = vsub.f32 %v1495, 0.2
      %vm1528 = vcmp.gt.f32.partialorder %v1496, 0.0
      %vm1529 = vcmp.gt.f32.partialorder %v1497, 0.0
      %vm1530 = vcmp.gt.f32.partialorder %v1498, 0.0
      %vm1531 = vcmp.gt.f32.partialorder %v1499, 0.0
      %vm1532 = vcmp.gt.f32.partialorder %v1500, 0.0
      %vm1533 = vcmp.gt.f32.partialorder %v1501, 0.0
      %vm1534 = vcmp.gt.f32.partialorder %v1502, 0.0
      %vm1535 = vcmp.gt.f32.partialorder %v1503, 0.0
      %vm1536 = vcmp.gt.f32.partialorder %v1504, 0.0
      %vm1537 = vcmp.gt.f32.partialorder %v1505, 0.0
      %vm1538 = vcmp.gt.f32.partialorder %v1506, 0.0
      %vm1539 = vcmp.gt.f32.partialorder %v1507, 0.0
      %vm1540 = vcmp.gt.f32.partialorder %v1508, 0.0
      %vm1541 = vcmp.gt.f32.partialorder %v1509, 0.0
      %vm1542 = vcmp.gt.f32.partialorder %v1510, 0.0
      %vm1543 = vcmp.gt.f32.partialorder %v1511, 0.0
      %vm1544 = vcmp.gt.f32.partialorder %v1512, 0.0
      %vm1545 = vcmp.gt.f32.partialorder %v1513, 0.0
      %vm1546 = vcmp.gt.f32.partialorder %v1514, 0.0
      %vm1547 = vcmp.gt.f32.partialorder %v1515, 0.0
      %vm1548 = vcmp.gt.f32.partialorder %v1516, 0.0
      %vm1549 = vcmp.gt.f32.partialorder %v1517, 0.0
      %vm1550 = vcmp.gt.f32.partialorder %v1518, 0.0
      %vm1551 = vcmp.gt.f32.partialorder %v1519, 0.0
      %vm1552 = vcmp.gt.f32.partialorder %v1520, 0.0
      %vm1553 = vcmp.gt.f32.partialorder %v1521, 0.0
      %vm1554 = vcmp.gt.f32.partialorder %v1522, 0.0
      %vm1555 = vcmp.gt.f32.partialorder %v1523, 0.0
      %vm1556 = vcmp.gt.f32.partialorder %v1524, 0.0
      %vm1557 = vcmp.gt.f32.partialorder %v1525, 0.0
      %vm1558 = vcmp.gt.f32.partialorder %v1526, 0.0
      %vm1559 = vcmp.gt.f32.partialorder %v1527, 0.0
      %v1560 = vsel %vm1528, 1.0, 0.0
      %v1561 = vsel %vm1529, 1.0, 0.0
      %v1562 = vsel %vm1530, 1.0, 0.0
      %v1563 = vsel %vm1531, 1.0, 0.0
      %v1564 = vsel %vm1532, 1.0, 0.0
      %v1565 = vsel %vm1533, 1.0, 0.0
      %v1566 = vsel %vm1534, 1.0, 0.0
      %v1567 = vsel %vm1535, 1.0, 0.0
      %v1568 = vsel %vm1536, 1.0, 0.0
      %v1569 = vsel %vm1537, 1.0, 0.0
      %v1570 = vsel %vm1538, 1.0, 0.0
      %v1571 = vsel %vm1539, 1.0, 0.0
      %v1572 = vsel %vm1540, 1.0, 0.0
      %v1573 = vsel %vm1541, 1.0, 0.0
      %v1574 = vsel %vm1542, 1.0, 0.0
      %v1575 = vsel %vm1543, 1.0, 0.0
      %v1576 = vsel %vm1544, 1.0, 0.0
      %v1577 = vsel %vm1545, 1.0, 0.0
      %v1578 = vsel %vm1546, 1.0, 0.0
      %v1579 = vsel %vm1547, 1.0, 0.0
      %v1580 = vsel %vm1548, 1.0, 0.0
      %v1581 = vsel %vm1549, 1.0, 0.0
      %v1582 = vsel %vm1550, 1.0, 0.0
      %v1583 = vsel %vm1551, 1.0, 0.0
      %v1584 = vsel %vm1552, 1.0, 0.0
      %v1585 = vsel %vm1553, 1.0, 0.0
      %v1586 = vsel %vm1554, 1.0, 0.0
      %v1587 = vsel %vm1555, 1.0, 0.0
      %v1588 = vsel %vm1556, 1.0, 0.0
      %v1589 = vsel %vm1557, 1.0, 0.0
      %v1590 = vsel %vm1558, 1.0, 0.0
      %v1591 = vsel %vm1559, 1.0, 0.0
      %v1593 = vlaneseq
      %v1594 = vshrl.u32 %v1593, 7
      %v1595 = vsub.s32 0, %v1594
      %v1596 = vrot.slane %v587, %v1595
      %v1597 = vlaneseq
      %v1598 = vshrl.u32 %v1597, 7
      %v1599 = vsub.s32 1, %v1598
      %v1600 = vrot.slane %v587, %v1599
      %v1603 = vmul.f32 %v1560, %v1596
      %v1604 = vmul.f32 %v1561, %v1600
      %v1605 = vmul.f32 %v1562, %v1596
      %v1606 = vmul.f32 %v1563, %v1600
      %v1607 = vmul.f32 %v1564, %v1596
      %v1608 = vmul.f32 %v1565, %v1600
      %v1609 = vmul.f32 %v1566, %v1596
      %v1610 = vmul.f32 %v1567, %v1600
      %v1611 = vmul.f32 %v1568, %v1596
      %v1612 = vmul.f32 %v1569, %v1600
      %v1613 = vmul.f32 %v1570, %v1596
      %v1614 = vmul.f32 %v1571, %v1600
      %v1615 = vmul.f32 %v1572, %v1596
      %v1616 = vmul.f32 %v1573, %v1600
      %v1617 = vmul.f32 %v1574, %v1596
      %v1618 = vmul.f32 %v1575, %v1600
      %v1619 = vmul.f32 %v1576, %v1596
      %v1620 = vmul.f32 %v1577, %v1600
      %v1621 = vmul.f32 %v1578, %v1596
      %v1622 = vmul.f32 %v1579, %v1600
      %v1623 = vmul.f32 %v1580, %v1596
      %v1624 = vmul.f32 %v1581, %v1600
      %v1625 = vmul.f32 %v1582, %v1596
      %v1626 = vmul.f32 %v1583, %v1600
      %v1627 = vmul.f32 %v1584, %v1596
      %v1628 = vmul.f32 %v1585, %v1600
      %v1629 = vmul.f32 %v1586, %v1596
      %v1630 = vmul.f32 %v1587, %v1600
      %v1631 = vmul.f32 %v1588, %v1596
      %v1632 = vmul.f32 %v1589, %v1600
      %v1633 = vmul.f32 %v1590, %v1596
      %v1634 = vmul.f32 %v1591, %v1600
      %1635 = vst [vmem:[#allocation4] sm:$0xff] %v1464
      %1636 = vst [vmem:[#allocation4 + $0x8] sm:$0xff] %v1465
      %1637 = vst [vmem:[#allocation4 + $0x10] sm:$0xff] %v1466
      %1638 = vst [vmem:[#allocation4 + $0x18] sm:$0xff] %v1467
      %1639 = vst [vmem:[#allocation4 + $0x20] sm:$0xff] %v1468
      %1640 = vst [vmem:[#allocation4 + $0x28] sm:$0xff] %v1469
      %1641 = vst [vmem:[#allocation4 + $0x30] sm:$0xff] %v1470
      %1642 = vst [vmem:[#allocation4 + $0x38] sm:$0xff] %v1471
      %1643 = vst [vmem:[#allocation4 + $0x40] sm:$0xff] %v1472
      %1644 = vst [vmem:[#allocation4 + $0x48] sm:$0xff] %v1473
      %1645 = vst [vmem:[#allocation4 + $0x50] sm:$0xff] %v1474
      %1646 = vst [vmem:[#allocation4 + $0x58] sm:$0xff] %v1475
      %1647 = vst [vmem:[#allocation4 + $0x60] sm:$0xff] %v1476
      %1648 = vst [vmem:[#allocation4 + $0x68] sm:$0xff] %v1477
      %1649 = vst [vmem:[#allocation4 + $0x70] sm:$0xff] %v1478
      %1650 = vst [vmem:[#allocation4 + $0x78] sm:$0xff] %v1479
      %1651 = vst [vmem:[#allocation4 + $0x80] sm:$0xff] %v1480
      %1652 = vst [vmem:[#allocation4 + $0x88] sm:$0xff] %v1481
      %1653 = vst [vmem:[#allocation4 + $0x90] sm:$0xff] %v1482
      %1654 = vst [vmem:[#allocation4 + $0x98] sm:$0xff] %v1483
      %1655 = vst [vmem:[#allocation4 + $0xa0] sm:$0xff] %v1484
      %1656 = vst [vmem:[#allocation4 + $0xa8] sm:$0xff] %v1485
      %1657 = vst [vmem:[#allocation4 + $0xb0] sm:$0xff] %v1486
      %1658 = vst [vmem:[#allocation4 + $0xb8] sm:$0xff] %v1487
      %1659 = vst [vmem:[#allocation4 + $0xc0] sm:$0xff] %v1488
      %1660 = vst [vmem:[#allocation4 + $0xc8] sm:$0xff] %v1489
      %1661 = vst [vmem:[#allocation4 + $0xd0] sm:$0xff] %v1490
      %1662 = vst [vmem:[#allocation4 + $0xd8] sm:$0xff] %v1491
      %1663 = vst [vmem:[#allocation4 + $0xe0] sm:$0xff] %v1492
      %1664 = vst [vmem:[#allocation4 + $0xe8] sm:$0xff] %v1493
      %1665 = vst [vmem:[#allocation4 + $0xf0] sm:$0xff] %v1494
      %1666 = vst [vmem:[#allocation4 + $0xf8] sm:$0xff] %v1495
      %1667 = vst [vmem:[#allocation5] sm:$0xff] %v1603
      %1668 = vst [vmem:[#allocation5 + $0x8] sm:$0xff] %v1604
      %1669 = vst [vmem:[#allocation5 + $0x10] sm:$0xff] %v1605
      %1670 = vst [vmem:[#allocation5 + $0x18] sm:$0xff] %v1606
      %1671 = vst [vmem:[#allocation5 + $0x20] sm:$0xff] %v1607
      %1672 = vst [vmem:[#allocation5 + $0x28] sm:$0xff] %v1608
      %1673 = vst [vmem:[#allocation5 + $0x30] sm:$0xff] %v1609
      %1674 = vst [vmem:[#allocation5 + $0x38] sm:$0xff] %v1610
      %1675 = vst [vmem:[#allocation5 + $0x40] sm:$0xff] %v1611
      %1676 = vst [vmem:[#allocation5 + $0x48] sm:$0xff] %v1612
      %1677 = vst [vmem:[#allocation5 + $0x50] sm:$0xff] %v1613
      %1678 = vst [vmem:[#allocation5 + $0x58] sm:$0xff] %v1614
      %1679 = vst [vmem:[#allocation5 + $0x60] sm:$0xff] %v1615
      %1680 = vst [vmem:[#allocation5 + $0x68] sm:$0xff] %v1616
      %1681 = vst [vmem:[#allocation5 + $0x70] sm:$0xff] %v1617
      %1682 = vst [vmem:[#allocation5 + $0x78] sm:$0xff] %v1618
      %1683 = vst [vmem:[#allocation5 + $0x80] sm:$0xff] %v1619
      %1684 = vst [vmem:[#allocation5 + $0x88] sm:$0xff] %v1620
      %1685 = vst [vmem:[#allocation5 + $0x90] sm:$0xff] %v1621
      %1686 = vst [vmem:[#allocation5 + $0x98] sm:$0xff] %v1622
      %1687 = vst [vmem:[#allocation5 + $0xa0] sm:$0xff] %v1623
      %1688 = vst [vmem:[#allocation5 + $0xa8] sm:$0xff] %v1624
      %1689 = vst [vmem:[#allocation5 + $0xb0] sm:$0xff] %v1625
      %1690 = vst [vmem:[#allocation5 + $0xb8] sm:$0xff] %v1626
      %1691 = vst [vmem:[#allocation5 + $0xc0] sm:$0xff] %v1627
      %1692 = vst [vmem:[#allocation5 + $0xc8] sm:$0xff] %v1628
      %1693 = vst [vmem:[#allocation5 + $0xd0] sm:$0xff] %v1629
      %1694 = vst [vmem:[#allocation5 + $0xd8] sm:$0xff] %v1630
      %1695 = vst [vmem:[#allocation5 + $0xe0] sm:$0xff] %v1631
      %1696 = vst [vmem:[#allocation5 + $0xe8] sm:$0xff] %v1632
      %1697 = vst [vmem:[#allocation5 + $0xf0] sm:$0xff] %v1633
      %1698 = vst [vmem:[#allocation5 + $0xf8] sm:$0xff] %v1634
      %v1699 = vld [vmem:[%s334] sm:$0xff]
      %v1700 = vld [vmem:[%s334 + $0x8] sm:$0xff]
      %v1701 = vld [vmem:[%s334 + $0x10] sm:$0xff]
      %v1702 = vld [vmem:[%s334 + $0x18] sm:$0xff]
      %v1703 = vld [vmem:[%s334 + $0x20] sm:$0xff]
      %v1704 = vld [vmem:[%s334 + $0x28] sm:$0xff]
      %v1705 = vld [vmem:[%s334 + $0x30] sm:$0xff]
      %v1706 = vld [vmem:[%s334 + $0x38] sm:$0xff]
      %v1707 = vld [vmem:[%s334 + $0x40] sm:$0xff]
      %v1708 = vld [vmem:[%s334 + $0x48] sm:$0xff]
      %v1709 = vld [vmem:[%s334 + $0x50] sm:$0xff]
      %v1710 = vld [vmem:[%s334 + $0x58] sm:$0xff]
      %v1711 = vld [vmem:[%s334 + $0x60] sm:$0xff]
      %v1712 = vld [vmem:[%s334 + $0x68] sm:$0xff]
      %v1713 = vld [vmem:[%s334 + $0x70] sm:$0xff]
      %v1714 = vld [vmem:[%s334 + $0x78] sm:$0xff]
      %v1715 = vld [vmem:[%s334 + $0x80] sm:$0xff]
      %v1716 = vld [vmem:[%s334 + $0x88] sm:$0xff]
      %v1717 = vld [vmem:[%s334 + $0x90] sm:$0xff]
      %v1718 = vld [vmem:[%s334 + $0x98] sm:$0xff]
      %v1719 = vld [vmem:[%s334 + $0xa0] sm:$0xff]
      %v1720 = vld [vmem:[%s334 + $0xa8] sm:$0xff]
      %v1721 = vld [vmem:[%s334 + $0xb0] sm:$0xff]
      %v1722 = vld [vmem:[%s334 + $0xb8] sm:$0xff]
      %v1723 = vld [vmem:[%s334 + $0xc0] sm:$0xff]
      %v1724 = vld [vmem:[%s334 + $0xc8] sm:$0xff]
      %v1725 = vld [vmem:[%s334 + $0xd0] sm:$0xff]
      %v1726 = vld [vmem:[%s334 + $0xd8] sm:$0xff]
      %v1727 = vld [vmem:[%s334 + $0xe0] sm:$0xff]
      %v1728 = vld [vmem:[%s334 + $0xe8] sm:$0xff]
      %v1729 = vld [vmem:[%s334 + $0xf0] sm:$0xff]
      %v1730 = vld [vmem:[%s334 + $0xf8] sm:$0xff]
      %v1731 = vadd.f32 %v1699, %v1603
      %v1732 = vadd.f32 %v1700, %v1604
      %v1733 = vadd.f32 %v1701, %v1605
      %v1734 = vadd.f32 %v1702, %v1606
      %v1735 = vadd.f32 %v1703, %v1607
      %v1736 = vadd.f32 %v1704, %v1608
      %v1737 = vadd.f32 %v1705, %v1609
      %v1738 = vadd.f32 %v1706, %v1610
      %v1739 = vadd.f32 %v1707, %v1611
      %v1740 = vadd.f32 %v1708, %v1612
      %v1741 = vadd.f32 %v1709, %v1613
      %v1742 = vadd.f32 %v1710, %v1614
      %v1743 = vadd.f32 %v1711, %v1615
      %v1744 = vadd.f32 %v1712, %v1616
      %v1745 = vadd.f32 %v1713, %v1617
      %v1746 = vadd.f32 %v1714, %v1618
      %v1747 = vadd.f32 %v1715, %v1619
      %v1748 = vadd.f32 %v1716, %v1620
      %v1749 = vadd.f32 %v1717, %v1621
      %v1750 = vadd.f32 %v1718, %v1622
      %v1751 = vadd.f32 %v1719, %v1623
      %v1752 = vadd.f32 %v1720, %v1624
      %v1753 = vadd.f32 %v1721, %v1625
      %v1754 = vadd.f32 %v1722, %v1626
      %v1755 = vadd.f32 %v1723, %v1627
      %v1756 = vadd.f32 %v1724, %v1628
      %v1757 = vadd.f32 %v1725, %v1629
      %v1758 = vadd.f32 %v1726, %v1630
      %v1759 = vadd.f32 %v1727, %v1631
      %v1760 = vadd.f32 %v1728, %v1632
      %v1761 = vadd.f32 %v1729, %v1633
      %v1762 = vadd.f32 %v1730, %v1634
      %1763 = vst [vmem:[%s334] sm:$0xff] %v1731
      %1764 = vst [vmem:[%s334 + $0x8] sm:$0xff] %v1732
      %1765 = vst [vmem:[%s334 + $0x10] sm:$0xff] %v1733
      %1766 = vst [vmem:[%s334 + $0x18] sm:$0xff] %v1734
      %1767 = vst [vmem:[%s334 + $0x20] sm:$0xff] %v1735
      %1768 = vst [vmem:[%s334 + $0x28] sm:$0xff] %v1736
      %1769 = vst [vmem:[%s334 + $0x30] sm:$0xff] %v1737
      %1770 = vst [vmem:[%s334 + $0x38] sm:$0xff] %v1738
      %1771 = vst [vmem:[%s334 + $0x40] sm:$0xff] %v1739
      %1772 = vst [vmem:[%s334 + $0x48] sm:$0xff] %v1740
      %1773 = vst [vmem:[%s334 + $0x50] sm:$0xff] %v1741
      %1774 = vst [vmem:[%s334 + $0x58] sm:$0xff] %v1742
      %1775 = vst [vmem:[%s334 + $0x60] sm:$0xff] %v1743
      %1776 = vst [vmem:[%s334 + $0x68] sm:$0xff] %v1744
      %1777 = vst [vmem:[%s334 + $0x70] sm:$0xff] %v1745
      %1778 = vst [vmem:[%s334 + $0x78] sm:$0xff] %v1746
      %1779 = vst [vmem:[%s334 + $0x80] sm:$0xff] %v1747
      %1780 = vst [vmem:[%s334 + $0x88] sm:$0xff] %v1748
      %1781 = vst [vmem:[%s334 + $0x90] sm:$0xff] %v1749
      %1782 = vst [vmem:[%s334 + $0x98] sm:$0xff] %v1750
      %1783 = vst [vmem:[%s334 + $0xa0] sm:$0xff] %v1751
      %1784 = vst [vmem:[%s334 + $0xa8] sm:$0xff] %v1752
      %1785 = vst [vmem:[%s334 + $0xb0] sm:$0xff] %v1753
      %1786 = vst [vmem:[%s334 + $0xb8] sm:$0xff] %v1754
      %1787 = vst [vmem:[%s334 + $0xc0] sm:$0xff] %v1755
      %1788 = vst [vmem:[%s334 + $0xc8] sm:$0xff] %v1756
      %1789 = vst [vmem:[%s334 + $0xd0] sm:$0xff] %v1757
      %1790 = vst [vmem:[%s334 + $0xd8] sm:$0xff] %v1758
      %1791 = vst [vmem:[%s334 + $0xe0] sm:$0xff] %v1759
      %1792 = vst [vmem:[%s334 + $0xe8] sm:$0xff] %v1760
      %1793 = vst [vmem:[%s334 + $0xf0] sm:$0xff] %v1761
      %1794 = vst [vmem:[%s334 + $0xf8] sm:$0xff] %v1762
      %v1795 = vld [vmem:[#allocation5] sm:$0xff]
      %v1796 = vld [vmem:[#allocation5 + $0x8] sm:$0xff]
      %v1797 = vld [vmem:[#allocation5 + $0x10] sm:$0xff]
      %v1798 = vld [vmem:[#allocation5 + $0x18] sm:$0xff]
      %v1799 = vld [vmem:[#allocation5 + $0x20] sm:$0xff]
      %v1800 = vld [vmem:[#allocation5 + $0x28] sm:$0xff]
      %v1801 = vld [vmem:[#allocation5 + $0x30] sm:$0xff]
      %v1802 = vld [vmem:[#allocation5 + $0x38] sm:$0xff]
      %v1803 = vld [vmem:[#allocation5 + $0x40] sm:$0xff]
      %v1804 = vld [vmem:[#allocation5 + $0x48] sm:$0xff]
      %v1805 = vld [vmem:[#allocation5 + $0x50] sm:$0xff]
      %v1806 = vld [vmem:[#allocation5 + $0x58] sm:$0xff]
      %v1807 = vld [vmem:[#allocation5 + $0x60] sm:$0xff]
      %v1808 = vld [vmem:[#allocation5 + $0x68] sm:$0xff]
      %v1809 = vld [vmem:[#allocation5 + $0x70] sm:$0xff]
      %v1810 = vld [vmem:[#allocation5 + $0x78] sm:$0xff]
      %v1811 = vld [vmem:[#allocation5 + $0x80] sm:$0xff]
      %v1812 = vld [vmem:[#allocation5 + $0x88] sm:$0xff]
      %v1813 = vld [vmem:[#allocation5 + $0x90] sm:$0xff]
      %v1814 = vld [vmem:[#allocation5 + $0x98] sm:$0xff]
      %v1815 = vld [vmem:[#allocation5 + $0xa0] sm:$0xff]
      %v1816 = vld [vmem:[#allocation5 + $0xa8] sm:$0xff]
      %v1817 = vld [vmem:[#allocation5 + $0xb0] sm:$0xff]
      %v1818 = vld [vmem:[#allocation5 + $0xb8] sm:$0xff]
      %v1819 = vld [vmem:[#allocation5 + $0xc0] sm:$0xff]
      %v1820 = vld [vmem:[#allocation5 + $0xc8] sm:$0xff]
      %v1821 = vld [vmem:[#allocation5 + $0xd0] sm:$0xff]
      %v1822 = vld [vmem:[#allocation5 + $0xd8] sm:$0xff]
      %v1823 = vld [vmem:[#allocation5 + $0xe0] sm:$0xff]
      %v1824 = vld [vmem:[#allocation5 + $0xe8] sm:$0xff]
      %v1825 = vld [vmem:[#allocation5 + $0xf0] sm:$0xff]
      %v1826 = vld [vmem:[#allocation5 + $0xf8] sm:$0xff]
      %v1827 = vld [vmem:[%s2] sm:$0xff]
      %v1828 = vld [vmem:[%s2 + $0x8] sm:$0xff]
      %v1829 = vld [vmem:[%s2 + $0x10] sm:$0xff]
      %v1830 = vld [vmem:[%s2 + $0x18] sm:$0xff]
      %v1831 = vld [vmem:[%s2 + $0x20] sm:$0xff]
      %v1832 = vld [vmem:[%s2 + $0x28] sm:$0xff]
      %v1833 = vld [vmem:[%s2 + $0x30] sm:$0xff]
      %v1834 = vld [vmem:[%s2 + $0x38] sm:$0xff]
      %v1835 = vld [vmem:[%s2 + $0x40] sm:$0xff]
      %v1836 = vld [vmem:[%s2 + $0x48] sm:$0xff]
      %v1837 = vld [vmem:[%s2 + $0x50] sm:$0xff]
      %v1838 = vld [vmem:[%s2 + $0x58] sm:$0xff]
      %v1839 = vld [vmem:[%s2 + $0x60] sm:$0xff]
      %v1840 = vld [vmem:[%s2 + $0x68] sm:$0xff]
      %v1841 = vld [vmem:[%s2 + $0x70] sm:$0xff]
      %v1842 = vld [vmem:[%s2 + $0x78] sm:$0xff]
      %v1843 = vld [vmem:[%s2 + $0x80] sm:$0xff]
      %v1844 = vld [vmem:[%s2 + $0x88] sm:$0xff]
      %v1845 = vld [vmem:[%s2 + $0x90] sm:$0xff]
      %v1846 = vld [vmem:[%s2 + $0x98] sm:$0xff]
      %v1847 = vld [vmem:[%s2 + $0xa0] sm:$0xff]
      %v1848 = vld [vmem:[%s2 + $0xa8] sm:$0xff]
      %v1849 = vld [vmem:[%s2 + $0xb0] sm:$0xff]
      %v1850 = vld [vmem:[%s2 + $0xb8] sm:$0xff]
      %v1851 = vld [vmem:[%s2 + $0xc0] sm:$0xff]
      %v1852 = vld [vmem:[%s2 + $0xc8] sm:$0xff]
      %v1853 = vld [vmem:[%s2 + $0xd0] sm:$0xff]
      %v1854 = vld [vmem:[%s2 + $0xd8] sm:$0xff]
      %v1855 = vld [vmem:[%s2 + $0xe0] sm:$0xff]
      %v1856 = vld [vmem:[%s2 + $0xe8] sm:$0xff]
      %v1857 = vld [vmem:[%s2 + $0xf0] sm:$0xff]
      %v1858 = vld [vmem:[%s2 + $0xf8] sm:$0xff]
      %1859 = vmatprep.subr.mxu0 0.0
      %1860 = vmatpush1.msra.mxu0 %v1827
      %1861 = vmatprep.subr.mxu0 0.0
      %1862 = vmatpush1.msra.mxu0 %v1828
      %1863 = vmatprep.subr.mxu0 0.0
      %1864 = vmatpush1.msra.mxu0 %v1829
      %1865 = vmatprep.subr.mxu0 0.0
      %1866 = vmatpush1.msra.mxu0 %v1830
      %1867 = vmatprep.subr.mxu0 0.0
      %1868 = vmatpush1.msra.mxu0 %v1831
      %1869 = vmatprep.subr.mxu0 0.0
      %1870 = vmatpush1.msra.mxu0 %v1832
      %1871 = vmatprep.subr.mxu0 0.0
      %1872 = vmatpush1.msra.mxu0 %v1833
      %1873 = vmatprep.subr.mxu0 0.0
      %1874 = vmatpush1.msra.mxu0 %v1834
      %1875 = vmatprep.subr.mxu0 0.0
      %1876 = vmatpush1.msra.mxu0 %v1835
      %1877 = vmatprep.subr.mxu0 0.0
      %1878 = vmatpush1.msra.mxu0 %v1836
      %1879 = vmatprep.subr.mxu0 0.0
      %1880 = vmatpush1.msra.mxu0 %v1837
      %1881 = vmatprep.subr.mxu0 0.0
      %1882 = vmatpush1.msra.mxu0 %v1838
      %1883 = vmatprep.subr.mxu0 0.0
      %1884 = vmatpush1.msra.mxu0 %v1839
      %1885 = vmatprep.subr.mxu0 0.0
      %1886 = vmatpush1.msra.mxu0 %v1840
      %1887 = vmatprep.subr.mxu0 0.0
      %1888 = vmatpush1.msra.mxu0 %v1841
      %1889 = vmatprep.subr.mxu0 0.0
      %1890 = vmatpush1.msra.mxu0 %v1842
      %1891 = vmatprep.subr.mxu0 0.0
      %1892 = vmatpush1.msra.mxu0 %v1843
      %1893 = vmatprep.subr.mxu0 0.0
      %1894 = vmatpush1.msra.mxu0 %v1844
      %1895 = vmatprep.subr.mxu0 0.0
      %1896 = vmatpush1.msra.mxu0 %v1845
      %1897 = vmatprep.subr.mxu0 0.0
      %1898 = vmatpush1.msra.mxu0 %v1846
      %1899 = vmatprep.subr.mxu0 0.0
      %1900 = vmatpush1.msra.mxu0 %v1847
      %1901 = vmatprep.subr.mxu0 0.0
      %1902 = vmatpush1.msra.mxu0 %v1848
      %1903 = vmatprep.subr.mxu0 0.0
      %1904 = vmatpush1.msra.mxu0 %v1849
      %1905 = vmatprep.subr.mxu0 0.0
      %1906 = vmatpush1.msra.mxu0 %v1850
      %1907 = vmatprep.subr.mxu0 0.0
      %1908 = vmatpush1.msra.mxu0 %v1851
      %1909 = vmatprep.subr.mxu0 0.0
      %1910 = vmatpush1.msra.mxu0 %v1852
      %1911 = vmatprep.subr.mxu0 0.0
      %1912 = vmatpush1.msra.mxu0 %v1853
      %1913 = vmatprep.subr.mxu0 0.0
      %1914 = vmatpush1.msra.mxu0 %v1854
      %1915 = vmatprep.subr.mxu0 0.0
      %1916 = vmatpush1.msra.mxu0 %v1855
      %1917 = vmatprep.subr.mxu0 0.0
      %1918 = vmatpush1.msra.mxu0 %v1856
      %1919 = vmatprep.subr.mxu0 0.0
      %1920 = vmatpush1.msra.mxu0 %v1857
      %1921 = vmatprep.subr.mxu0 0.0
      %1922 = vmatpush1.msra.mxu0 %v1858
      %1923 = vmatprep.mubr.f32.mxu0 %v1796
      %1924 = vmatmul.mubr.f32.gmra.mrb[0].mxu0 %v1795
      %v1925 = vpop.f32.mrb[0].mxu0
      %v1926 = vadd.f32 0.0, %v1925
      %v1927 = vpop.f32.mrb[0].mxu0
      %1928 = vmatprep.mubr.f32.mxu0 %v1798
      %1929 = vmatmul.mubr.f32.gmra.mrb[0].mxu0 %v1797
      %v1930 = vpop.f32.mrb[0].mxu0
      %v1931 = vadd.f32 0.0, %v1930
      %v1932 = vpop.f32.mrb[0].mxu0
      %1933 = vmatprep.mubr.f32.mxu0 %v1800
      %1934 = vmatmul.mubr.f32.gmra.mrb[0].mxu0 %v1799
      %v1935 = vpop.f32.mrb[0].mxu0
      %v1936 = vadd.f32 0.0, %v1935
      %v1937 = vpop.f32.mrb[0].mxu0
      %1938 = vmatprep.mubr.f32.mxu0 %v1802
      %1939 = vmatmul.mubr.f32.gmra.mrb[0].mxu0 %v1801
      %v1940 = vpop.f32.mrb[0].mxu0
      %v1941 = vadd.f32 0.0, %v1940
      %v1942 = vpop.f32.mrb[0].mxu0
      %1943 = vmatprep.mubr.f32.mxu0 %v1804
      %1944 = vmatmul.mubr.f32.gmra.mrb[0].mxu0 %v1803
      %v1945 = vpop.f32.mrb[0].mxu0
      %v1946 = vadd.f32 0.0, %v1945
      %v1947 = vpop.f32.mrb[0].mxu0
      %1948 = vmatprep.mubr.f32.mxu0 %v1806
      %1949 = vmatmul.mubr.f32.gmra.mrb[0].mxu0 %v1805
      %v1950 = vpop.f32.mrb[0].mxu0
      %v1951 = vadd.f32 0.0, %v1950
      %v1952 = vpop.f32.mrb[0].mxu0
      %1953 = vmatprep.mubr.f32.mxu0 %v1808
      %1954 = vmatmul.mubr.f32.gmra.mrb[0].mxu0 %v1807
      %v1955 = vpop.f32.mrb[0].mxu0
      %v1956 = vadd.f32 0.0, %v1955
      %v1957 = vpop.f32.mrb[0].mxu0
      %1958 = vmatprep.mubr.f32.mxu0 %v1810
      %1959 = vmatmul.mubr.f32.gmra.mrb[0].mxu0 %v1809
      %v1960 = vpop.f32.mrb[0].mxu0
      %v1961 = vadd.f32 0.0, %v1960
      %v1962 = vpop.f32.mrb[0].mxu0
      %1963 = vmatprep.mubr.f32.mxu0 %v1812
      %1964 = vmatmul.mubr.f32.gmra.mrb[0].mxu0 %v1811
      %v1965 = vpop.f32.mrb[0].mxu0
      %v1966 = vadd.f32 0.0, %v1965
      %v1967 = vpop.f32.mrb[0].mxu0
      %1968 = vmatprep.mubr.f32.mxu0 %v1814
      %1969 = vmatmul.mubr.f32.gmra.mrb[0].mxu0 %v1813
      %v1970 = vpop.f32.mrb[0].mxu0
      %v1971 = vadd.f32 0.0, %v1970
      %v1972 = vpop.f32.mrb[0].mxu0
      %1973 = vmatprep.mubr.f32.mxu0 %v1816
      %1974 = vmatmul.mubr.f32.gmra.mrb[0].mxu0 %v1815
      %v1975 = vpop.f32.mrb[0].mxu0
      %v1976 = vadd.f32 0.0, %v1975
      %v1977 = vpop.f32.mrb[0].mxu0
      %1978 = vmatprep.mubr.f32.mxu0 %v1818
      %1979 = vmatmul.mubr.f32.gmra.mrb[0].mxu0 %v1817
      %v1980 = vpop.f32.mrb[0].mxu0
      %v1981 = vadd.f32 0.0, %v1980
      %v1982 = vpop.f32.mrb[0].mxu0
      %1983 = vmatprep.mubr.f32.mxu0 %v1820
      %1984 = vmatmul.mubr.f32.gmra.mrb[0].mxu0 %v1819
      %v1985 = vpop.f32.mrb[0].mxu0
      %v1986 = vadd.f32 0.0, %v1985
      %v1987 = vpop.f32.mrb[0].mxu0
      %1988 = vmatprep.mubr.f32.mxu0 %v1822
      %1989 = vmatmul.mubr.f32.gmra.mrb[0].mxu0 %v1821
      %v1990 = vpop.f32.mrb[0].mxu0
      %v1991 = vadd.f32 0.0, %v1990
      %v1992 = vpop.f32.mrb[0].mxu0
      %1993 = vmatprep.mubr.f32.mxu0 %v1824
      %1994 = vmatmul.mubr.f32.gmra.mrb[0].mxu0 %v1823
      %v1995 = vpop.f32.mrb[0].mxu0
      %v1996 = vadd.f32 0.0, %v1995
      %v1997 = vpop.f32.mrb[0].mxu0
      %1998 = vmatprep.mubr.f32.mxu0 %v1826
      %1999 = vmatmul.mubr.f32.gmra.mrb[0].mxu0 %v1825
      %v2000 = vpop.f32.mrb[0].mxu0
      %v2001 = vadd.f32 0.0, %v2000
      %v2002 = vpop.f32.mrb[0].mxu0
      %2003 = vdwg.mxu0
      %v2004 = vld [vmem:[#allocation7] sm:$0xff]
      %v2005 = vld [vmem:[#allocation7 + $0x8] sm:$0xff]
      %v2006 = vld [vmem:[#allocation7 + $0x10] sm:$0xff]
      %v2007 = vld [vmem:[#allocation7 + $0x18] sm:$0xff]
      %v2008 = vld [vmem:[#allocation7 + $0x20] sm:$0xff]
      %v2009 = vld [vmem:[#allocation7 + $0x28] sm:$0xff]
      %v2010 = vld [vmem:[#allocation7 + $0x30] sm:$0xff]
      %v2011 = vld [vmem:[#allocation7 + $0x38] sm:$0xff]
      %v2012 = vld [vmem:[#allocation7 + $0x40] sm:$0xff]
      %v2013 = vld [vmem:[#allocation7 + $0x48] sm:$0xff]
      %v2014 = vld [vmem:[#allocation7 + $0x50] sm:$0xff]
      %v2015 = vld [vmem:[#allocation7 + $0x58] sm:$0xff]
      %v2016 = vld [vmem:[#allocation7 + $0x60] sm:$0xff]
      %v2017 = vld [vmem:[#allocation7 + $0x68] sm:$0xff]
      %v2018 = vld [vmem:[#allocation7 + $0x70] sm:$0xff]
      %v2019 = vld [vmem:[#allocation7 + $0x78] sm:$0xff]
      %vm2020 = vcmp.gt.f32.partialorder %v2004, 0.0
      %vm2021 = vcmp.gt.f32.partialorder %v2005, 0.0
      %vm2022 = vcmp.gt.f32.partialorder %v2006, 0.0
      %vm2023 = vcmp.gt.f32.partialorder %v2007, 0.0
      %vm2024 = vcmp.gt.f32.partialorder %v2008, 0.0
      %vm2025 = vcmp.gt.f32.partialorder %v2009, 0.0
      %vm2026 = vcmp.gt.f32.partialorder %v2010, 0.0
      %vm2027 = vcmp.gt.f32.partialorder %v2011, 0.0
      %vm2028 = vcmp.gt.f32.partialorder %v2012, 0.0
      %vm2029 = vcmp.gt.f32.partialorder %v2013, 0.0
      %vm2030 = vcmp.gt.f32.partialorder %v2014, 0.0
      %vm2031 = vcmp.gt.f32.partialorder %v2015, 0.0
      %vm2032 = vcmp.gt.f32.partialorder %v2016, 0.0
      %vm2033 = vcmp.gt.f32.partialorder %v2017, 0.0
      %vm2034 = vcmp.gt.f32.partialorder %v2018, 0.0
      %vm2035 = vcmp.gt.f32.partialorder %v2019, 0.0
      %v2036 = vld [vmem:[#allocation6] sm:$0xff]
      %v2037 = vld [vmem:[#allocation6 + $0x8] sm:$0xff]
      %v2038 = vld [vmem:[#allocation6 + $0x10] sm:$0xff]
      %v2039 = vld [vmem:[#allocation6 + $0x18] sm:$0xff]
      %v2040 = vld [vmem:[#allocation6 + $0x20] sm:$0xff]
      %v2041 = vld [vmem:[#allocation6 + $0x28] sm:$0xff]
      %v2042 = vld [vmem:[#allocation6 + $0x30] sm:$0xff]
      %v2043 = vld [vmem:[#allocation6 + $0x38] sm:$0xff]
      %v2044 = vld [vmem:[#allocation6 + $0x40] sm:$0xff]
      %v2045 = vld [vmem:[#allocation6 + $0x48] sm:$0xff]
      %v2046 = vld [vmem:[#allocation6 + $0x50] sm:$0xff]
      %v2047 = vld [vmem:[#allocation6 + $0x58] sm:$0xff]
      %v2048 = vld [vmem:[#allocation6 + $0x60] sm:$0xff]
      %v2049 = vld [vmem:[#allocation6 + $0x68] sm:$0xff]
      %v2050 = vld [vmem:[#allocation6 + $0x70] sm:$0xff]
      %v2051 = vld [vmem:[#allocation6 + $0x78] sm:$0xff]
      %v2052 = vadd.f32 %v2036, %v1926
      %v2053 = vadd.f32 %v2037, %v1931
      %v2054 = vadd.f32 %v2038, %v1936
      %v2055 = vadd.f32 %v2039, %v1941
      %v2056 = vadd.f32 %v2040, %v1946
      %v2057 = vadd.f32 %v2041, %v1951
      %v2058 = vadd.f32 %v2042, %v1956
      %v2059 = vadd.f32 %v2043, %v1961
      %v2060 = vadd.f32 %v2044, %v1966
      %v2061 = vadd.f32 %v2045, %v1971
      %v2062 = vadd.f32 %v2046, %v1976
      %v2063 = vadd.f32 %v2047, %v1981
      %v2064 = vadd.f32 %v2048, %v1986
      %v2065 = vadd.f32 %v2049, %v1991
      %v2066 = vadd.f32 %v2050, %v1996
      %v2067 = vadd.f32 %v2051, %v2001
      %v2068 = vsel %vm2020, %v1926, %v2052
      %v2069 = vsel %vm2021, %v1931, %v2053
      %v2070 = vsel %vm2022, %v1936, %v2054
      %v2071 = vsel %vm2023, %v1941, %v2055
      %v2072 = vsel %vm2024, %v1946, %v2056
      %v2073 = vsel %vm2025, %v1951, %v2057
      %v2074 = vsel %vm2026, %v1956, %v2058
      %v2075 = vsel %vm2027, %v1961, %v2059
      %v2076 = vsel %vm2028, %v1966, %v2060
      %v2077 = vsel %vm2029, %v1971, %v2061
      %v2078 = vsel %vm2030, %v1976, %v2062
      %v2079 = vsel %vm2031, %v1981, %v2063
      %v2080 = vsel %vm2032, %v1986, %v2064
      %v2081 = vsel %vm2033, %v1991, %v2065
      %v2082 = vsel %vm2034, %v1996, %v2066
      %v2083 = vsel %vm2035, %v2001, %v2067
      %v2084 = vsub.f32 %v2068, 0.2
      %v2085 = vsub.f32 %v2069, 0.2
      %v2086 = vsub.f32 %v2070, 0.2
      %v2087 = vsub.f32 %v2071, 0.2
      %v2088 = vsub.f32 %v2072, 0.2
      %v2089 = vsub.f32 %v2073, 0.2
      %v2090 = vsub.f32 %v2074, 0.2
      %v2091 = vsub.f32 %v2075, 0.2
      %v2092 = vsub.f32 %v2076, 0.2
      %v2093 = vsub.f32 %v2077, 0.2
      %v2094 = vsub.f32 %v2078, 0.2
      %v2095 = vsub.f32 %v2079, 0.2
      %v2096 = vsub.f32 %v2080, 0.2
      %v2097 = vsub.f32 %v2081, 0.2
      %v2098 = vsub.f32 %v2082, 0.2
      %v2099 = vsub.f32 %v2083, 0.2
      %vm2100 = vcmp.gt.f32.partialorder %v2084, 0.0
      %vm2101 = vcmp.gt.f32.partialorder %v2085, 0.0
      %vm2102 = vcmp.gt.f32.partialorder %v2086, 0.0
      %vm2103 = vcmp.gt.f32.partialorder %v2087, 0.0
      %vm2104 = vcmp.gt.f32.partialorder %v2088, 0.0
      %vm2105 = vcmp.gt.f32.partialorder %v2089, 0.0
      %vm2106 = vcmp.gt.f32.partialorder %v2090, 0.0
      %vm2107 = vcmp.gt.f32.partialorder %v2091, 0.0
      %vm2108 = vcmp.gt.f32.partialorder %v2092, 0.0
      %vm2109 = vcmp.gt.f32.partialorder %v2093, 0.0
      %vm2110 = vcmp.gt.f32.partialorder %v2094, 0.0
      %vm2111 = vcmp.gt.f32.partialorder %v2095, 0.0
      %vm2112 = vcmp.gt.f32.partialorder %v2096, 0.0
      %vm2113 = vcmp.gt.f32.partialorder %v2097, 0.0
      %vm2114 = vcmp.gt.f32.partialorder %v2098, 0.0
      %vm2115 = vcmp.gt.f32.partialorder %v2099, 0.0
      %v2116 = vsel %vm2100, 1.0, 0.0
      %v2117 = vsel %vm2101, 1.0, 0.0
      %v2118 = vsel %vm2102, 1.0, 0.0
      %v2119 = vsel %vm2103, 1.0, 0.0
      %v2120 = vsel %vm2104, 1.0, 0.0
      %v2121 = vsel %vm2105, 1.0, 0.0
      %v2122 = vsel %vm2106, 1.0, 0.0
      %v2123 = vsel %vm2107, 1.0, 0.0
      %v2124 = vsel %vm2108, 1.0, 0.0
      %v2125 = vsel %vm2109, 1.0, 0.0
      %v2126 = vsel %vm2110, 1.0, 0.0
      %v2127 = vsel %vm2111, 1.0, 0.0
      %v2128 = vsel %vm2112, 1.0, 0.0
      %v2129 = vsel %vm2113, 1.0, 0.0
      %v2130 = vsel %vm2114, 1.0, 0.0
      %v2131 = vsel %vm2115, 1.0, 0.0
      %2132 = vst [vmem:[#allocation6] sm:$0xff] %v2068
      %2133 = vst [vmem:[#allocation6 + $0x8] sm:$0xff] %v2069
      %2134 = vst [vmem:[#allocation6 + $0x10] sm:$0xff] %v2070
      %2135 = vst [vmem:[#allocation6 + $0x18] sm:$0xff] %v2071
      %2136 = vst [vmem:[#allocation6 + $0x20] sm:$0xff] %v2072
      %2137 = vst [vmem:[#allocation6 + $0x28] sm:$0xff] %v2073
      %2138 = vst [vmem:[#allocation6 + $0x30] sm:$0xff] %v2074
      %2139 = vst [vmem:[#allocation6 + $0x38] sm:$0xff] %v2075
      %2140 = vst [vmem:[#allocation6 + $0x40] sm:$0xff] %v2076
      %2141 = vst [vmem:[#allocation6 + $0x48] sm:$0xff] %v2077
      %2142 = vst [vmem:[#allocation6 + $0x50] sm:$0xff] %v2078
      %2143 = vst [vmem:[#allocation6 + $0x58] sm:$0xff] %v2079
      %2144 = vst [vmem:[#allocation6 + $0x60] sm:$0xff] %v2080
      %2145 = vst [vmem:[#allocation6 + $0x68] sm:$0xff] %v2081
      %2146 = vst [vmem:[#allocation6 + $0x70] sm:$0xff] %v2082
      %2147 = vst [vmem:[#allocation6 + $0x78] sm:$0xff] %v2083
      %2148 = vst [vmem:[#allocation7] sm:$0xff] %v2116
      %2149 = vst [vmem:[#allocation7 + $0x8] sm:$0xff] %v2117
      %2150 = vst [vmem:[#allocation7 + $0x10] sm:$0xff] %v2118
      %2151 = vst [vmem:[#allocation7 + $0x18] sm:$0xff] %v2119
      %2152 = vst [vmem:[#allocation7 + $0x20] sm:$0xff] %v2120
      %2153 = vst [vmem:[#allocation7 + $0x28] sm:$0xff] %v2121
      %2154 = vst [vmem:[#allocation7 + $0x30] sm:$0xff] %v2122
      %2155 = vst [vmem:[#allocation7 + $0x38] sm:$0xff] %v2123
      %2156 = vst [vmem:[#allocation7 + $0x40] sm:$0xff] %v2124
      %2157 = vst [vmem:[#allocation7 + $0x48] sm:$0xff] %v2125
      %2158 = vst [vmem:[#allocation7 + $0x50] sm:$0xff] %v2126
      %2159 = vst [vmem:[#allocation7 + $0x58] sm:$0xff] %v2127
      %2160 = vst [vmem:[#allocation7 + $0x60] sm:$0xff] %v2128
      %2161 = vst [vmem:[#allocation7 + $0x68] sm:$0xff] %v2129
      %2162 = vst [vmem:[#allocation7 + $0x70] sm:$0xff] %v2130
      %2163 = vst [vmem:[#allocation7 + $0x78] sm:$0xff] %v2131
      %v2164 = vld [vmem:[%s340] sm:$0xff]
      %v2165 = vld [vmem:[%s340 + $0x8] sm:$0xff]
      %v2166 = vld [vmem:[%s340 + $0x10] sm:$0xff]
      %v2167 = vld [vmem:[%s340 + $0x18] sm:$0xff]
      %v2168 = vld [vmem:[%s340 + $0x20] sm:$0xff]
      %v2169 = vld [vmem:[%s340 + $0x28] sm:$0xff]
      %v2170 = vld [vmem:[%s340 + $0x30] sm:$0xff]
      %v2171 = vld [vmem:[%s340 + $0x38] sm:$0xff]
      %v2172 = vld [vmem:[%s340 + $0x40] sm:$0xff]
      %v2173 = vld [vmem:[%s340 + $0x48] sm:$0xff]
      %v2174 = vld [vmem:[%s340 + $0x50] sm:$0xff]
      %v2175 = vld [vmem:[%s340 + $0x58] sm:$0xff]
      %v2176 = vld [vmem:[%s340 + $0x60] sm:$0xff]
      %v2177 = vld [vmem:[%s340 + $0x68] sm:$0xff]
      %v2178 = vld [vmem:[%s340 + $0x70] sm:$0xff]
      %v2179 = vld [vmem:[%s340 + $0x78] sm:$0xff]
      %v2180 = vadd.f32 %v2164, %v2116
      %v2181 = vadd.f32 %v2165, %v2117
      %v2182 = vadd.f32 %v2166, %v2118
      %v2183 = vadd.f32 %v2167, %v2119
      %v2184 = vadd.f32 %v2168, %v2120
      %v2185 = vadd.f32 %v2169, %v2121
      %v2186 = vadd.f32 %v2170, %v2122
      %v2187 = vadd.f32 %v2171, %v2123
      %v2188 = vadd.f32 %v2172, %v2124
      %v2189 = vadd.f32 %v2173, %v2125
      %v2190 = vadd.f32 %v2174, %v2126
      %v2191 = vadd.f32 %v2175, %v2127
      %v2192 = vadd.f32 %v2176, %v2128
      %v2193 = vadd.f32 %v2177, %v2129
      %v2194 = vadd.f32 %v2178, %v2130
      %v2195 = vadd.f32 %v2179, %v2131
      %2196 = vst [vmem:[%s340] sm:$0xff] %v2180
      %2197 = vst [vmem:[%s340 + $0x8] sm:$0xff] %v2181
      %2198 = vst [vmem:[%s340 + $0x10] sm:$0xff] %v2182
      %2199 = vst [vmem:[%s340 + $0x18] sm:$0xff] %v2183
      %2200 = vst [vmem:[%s340 + $0x20] sm:$0xff] %v2184
      %2201 = vst [vmem:[%s340 + $0x28] sm:$0xff] %v2185
      %2202 = vst [vmem:[%s340 + $0x30] sm:$0xff] %v2186
      %2203 = vst [vmem:[%s340 + $0x38] sm:$0xff] %v2187
      %2204 = vst [vmem:[%s340 + $0x40] sm:$0xff] %v2188
      %2205 = vst [vmem:[%s340 + $0x48] sm:$0xff] %v2189
      %2206 = vst [vmem:[%s340 + $0x50] sm:$0xff] %v2190
      %2207 = vst [vmem:[%s340 + $0x58] sm:$0xff] %v2191
      %2208 = vst [vmem:[%s340 + $0x60] sm:$0xff] %v2192
      %2209 = vst [vmem:[%s340 + $0x68] sm:$0xff] %v2193
      %2210 = vst [vmem:[%s340 + $0x70] sm:$0xff] %v2194
      %2211 = vst [vmem:[%s340 + $0x78] sm:$0xff] %v2195
      %p2212 = scmp.eq.s32.totalorder %s24, 9
      // Predicated region
      $region45: #{main_net_forward.3} parent=39 // pred_check
        %p2213 = pneg %p2212
      $region46: #{main_net_forward.3} parent=39 // pred_check_branch
        %2215 = sbr.rel (%p2213) target = $region48
      $region47: #{main_net_forward.3} parent=39 // pred_region
        %v2216 = vld [vmem:[%s327] sm:$0xff]
        %v2217 = vld [vmem:[%s327 + $0x8] sm:$0xff]
        %v2218 = vld [vmem:[%s327 + $0x10] sm:$0xff]
        %v2219 = vld [vmem:[%s327 + $0x18] sm:$0xff]
        %v2220 = vld [vmem:[%s327 + $0x20] sm:$0xff]
        %v2221 = vld [vmem:[%s327 + $0x28] sm:$0xff]
        %v2222 = vld [vmem:[%s327 + $0x30] sm:$0xff]
        %v2223 = vld [vmem:[%s327 + $0x38] sm:$0xff]
        %v2224 = vld [vmem:[%s327 + $0x40] sm:$0xff]
        %v2225 = vld [vmem:[%s327 + $0x48] sm:$0xff]
        %v2226 = vld [vmem:[%s327 + $0x50] sm:$0xff]
        %v2227 = vld [vmem:[%s327 + $0x58] sm:$0xff]
        %v2228 = vld [vmem:[%s327 + $0x60] sm:$0xff]
        %v2229 = vld [vmem:[%s327 + $0x68] sm:$0xff]
        %v2230 = vld [vmem:[%s327 + $0x70] sm:$0xff]
        %v2231 = vld [vmem:[%s327 + $0x78] sm:$0xff]
        %v2232 = vld [vmem:[%s327 + $0x80] sm:$0xff]
        %v2233 = vld [vmem:[%s327 + $0x88] sm:$0xff]
        %v2234 = vld [vmem:[%s327 + $0x90] sm:$0xff]
        %v2235 = vld [vmem:[%s327 + $0x98] sm:$0xff]
        %v2236 = vld [vmem:[%s327 + $0xa0] sm:$0xff]
        %v2237 = vld [vmem:[%s327 + $0xa8] sm:$0xff]
        %v2238 = vld [vmem:[%s327 + $0xb0] sm:$0xff]
        %v2239 = vld [vmem:[%s327 + $0xb8] sm:$0xff]
        %v2240 = vld [vmem:[%s327 + $0xc0] sm:$0xff]
        %v2241 = vld [vmem:[%s327 + $0xc8] sm:$0xff]
        %v2242 = vld [vmem:[%s327 + $0xd0] sm:$0xff]
        %v2243 = vld [vmem:[%s327 + $0xd8] sm:$0xff]
        %v2244 = vld [vmem:[%s327 + $0xe0] sm:$0xff]
        %v2245 = vld [vmem:[%s327 + $0xe8] sm:$0xff]
        %v2246 = vld [vmem:[%s327 + $0xf0] sm:$0xff]
        %v2247 = vld [vmem:[%s327 + $0xf8] sm:$0xff]
        %v2248 = vmul.f32 %v2216, 0.1
        %v2249 = vmul.f32 %v2217, 0.1
        %v2250 = vmul.f32 %v2218, 0.1
        %v2251 = vmul.f32 %v2219, 0.1
        %v2252 = vmul.f32 %v2220, 0.1
        %v2253 = vmul.f32 %v2221, 0.1
        %v2254 = vmul.f32 %v2222, 0.1
        %v2255 = vmul.f32 %v2223, 0.1
        %v2256 = vmul.f32 %v2224, 0.1
        %v2257 = vmul.f32 %v2225, 0.1
        %v2258 = vmul.f32 %v2226, 0.1
        %v2259 = vmul.f32 %v2227, 0.1
        %v2260 = vmul.f32 %v2228, 0.1
        %v2261 = vmul.f32 %v2229, 0.1
        %v2262 = vmul.f32 %v2230, 0.1
        %v2263 = vmul.f32 %v2231, 0.1
        %v2264 = vmul.f32 %v2232, 0.1
        %v2265 = vmul.f32 %v2233, 0.1
        %v2266 = vmul.f32 %v2234, 0.1
        %v2267 = vmul.f32 %v2235, 0.1
        %v2268 = vmul.f32 %v2236, 0.1
        %v2269 = vmul.f32 %v2237, 0.1
        %v2270 = vmul.f32 %v2238, 0.1
        %v2271 = vmul.f32 %v2239, 0.1
        %v2272 = vmul.f32 %v2240, 0.1
        %v2273 = vmul.f32 %v2241, 0.1
        %v2274 = vmul.f32 %v2242, 0.1
        %v2275 = vmul.f32 %v2243, 0.1
        %v2276 = vmul.f32 %v2244, 0.1
        %v2277 = vmul.f32 %v2245, 0.1
        %v2278 = vmul.f32 %v2246, 0.1
        %v2279 = vmul.f32 %v2247, 0.1
        %2280 = vst [vmem:[%s327] sm:$0xff] %v2248
        %2281 = vst [vmem:[%s327 + $0x8] sm:$0xff] %v2249
        %2282 = vst [vmem:[%s327 + $0x10] sm:$0xff] %v2250
        %2283 = vst [vmem:[%s327 + $0x18] sm:$0xff] %v2251
        %2284 = vst [vmem:[%s327 + $0x20] sm:$0xff] %v2252
        %2285 = vst [vmem:[%s327 + $0x28] sm:$0xff] %v2253
        %2286 = vst [vmem:[%s327 + $0x30] sm:$0xff] %v2254
        %2287 = vst [vmem:[%s327 + $0x38] sm:$0xff] %v2255
        %2288 = vst [vmem:[%s327 + $0x40] sm:$0xff] %v2256
        %2289 = vst [vmem:[%s327 + $0x48] sm:$0xff] %v2257
        %2290 = vst [vmem:[%s327 + $0x50] sm:$0xff] %v2258
        %2291 = vst [vmem:[%s327 + $0x58] sm:$0xff] %v2259
        %2292 = vst [vmem:[%s327 + $0x60] sm:$0xff] %v2260
        %2293 = vst [vmem:[%s327 + $0x68] sm:$0xff] %v2261
        %2294 = vst [vmem:[%s327 + $0x70] sm:$0xff] %v2262
        %2295 = vst [vmem:[%s327 + $0x78] sm:$0xff] %v2263
        %2296 = vst [vmem:[%s327 + $0x80] sm:$0xff] %v2264
        %2297 = vst [vmem:[%s327 + $0x88] sm:$0xff] %v2265
        %2298 = vst [vmem:[%s327 + $0x90] sm:$0xff] %v2266
        %2299 = vst [vmem:[%s327 + $0x98] sm:$0xff] %v2267
        %2300 = vst [vmem:[%s327 + $0xa0] sm:$0xff] %v2268
        %2301 = vst [vmem:[%s327 + $0xa8] sm:$0xff] %v2269
        %2302 = vst [vmem:[%s327 + $0xb0] sm:$0xff] %v2270
        %2303 = vst [vmem:[%s327 + $0xb8] sm:$0xff] %v2271
        %2304 = vst [vmem:[%s327 + $0xc0] sm:$0xff] %v2272
        %2305 = vst [vmem:[%s327 + $0xc8] sm:$0xff] %v2273
        %2306 = vst [vmem:[%s327 + $0xd0] sm:$0xff] %v2274
        %2307 = vst [vmem:[%s327 + $0xd8] sm:$0xff] %v2275
        %2308 = vst [vmem:[%s327 + $0xe0] sm:$0xff] %v2276
        %2309 = vst [vmem:[%s327 + $0xe8] sm:$0xff] %v2277
        %2310 = vst [vmem:[%s327 + $0xf0] sm:$0xff] %v2278
        %2311 = vst [vmem:[%s327 + $0xf8] sm:$0xff] %v2279
        %v2312 = vld [vmem:[%s334] sm:$0xff]
        %v2313 = vld [vmem:[%s334 + $0x8] sm:$0xff]
        %v2314 = vld [vmem:[%s334 + $0x10] sm:$0xff]
        %v2315 = vld [vmem:[%s334 + $0x18] sm:$0xff]
        %v2316 = vld [vmem:[%s334 + $0x20] sm:$0xff]
        %v2317 = vld [vmem:[%s334 + $0x28] sm:$0xff]
        %v2318 = vld [vmem:[%s334 + $0x30] sm:$0xff]
        %v2319 = vld [vmem:[%s334 + $0x38] sm:$0xff]
        %v2320 = vld [vmem:[%s334 + $0x40] sm:$0xff]
        %v2321 = vld [vmem:[%s334 + $0x48] sm:$0xff]
        %v2322 = vld [vmem:[%s334 + $0x50] sm:$0xff]
        %v2323 = vld [vmem:[%s334 + $0x58] sm:$0xff]
        %v2324 = vld [vmem:[%s334 + $0x60] sm:$0xff]
        %v2325 = vld [vmem:[%s334 + $0x68] sm:$0xff]
        %v2326 = vld [vmem:[%s334 + $0x70] sm:$0xff]
        %v2327 = vld [vmem:[%s334 + $0x78] sm:$0xff]
        %v2328 = vld [vmem:[%s334 + $0x80] sm:$0xff]
        %v2329 = vld [vmem:[%s334 + $0x88] sm:$0xff]
        %v2330 = vld [vmem:[%s334 + $0x90] sm:$0xff]
        %v2331 = vld [vmem:[%s334 + $0x98] sm:$0xff]
        %v2332 = vld [vmem:[%s334 + $0xa0] sm:$0xff]
        %v2333 = vld [vmem:[%s334 + $0xa8] sm:$0xff]
        %v2334 = vld [vmem:[%s334 + $0xb0] sm:$0xff]
        %v2335 = vld [vmem:[%s334 + $0xb8] sm:$0xff]
        %v2336 = vld [vmem:[%s334 + $0xc0] sm:$0xff]
        %v2337 = vld [vmem:[%s334 + $0xc8] sm:$0xff]
        %v2338 = vld [vmem:[%s334 + $0xd0] sm:$0xff]
        %v2339 = vld [vmem:[%s334 + $0xd8] sm:$0xff]
        %v2340 = vld [vmem:[%s334 + $0xe0] sm:$0xff]
        %v2341 = vld [vmem:[%s334 + $0xe8] sm:$0xff]
        %v2342 = vld [vmem:[%s334 + $0xf0] sm:$0xff]
        %v2343 = vld [vmem:[%s334 + $0xf8] sm:$0xff]
        %v2344 = vmul.f32 %v2312, 0.1
        %v2345 = vmul.f32 %v2313, 0.1
        %v2346 = vmul.f32 %v2314, 0.1
        %v2347 = vmul.f32 %v2315, 0.1
        %v2348 = vmul.f32 %v2316, 0.1
        %v2349 = vmul.f32 %v2317, 0.1
        %v2350 = vmul.f32 %v2318, 0.1
        %v2351 = vmul.f32 %v2319, 0.1
        %v2352 = vmul.f32 %v2320, 0.1
        %v2353 = vmul.f32 %v2321, 0.1
        %v2354 = vmul.f32 %v2322, 0.1
        %v2355 = vmul.f32 %v2323, 0.1
        %v2356 = vmul.f32 %v2324, 0.1
        %v2357 = vmul.f32 %v2325, 0.1
        %v2358 = vmul.f32 %v2326, 0.1
        %v2359 = vmul.f32 %v2327, 0.1
        %v2360 = vmul.f32 %v2328, 0.1
        %v2361 = vmul.f32 %v2329, 0.1
        %v2362 = vmul.f32 %v2330, 0.1
        %v2363 = vmul.f32 %v2331, 0.1
        %v2364 = vmul.f32 %v2332, 0.1
        %v2365 = vmul.f32 %v2333, 0.1
        %v2366 = vmul.f32 %v2334, 0.1
        %v2367 = vmul.f32 %v2335, 0.1
        %v2368 = vmul.f32 %v2336, 0.1
        %v2369 = vmul.f32 %v2337, 0.1
        %v2370 = vmul.f32 %v2338, 0.1
        %v2371 = vmul.f32 %v2339, 0.1
        %v2372 = vmul.f32 %v2340, 0.1
        %v2373 = vmul.f32 %v2341, 0.1
        %v2374 = vmul.f32 %v2342, 0.1
        %v2375 = vmul.f32 %v2343, 0.1
        %2376 = vst [vmem:[%s334] sm:$0xff] %v2344
        %2377 = vst [vmem:[%s334 + $0x8] sm:$0xff] %v2345
        %2378 = vst [vmem:[%s334 + $0x10] sm:$0xff] %v2346
        %2379 = vst [vmem:[%s334 + $0x18] sm:$0xff] %v2347
        %2380 = vst [vmem:[%s334 + $0x20] sm:$0xff] %v2348
        %2381 = vst [vmem:[%s334 + $0x28] sm:$0xff] %v2349
        %2382 = vst [vmem:[%s334 + $0x30] sm:$0xff] %v2350
        %2383 = vst [vmem:[%s334 + $0x38] sm:$0xff] %v2351
        %2384 = vst [vmem:[%s334 + $0x40] sm:$0xff] %v2352
        %2385 = vst [vmem:[%s334 + $0x48] sm:$0xff] %v2353
        %2386 = vst [vmem:[%s334 + $0x50] sm:$0xff] %v2354
        %2387 = vst [vmem:[%s334 + $0x58] sm:$0xff] %v2355
        %2388 = vst [vmem:[%s334 + $0x60] sm:$0xff] %v2356
        %2389 = vst [vmem:[%s334 + $0x68] sm:$0xff] %v2357
        %2390 = vst [vmem:[%s334 + $0x70] sm:$0xff] %v2358
        %2391 = vst [vmem:[%s334 + $0x78] sm:$0xff] %v2359
        %2392 = vst [vmem:[%s334 + $0x80] sm:$0xff] %v2360
        %2393 = vst [vmem:[%s334 + $0x88] sm:$0xff] %v2361
        %2394 = vst [vmem:[%s334 + $0x90] sm:$0xff] %v2362
        %2395 = vst [vmem:[%s334 + $0x98] sm:$0xff] %v2363
        %2396 = vst [vmem:[%s334 + $0xa0] sm:$0xff] %v2364
        %2397 = vst [vmem:[%s334 + $0xa8] sm:$0xff] %v2365
        %2398 = vst [vmem:[%s334 + $0xb0] sm:$0xff] %v2366
        %2399 = vst [vmem:[%s334 + $0xb8] sm:$0xff] %v2367
        %2400 = vst [vmem:[%s334 + $0xc0] sm:$0xff] %v2368
        %2401 = vst [vmem:[%s334 + $0xc8] sm:$0xff] %v2369
        %2402 = vst [vmem:[%s334 + $0xd0] sm:$0xff] %v2370
        %2403 = vst [vmem:[%s334 + $0xd8] sm:$0xff] %v2371
        %2404 = vst [vmem:[%s334 + $0xe0] sm:$0xff] %v2372
        %2405 = vst [vmem:[%s334 + $0xe8] sm:$0xff] %v2373
        %2406 = vst [vmem:[%s334 + $0xf0] sm:$0xff] %v2374
        %2407 = vst [vmem:[%s334 + $0xf8] sm:$0xff] %v2375
        %v2408 = vld [vmem:[%s340] sm:$0xff]
        %v2409 = vld [vmem:[%s340 + $0x8] sm:$0xff]
        %v2410 = vld [vmem:[%s340 + $0x10] sm:$0xff]
        %v2411 = vld [vmem:[%s340 + $0x18] sm:$0xff]
        %v2412 = vld [vmem:[%s340 + $0x20] sm:$0xff]
        %v2413 = vld [vmem:[%s340 + $0x28] sm:$0xff]
        %v2414 = vld [vmem:[%s340 + $0x30] sm:$0xff]
        %v2415 = vld [vmem:[%s340 + $0x38] sm:$0xff]
        %v2416 = vld [vmem:[%s340 + $0x40] sm:$0xff]
        %v2417 = vld [vmem:[%s340 + $0x48] sm:$0xff]
        %v2418 = vld [vmem:[%s340 + $0x50] sm:$0xff]
        %v2419 = vld [vmem:[%s340 + $0x58] sm:$0xff]
        %v2420 = vld [vmem:[%s340 + $0x60] sm:$0xff]
        %v2421 = vld [vmem:[%s340 + $0x68] sm:$0xff]
        %v2422 = vld [vmem:[%s340 + $0x70] sm:$0xff]
        %v2423 = vld [vmem:[%s340 + $0x78] sm:$0xff]
        %v2424 = vmul.f32 %v2408, 0.1
        %v2425 = vmul.f32 %v2409, 0.1
        %v2426 = vmul.f32 %v2410, 0.1
        %v2427 = vmul.f32 %v2411, 0.1
        %v2428 = vmul.f32 %v2412, 0.1
        %v2429 = vmul.f32 %v2413, 0.1
        %v2430 = vmul.f32 %v2414, 0.1
        %v2431 = vmul.f32 %v2415, 0.1
        %v2432 = vmul.f32 %v2416, 0.1
        %v2433 = vmul.f32 %v2417, 0.1
        %v2434 = vmul.f32 %v2418, 0.1
        %v2435 = vmul.f32 %v2419, 0.1
        %v2436 = vmul.f32 %v2420, 0.1
        %v2437 = vmul.f32 %v2421, 0.1
        %v2438 = vmul.f32 %v2422, 0.1
        %v2439 = vmul.f32 %v2423, 0.1
        %2440 = vst [vmem:[%s340] sm:$0xff] %v2424
        %2441 = vst [vmem:[%s340 + $0x8] sm:$0xff] %v2425
        %2442 = vst [vmem:[%s340 + $0x10] sm:$0xff] %v2426
        %2443 = vst [vmem:[%s340 + $0x18] sm:$0xff] %v2427
        %2444 = vst [vmem:[%s340 + $0x20] sm:$0xff] %v2428
        %2445 = vst [vmem:[%s340 + $0x28] sm:$0xff] %v2429
        %2446 = vst [vmem:[%s340 + $0x30] sm:$0xff] %v2430
        %2447 = vst [vmem:[%s340 + $0x38] sm:$0xff] %v2431
        %2448 = vst [vmem:[%s340 + $0x40] sm:$0xff] %v2432
        %2449 = vst [vmem:[%s340 + $0x48] sm:$0xff] %v2433
        %2450 = vst [vmem:[%s340 + $0x50] sm:$0xff] %v2434
        %2451 = vst [vmem:[%s340 + $0x58] sm:$0xff] %v2435
        %2452 = vst [vmem:[%s340 + $0x60] sm:$0xff] %v2436
        %2453 = vst [vmem:[%s340 + $0x68] sm:$0xff] %v2437
        %2454 = vst [vmem:[%s340 + $0x70] sm:$0xff] %v2438
        %2455 = vst [vmem:[%s340 + $0x78] sm:$0xff] %v2439
      $region48: #{main_net_forward.3} parent=39 // pred_fallthru
        _
      %s2456 = smul.u32 16, %s23
      %p2457 = scmp.lt.s32.totalorder %s2456, 15
      %s2458 = scalar_select %p2457, %s2456, 15
      %s2459 = smul.addr %s2458, 2
      %s2460 = smul.addr %s2459, 8
      %s2461 = scalar_lea.vmem %s5, %s2460
      %s2462 = smul.u32 16, %s23
      %p2463 = scmp.lt.s32.totalorder %s2462, 15
      %s2464 = scalar_select %p2463, %s2462, 15
      %s2465 = smul.addr %s2464, 2
      %s2466 = smul.addr %s2465, 8
      %s2467 = scalar_lea.vmem %s6, %s2466
      %s2468 = smul.u32 16, %s23
      %p2469 = scmp.lt.s32.totalorder %s2468, 15
      %s2470 = scalar_select %p2469, %s2468, 15
      %s2471 = smul.addr %s2470, 8
      %s2472 = scalar_lea.vmem %s7, %s2471
      // Predicated region
      $region49: #{main_net_forward.3} parent=39 // pred_check
        %p2473 = pneg %p161
      $region50: #{main_net_forward.3} parent=39 // pred_check_branch
        %2475 = sbr.rel (%p2473) target = $region52
      $region51: #{main_net_forward.3} parent=39 // pred_region
        %s2476 = smul.u32 16, %s23
      $region52: #{main_net_forward.3} parent=39 // pred_fallthru
        _
      // Predicated region
      $region53: #{main_net_forward.3} parent=39 // pred_check
        %p2477 = pneg %p187
      $region54: #{main_net_forward.3} parent=39 // pred_check_branch
        %2479 = sbr.rel (%p2477) target = $region56
      $region55: #{main_net_forward.3} parent=39 // pred_region
        %s2480 = smul.u32 16, %s23
      $region56: #{main_net_forward.3} parent=39 // pred_fallthru
        _
      // Predicated region
      $region57: #{main_net_forward.3} parent=39 // pred_check
        %p2481 = pneg %p213
      $region58: #{main_net_forward.3} parent=39 // pred_check_branch
        %2483 = sbr.rel (%p2481) target = $region60
      $region59: #{main_net_forward.3} parent=39 // pred_region
        %s2484 = smul.u32 16, %s23
      $region60: #{main_net_forward.3} parent=39 // pred_fallthru
        _
      // Predicated region
      $region61: #{main_net_forward.3} parent=39 // pred_check
        %p2485 = pneg %p161
      $region62: #{main_net_forward.3} parent=39 // pred_check_branch
        %2487 = sbr.rel (%p2485) target = $region64
      $region63: #{main_net_forward.3} parent=39 // pred_region
        %s2488 = smul.u32 16, %s23
        %p2489 = scmp.lt.s32.totalorder %s2488, 15
        %s2490 = scalar_select %p2489, %s2488, 15
        %s2491 = smul.addr %s2490, 2
        %s2492 = smul.addr %s2491, 8
        %s2493 = scalar_lea.vmem %s5, %s2492
      $region64: #{main_net_forward.3} parent=39 // pred_fallthru
        _
      // Predicated region
      $region65: #{main_net_forward.3} parent=39 // pred_check
        %p2494 = pneg %p187
      $region66: #{main_net_forward.3} parent=39 // pred_check_branch
        %2496 = sbr.rel (%p2494) target = $region68
      $region67: #{main_net_forward.3} parent=39 // pred_region
        %s2497 = smul.u32 16, %s23
        %p2498 = scmp.lt.s32.totalorder %s2497, 15
        %s2499 = scalar_select %p2498, %s2497, 15
        %s2500 = smul.addr %s2499, 2
        %s2501 = smul.addr %s2500, 8
        %s2502 = scalar_lea.vmem %s6, %s2501
      $region68: #{main_net_forward.3} parent=39 // pred_fallthru
        _
      // Predicated region
      $region69: #{main_net_forward.3} parent=39 // pred_check
        %p2503 = pneg %p213
      $region70: #{main_net_forward.3} parent=39 // pred_check_branch
        %2505 = sbr.rel (%p2503) target = $region72
      $region71: #{main_net_forward.3} parent=39 // pred_region
        %s2506 = smul.u32 16, %s23
        %p2507 = scmp.lt.s32.totalorder %s2506, 15
        %s2508 = scalar_select %p2507, %s2506, 15
        %s2509 = smul.addr %s2508, 8
        %s2510 = scalar_lea.vmem %s7, %s2509
      $region72: #{main_net_forward.3} parent=39 // pred_fallthru
        _
    $region40: #{main_net_forward.3} parent=5 // pred_fallthru
      _
    %p2511 = scmp.le.s32.totalorder 2, %s14
    // Predicated region
    $region73: #{main_net_forward.3} parent=5 // pred_check
      %p2512 = pneg %p2511
    $region74: #{main_net_forward.3} parent=5 // pred_check_branch
      %2514 = sbr.rel (%p2512) target = $region76
    $region75: #{main_net_forward.3} parent=5 // pred_region
      %s2515 = ssub.s32 %s14, 2
    $region76: #{main_net_forward.3} parent=5 // pred_fallthru
      _
  $region6: #{main_net_forward.3} parent=0 // loop_footer
    %s18 = sadd.s32 1, %s14
  $region7: #{main_net_forward.3} parent=0 // loop_footer_branch
    %13 = sbr.rel target = $region3
  $region8: #{main_net_forward.3} parent=0 // loop_exit
    _

</llo_original>
